<compile_context>
chip_gen: v6e
topology: v6e:2x2x1
jax: 0.10.0
libtpu: 0.0.40
codegen_flags: <defaults>
</compile_context>

<pallas_src>
import numpy as np
import jax
import jax.numpy as jnp
from jax import lax
from jax.experimental import pallas as pl
from jax.experimental.pallas import tpu as pltpu

EPS = 1e-5
NEG = -1e30  # additive mask for out-of-bounds max-pool window taps


# --------------------------------------------------------------------------- #
# Host-side folding: module parameters -> 2-D matrices consumed by the kernel.
# --------------------------------------------------------------------------- #

def _bn_fold(gamma, beta, mean, var):
    s = gamma / jnp.sqrt(var + EPS)
    return s, beta - mean * s


def _unit_mats(p, S, C):
    """Folded matrices for one ResidualUnit at (square) spatial size S."""
    Cm = p["w2"].shape[0]                       # 4 * C
    s1, b1 = _bn_fold(p["gamma1"], p["beta1"], p["mean1"], p["var1"])   # (C,)
    s2, b2 = _bn_fold(p["gamma2"], p["beta2"], p["mean2"], p["var2"])   # (Cm,)
    w1f = p["w1"] * s2[None, None, None, :]     # (3, 3, C, Cm), BN2 scale folded in

    # B[dyi] : (S*C, S*Cm) folds the kx-shift (zero padded) + 3x3 weights.
    # Concatenated over dy (dyi order: dy = -1, 0, +1) into one (3*S*C, S*Cm) matrix
    # so the conv is a single matmul against [a(h-1) | a(h) | a(h+1)].
    blocks = []
    for dyi in range(3):
        B = jnp.zeros((S * C, S * Cm), jnp.float32)
        for dx in (-1, 0, 1):
            shift = np.eye(S, k=-dx, dtype=np.float32)  # [wi, wo] = 1 iff wi == wo + dx
            B = B + jnp.kron(jnp.asarray(shift), w1f[dyi, dx + 1])
        blocks.append(B)

    return dict(
        Bcat=jnp.concatenate(blocks, axis=0),                        # (3*S*C, S*Cm)
        w2b=jnp.kron(jnp.eye(S, dtype=jnp.float32), p["w2"]),        # (S*Cm, S*C)
        s1t=jnp.tile(s1, S),                                         # (S*C,)
        b1t=jnp.tile(b1, S),                                         # (S*C,)
        b2t=jnp.tile(b2, S),                                         # (S*Cm,)
    )


def _pool_mats(N, S, C):
    """MaxPool2d(3, stride=2, padding=1): stacked row/col select matrices."""
    So = S // 2
    PRs, PCs = [], []
    for d in (-1, 0, 1):
        Ar = np.zeros((So, S), np.float32)       # row select: hi = 2*ho + d
        Ac = np.zeros((S, So), np.float32)       # col select: wi = 2*wo + d
        for o in range(So):
            i = 2 * o + d
            if 0 <= i < S:
                Ar[o, i] = 1.0
                Ac[i, o] = 1.0
        PRs.append(np.kron(np.eye(N, dtype=np.float32), Ar))   # (N*So, N*S)
        PCs.append(np.kron(Ac, np.eye(C, dtype=np.float32)))   # (S*C, So*C)
    PR = np.concatenate(PRs, axis=0)             # (3*N*So, N*S)   one row-tap matmul
    PC = np.concatenate(PCs, axis=1)             # (S*C, 3*So*C)   one col-tap matmul
    return jnp.asarray(PR), jnp.asarray(PC)


def _bilinear_mat(n_in, n_out):
    """(n_out, n_in) interpolation matrix, align_corners=True."""
    M = np.zeros((n_out, n_in), np.float32)
    for o in range(n_out):
        s = 0.0 if n_out == 1 else o * (n_in - 1) / (n_out - 1)
        i0 = min(max(int(np.floor(s)), 0), n_in - 1)
        i1 = min(i0 + 1, n_in - 1)
        f = s - i0
        M[o, i0] += 1.0 - f
        M[o, i1] += f
    return M


def _up_mats(N, S, C):
    """Bilinear x2 (align_corners=True) as a row matmul and a column matmul."""
    MH = _bilinear_mat(S, 2 * S)                                 # (2S, S)
    UR = np.kron(np.eye(N, dtype=np.float32), MH)                # (N*2S, N*S)
    UC = np.kron(MH.T, np.eye(C, dtype=np.float32))              # (S*C, 2S*C)
    return jnp.asarray(UR), jnp.asarray(UC)


def prepare(params, N, H, W, C):
    """Static execution plan + consolidated folded matrices for the kernel."""
    assert H == W, "square inputs assumed"
    size_units = {}                    # spatial size -> list of raw unit params

    def add_unit(size, p):
        size_units.setdefault(size, []).append(p)
        return ("ru", size, len(size_units[size]) - 1)

    trunk_plan = [add_unit(H, p) for p in params["trunk"]]
    skip_plan = add_unit(H, params["skip"])

    mask_plan = []
    cur = H
    for block in params["initial_down"]:
        mask_plan.append(("pool", cur)); cur //= 2
        mask_plan += [add_unit(cur, p) for p in block]
    mask_plan.append(("pool", cur)); cur //= 2
    mask_plan += [add_unit(cur, p) for p in params["ending_down"]]
    for block in params["up"]:
        mask_plan.append(("up", cur)); cur *= 2
        mask_plan += [add_unit(cur, p) for p in block]
    assert cur == H

    bf16 = jnp.bfloat16
    mats = {}
    for s, plist in size_units.items():
        Bs, w2s, sbs, b2s = [], [], [], []
        for p in plist:
            d = _unit_mats(p, s, C)
            Bs.append(d["Bcat"]); w2s.append(d["w2b"])
            sbs.append(d["s1t"]); sbs.append(d["b1t"]); b2s.append(d["b2t"])
        mats[f"B_{s}"] = jnp.stack(Bs).astype(bf16)       # (U, 3*S*C, S*4C)  bf16
        mats[f"w2_{s}"] = jnp.stack(w2s).astype(bf16)     # (U, S*4C, S*C)    bf16
        mats[f"sb_{s}"] = jnp.stack(sbs)                  # (2U, S*C)  f32 (s1;b1 pairs)
        mats[f"b2_{s}"] = jnp.stack(b2s)                  # (U, S*4C)  f32
    for s in sorted({op[1] for op in mask_plan if op[0] == "pool"}):
        pr, pc = _pool_mats(N, s, C)
        mats[f"pr_{s}"] = pr.astype(bf16)
        mats[f"pc_{s}"] = pc.astype(bf16)
    for s in sorted({op[1] for op in mask_plan if op[0] == "up"}):
        ur, uc = _up_mats(N, s, C)
        mats[f"ur_{s}"] = ur.astype(bf16)
        mats[f"uc_{s}"] = uc.astype(bf16)

    plan = dict(trunk=trunk_plan, skip=skip_plan, mask=mask_plan)
    return mats, plan


# --------------------------------------------------------------------------- #
# The single fused Pallas kernel.
# --------------------------------------------------------------------------- #

def ram_forward(x, mats, plan):
    """ResidualAttentionModule.forward, fully fused into one Pallas TPU kernel."""
    N, H, W, C = x.shape
    R2, L = N * H, W * C
    x2d = x.reshape(R2, L)                         # lane-dense 2-D activation layout
    names = sorted(mats.keys())
    arrays = [mats[k] for k in names]

    all_ops = plan["trunk"] + [plan["skip"]] + plan["mask"]
    ru_sizes = sorted({op[1] for op in all_ops if op[0] == "ru"})
    pool_sizes = sorted({op[1] for op in plan["mask"] if op[0] == "pool"})

    def kernel(*refs):
        x_ref, out_ref = refs[0], refs[-1]
        m = dict(zip(names, refs[1:-1]))
        f32 = jnp.float32
        bf16 = jnp.bfloat16

        # Hoisted 0/1 row-boundary masks (per size) for the roll-based row shifts:
        # zero the rows whose dy=+/-1 neighbour falls outside the image (incl. wrap).
        row_masks = {}
        for s in ru_sizes:
            h = lax.broadcasted_iota(jnp.int32, (N * s, 1), 0) % s
            row_masks[s] = ((h != 0).astype(f32), (h != s - 1).astype(f32))

        # Hoisted additive -1e30 OOB masks (per size) for the 3x3/stride-2 max-pool:
        # dy=-1 row block with ho==0 and dx=-1 col block with wo==0 are out of bounds.
        pool_masks = {}
        for s in pool_sizes:
            So, NSo, SoC = s // 2, N * (s // 2), (s // 2) * C
            ri = lax.broadcasted_iota(jnp.int32, (3 * NSo, 3 * SoC), 0)
            ci = lax.broadcasted_iota(jnp.int32, (3 * NSo, 3 * SoC), 1)
            oob = ((ri < NSo) & (ri % So == 0)) | (ci < C)
            pool_masks[s] = jnp.where(oob, f32(NEG), f32(0.0))

        def residual_unit(y, size, idx):
            # relu(bn1) -> fused 3x3 conv (single wide-K matmul) -> relu(bn2)
            # -> 1x1 conv -> + y   (shortcut is Identity: in_ch == out_ch, stride 1)
            sb = m[f"sb_{size}"]
            s1 = sb[2 * idx:2 * idx + 1, :]
            b1 = sb[2 * idx + 1:2 * idx + 2, :]
            a = jnp.maximum(y * s1 + b1, 0.0)                       # f32 (N*S, S*C)

            # Row shifts off the MXU: roll by one row + 0/1 image-boundary mask
            # (static-shift roll lowers to sublane slice/rotate on the VPU/XLU).
            m_first, m_last = row_masks[size]
            a_m1 = jnp.roll(a, 1, axis=0) * m_first                 # row r = a[r-1]
            a_p1 = jnp.roll(a, -1, axis=0) * m_last                 # row r = a[r+1]

            # One fused matmul: K = 3*S*C, bf16 operands, f32 accumulation.
            a_cat = jnp.concatenate([a_m1, a, a_p1], axis=1).astype(bf16)
            conv = jnp.dot(a_cat, m[f"B_{size}"][idx], preferred_element_type=f32)

            b2 = m[f"b2_{size}"][idx:idx + 1, :]
            h = jnp.maximum(conv + b2, 0.0).astype(bf16)
            return jnp.dot(h, m[f"w2_{size}"][idx], preferred_element_type=f32) + y

        def maxpool(y, size):
            # 2 matmuls total: stacked row taps, stacked col taps; then 9-way max.
            So, NSo, SoC = size // 2, N * (size // 2), (size // 2) * C
            ry = jnp.dot(m[f"pr_{size}"][...], y.astype(bf16),
                         preferred_element_type=jnp.float32)        # (3*N*So, S*C)
            z = jnp.dot(ry.astype(bf16), m[f"pc_{size}"][...],
                        preferred_element_type=jnp.float32)         # (3*N*So, 3*So*C)
            z = z + pool_masks[size]
            out = None
            for dyi in range(3):
                rows = z[dyi * NSo:(dyi + 1) * NSo, :]
                for dxi in range(3):
                    tap = rows[:, dxi * SoC:(dxi + 1) * SoC]
                    out = tap if out is None else jnp.maximum(out, tap)
            return out

        def upsample(y, size):
            t = jnp.dot(m[f"ur_{size}"][...], y.astype(bf16),
                        preferred_element_type=jnp.float32)
            return jnp.dot(t.astype(bf16), m[f"uc_{size}"][...],
                           preferred_element_type=jnp.float32)

        def run(y, ops):
            for op in ops:
                if op[0] == "ru":
                    y = residual_unit(y, op[1], op[2])
                elif op[0] == "pool":
                    y = maxpool(y, op[1])
                else:
                    y = upsample(y, op[1])
            return y

        xv = x_ref[...]
        trunk = run(xv, plan["trunk"])
        skip = residual_unit(xv, plan["skip"][1], plan["skip"][2])
        soft = run(xv, plan["mask"])
        # sigmoid via EUP exp + reciprocal (approx=True: ~1e-4 rel. error, review-noted)
        sig = pl.reciprocal(1.0 + jnp.exp(-soft), approx=True)
        out_ref[...] = trunk * (1.0 + sig) + skip

    vmem = pl.BlockSpec(memory_space=pltpu.MemorySpace.VMEM)
    out2d = pl.pallas_call(
        kernel,
        out_shape=jax.ShapeDtypeStruct((R2, L), x.dtype),
        in_specs=[vmem] * (1 + len(arrays)),
        out_specs=vmem,
    )(x2d, *arrays)
    return out2d.reshape(N, H, W, C)


# --------------------------------------------------------------------------- #
# Deterministic parameters (eval-mode BatchNorm statistics included).
# --------------------------------------------------------------------------- #

def make_ru_params(key, C):
    Cm = 4 * C
    ks = jax.random.split(key, 10)
    f32 = jnp.float32
    return dict(
        gamma1=1.0 + 0.1 * jax.random.normal(ks[0], (C,), f32),
        beta1=0.1 * jax.random.normal(ks[1], (C,), f32),
        mean1=0.1 * jax.random.normal(ks[2], (C,), f32),
        var1=1.0 + 0.1 * jnp.abs(jax.random.normal(ks[3], (C,), f32)),
        w1=0.1 * jax.random.normal(ks[4], (3, 3, C, Cm), f32),   # (ky, kx, Cin, Cout)
        gamma2=1.0 + 0.1 * jax.random.normal(ks[5], (Cm,), f32),
        beta2=0.1 * jax.random.normal(ks[6], (Cm,), f32),
        mean2=0.1 * jax.random.normal(ks[7], (Cm,), f32),
        var2=1.0 + 0.1 * jnp.abs(jax.random.normal(ks[8], (Cm,), f32)),
        w2=0.1 * jax.random.normal(ks[9], (Cm, C), f32),          # 1x1 conv (Cin, Cout)
    )


def build_params(key, C, num_of_updown=2, t=2, r=1):
    n_units = t + (num_of_updown - 1) * r + 2 * r + num_of_updown * r + 1
    keys = iter(jax.random.split(key, n_units))
    return dict(
        trunk=[make_ru_params(next(keys), C) for _ in range(t)],
        initial_down=[[make_ru_params(next(keys), C) for _ in range(r)]
                      for _ in range(num_of_updown - 1)],
        ending_down=[make_ru_params(next(keys), C) for _ in range(2 * r)],
        up=[[make_ru_params(next(keys), C) for _ in range(r)]
            for _ in range(num_of_updown)],
        skip=make_ru_params(next(keys), C),
    )


# ---------------------------------- main ------------------------------------ #

if __name__ == "__main__":
    N, C, H, W = 2, 4, 16, 16          # == torch input (2, 4, 16, 16) NCHW
    NUM_OF_UPDOWN, T, R = 2, 2, 1

    key = jax.random.PRNGKey(0)
    kx, kp = jax.random.split(key)
    x = jax.random.normal(kx, (N, H, W, C), jnp.float32)       # NHWC
    params = build_params(kp, C, num_of_updown=NUM_OF_UPDOWN, t=T, r=R)

    mats, plan = prepare(params, N, H, W, C)
    fwd = jax.jit(lambda xv, mv: ram_forward(xv, mv, plan))
    out = jax.block_until_ready(fwd(x, mats))

    assert out.shape == (N, H, W, C), out.shape
    assert bool(jnp.all(jnp.isfinite(out)))
    print("KERNEL_OK")
</pallas_src>

<mosaic_0001>
module attributes {stable_mosaic.version = 11 : i64} {
  func.func @kernel(%arg0: memref<32x64xf32, #tpu.memory_space<vmem>>, %arg1: memref<4x192x256xbf16, #tpu.memory_space<vmem>>, %arg2: memref<2x48x64xbf16, #tpu.memory_space<vmem>>, %arg3: memref<2x96x128xbf16, #tpu.memory_space<vmem>>, %arg4: memref<4x256xf32, #tpu.memory_space<vmem>>, %arg5: memref<2x64xf32, #tpu.memory_space<vmem>>, %arg6: memref<2x128xf32, #tpu.memory_space<vmem>>, %arg7: memref<64x96xbf16, #tpu.memory_space<vmem>>, %arg8: memref<32x48xbf16, #tpu.memory_space<vmem>>, %arg9: memref<48x32xbf16, #tpu.memory_space<vmem>>, %arg10: memref<24x16xbf16, #tpu.memory_space<vmem>>, %arg11: memref<8x64xf32, #tpu.memory_space<vmem>>, %arg12: memref<4x16xf32, #tpu.memory_space<vmem>>, %arg13: memref<4x32xf32, #tpu.memory_space<vmem>>, %arg14: memref<16x32xbf16, #tpu.memory_space<vmem>>, %arg15: memref<32x64xbf16, #tpu.memory_space<vmem>>, %arg16: memref<16x8xbf16, #tpu.memory_space<vmem>>, %arg17: memref<32x16xbf16, #tpu.memory_space<vmem>>, %arg18: memref<4x256x64xbf16, #tpu.memory_space<vmem>>, %arg19: memref<2x64x16xbf16, #tpu.memory_space<vmem>>, %arg20: memref<2x128x32xbf16, #tpu.memory_space<vmem>>, %arg21: memref<32x64xf32, #tpu.memory_space<vmem>>) attributes {dimension_semantics = [], scalar_prefetch = 0 : i64, scratch_operands = 0 : i64, tpu.core_type = #tpu.core_type<tc>} {
    %0 = tpu.iota {dimensions = array<i32: 0>} : vector<8x1xi32>
    %c4_i32 = arith.constant 4 : i32
    %c0_i32 = arith.constant 0 : i32
    %1 = arith.cmpi eq, %c4_i32, %c0_i32 : i32
    %c1_i32 = arith.constant 1 : i32
    %2 = arith.select %1, %c1_i32, %c4_i32 : i32
    %3 = vector.broadcast %2 : i32 to vector<8x1xi32>
    %4 = arith.remsi %0, %3 : vector<8x1xi32>
    %c0_i32_0 = arith.constant 0 : i32
    %5 = vector.broadcast %c0_i32_0 : i32 to vector<8x1xi32>
    %6 = arith.cmpi ne, %4, %5 : vector<8x1xi32>
    %c0_i32_1 = arith.constant 0 : i32
    %7 = vector.broadcast %c0_i32_1 : i32 to vector<8x1xi32>
    %8 = arith.cmpi slt, %4, %7 : vector<8x1xi32>
    %c0_i32_2 = arith.constant 0 : i32
    %9 = arith.cmpi slt, %2, %c0_i32_2 : i32
    %10 = vector.broadcast %9 : i1 to vector<8x1xi1>
    %11 = vector.broadcast %10 : vector<8x1xi1> to vector<8x1xi1>
    %12 = arith.xori %8, %11 : vector<8x1xi1>
    %13 = arith.andi %12, %6 : vector<8x1xi1>
    %14 = vector.broadcast %2 : i32 to vector<8x1xi32>
    %15 = arith.addi %4, %14 : vector<8x1xi32>
    %16 = arith.select %13, %15, %4 : vector<8x1xi1>, vector<8x1xi32>
    %c0_i32_3 = arith.constant 0 : i32
    %17 = vector.broadcast %c0_i32_3 : i32 to vector<8x1xi32>
    %18 = arith.cmpi ne, %16, %17 : vector<8x1xi32>
    %19 = arith.extui %18 : vector<8x1xi1> to vector<8x1xi32>
    %20 = arith.sitofp %19 : vector<8x1xi32> to vector<8x1xf32>
    %c3_i32 = arith.constant 3 : i32
    %21 = vector.broadcast %c3_i32 : i32 to vector<8x1xi32>
    %22 = arith.cmpi ne, %16, %21 : vector<8x1xi32>
    %23 = arith.extui %22 : vector<8x1xi1> to vector<8x1xi32>
    %24 = arith.sitofp %23 : vector<8x1xi32> to vector<8x1xf32>
    %25 = tpu.iota {dimensions = array<i32: 0>} : vector<16x1xi32>
    %c8_i32 = arith.constant 8 : i32
    %c0_i32_4 = arith.constant 0 : i32
    %26 = arith.cmpi eq, %c8_i32, %c0_i32_4 : i32
    %c1_i32_5 = arith.constant 1 : i32
    %27 = arith.select %26, %c1_i32_5, %c8_i32 : i32
    %28 = vector.broadcast %27 : i32 to vector<16x1xi32>
    %29 = arith.remsi %25, %28 : vector<16x1xi32>
    %c0_i32_6 = arith.constant 0 : i32
    %30 = vector.broadcast %c0_i32_6 : i32 to vector<16x1xi32>
    %31 = arith.cmpi ne, %29, %30 : vector<16x1xi32>
    %c0_i32_7 = arith.constant 0 : i32
    %32 = vector.broadcast %c0_i32_7 : i32 to vector<16x1xi32>
    %33 = arith.cmpi slt, %29, %32 : vector<16x1xi32>
    %c0_i32_8 = arith.constant 0 : i32
    %34 = arith.cmpi slt, %27, %c0_i32_8 : i32
    %35 = vector.broadcast %34 : i1 to vector<16x1xi1>
    %36 = vector.broadcast %35 : vector<16x1xi1> to vector<16x1xi1>
    %37 = arith.xori %33, %36 : vector<16x1xi1>
    %38 = arith.andi %37, %31 : vector<16x1xi1>
    %39 = vector.broadcast %27 : i32 to vector<16x1xi32>
    %40 = arith.addi %29, %39 : vector<16x1xi32>
    %41 = arith.select %38, %40, %29 : vector<16x1xi1>, vector<16x1xi32>
    %c0_i32_9 = arith.constant 0 : i32
    %42 = vector.broadcast %c0_i32_9 : i32 to vector<16x1xi32>
    %43 = arith.cmpi ne, %41, %42 : vector<16x1xi32>
    %44 = arith.extui %43 : vector<16x1xi1> to vector<16x1xi32>
    %45 = arith.sitofp %44 : vector<16x1xi32> to vector<16x1xf32>
    %c7_i32 = arith.constant 7 : i32
    %46 = vector.broadcast %c7_i32 : i32 to vector<16x1xi32>
    %47 = arith.cmpi ne, %41, %46 : vector<16x1xi32>
    %48 = arith.extui %47 : vector<16x1xi1> to vector<16x1xi32>
    %49 = arith.sitofp %48 : vector<16x1xi32> to vector<16x1xf32>
    %50 = tpu.iota {dimensions = array<i32: 0>} : vector<32x1xi32>
    %c16_i32 = arith.constant 16 : i32
    %c0_i32_10 = arith.constant 0 : i32
    %51 = arith.cmpi eq, %c16_i32, %c0_i32_10 : i32
    %c1_i32_11 = arith.constant 1 : i32
    %52 = arith.select %51, %c1_i32_11, %c16_i32 : i32
    %53 = vector.broadcast %52 : i32 to vector<32x1xi32>
    %54 = arith.remsi %50, %53 : vector<32x1xi32>
    %c0_i32_12 = arith.constant 0 : i32
    %55 = vector.broadcast %c0_i32_12 : i32 to vector<32x1xi32>
    %56 = arith.cmpi ne, %54, %55 : vector<32x1xi32>
    %c0_i32_13 = arith.constant 0 : i32
    %57 = vector.broadcast %c0_i32_13 : i32 to vector<32x1xi32>
    %58 = arith.cmpi slt, %54, %57 : vector<32x1xi32>
    %c0_i32_14 = arith.constant 0 : i32
    %59 = arith.cmpi slt, %52, %c0_i32_14 : i32
    %60 = vector.broadcast %59 : i1 to vector<32x1xi1>
    %61 = vector.broadcast %60 : vector<32x1xi1> to vector<32x1xi1>
    %62 = arith.xori %58, %61 : vector<32x1xi1>
    %63 = arith.andi %62, %56 : vector<32x1xi1>
    %64 = vector.broadcast %52 : i32 to vector<32x1xi32>
    %65 = arith.addi %54, %64 : vector<32x1xi32>
    %66 = arith.select %63, %65, %54 : vector<32x1xi1>, vector<32x1xi32>
    %c0_i32_15 = arith.constant 0 : i32
    %67 = vector.broadcast %c0_i32_15 : i32 to vector<32x1xi32>
    %68 = arith.cmpi ne, %66, %67 : vector<32x1xi32>
    %69 = arith.extui %68 : vector<32x1xi1> to vector<32x1xi32>
    %70 = arith.sitofp %69 : vector<32x1xi32> to vector<32x1xf32>
    %c15_i32 = arith.constant 15 : i32
    %71 = vector.broadcast %c15_i32 : i32 to vector<32x1xi32>
    %72 = arith.cmpi ne, %66, %71 : vector<32x1xi32>
    %73 = arith.extui %72 : vector<32x1xi1> to vector<32x1xi32>
    %74 = arith.sitofp %73 : vector<32x1xi32> to vector<32x1xf32>
    %75 = tpu.iota {dimensions = array<i32: 0>} : vector<24x48xi32>
    %76 = tpu.iota {dimensions = array<i32: 1>} : vector<24x48xi32>
    %c8_i32_16 = arith.constant 8 : i32
    %77 = vector.broadcast %c8_i32_16 : i32 to vector<24x48xi32>
    %78 = arith.cmpi slt, %75, %77 : vector<24x48xi32>
    %c4_i32_17 = arith.constant 4 : i32
    %c0_i32_18 = arith.constant 0 : i32
    %79 = arith.cmpi eq, %c4_i32_17, %c0_i32_18 : i32
    %c1_i32_19 = arith.constant 1 : i32
    %80 = arith.select %79, %c1_i32_19, %c4_i32_17 : i32
    %81 = vector.broadcast %80 : i32 to vector<24x48xi32>
    %82 = arith.remsi %75, %81 : vector<24x48xi32>
    %c0_i32_20 = arith.constant 0 : i32
    %83 = vector.broadcast %c0_i32_20 : i32 to vector<24x48xi32>
    %84 = arith.cmpi ne, %82, %83 : vector<24x48xi32>
    %c0_i32_21 = arith.constant 0 : i32
    %85 = vector.broadcast %c0_i32_21 : i32 to vector<24x48xi32>
    %86 = arith.cmpi slt, %82, %85 : vector<24x48xi32>
    %c0_i32_22 = arith.constant 0 : i32
    %87 = arith.cmpi slt, %80, %c0_i32_22 : i32
    %88 = vector.broadcast %87 : i1 to vector<24x48xi1>
    %89 = vector.broadcast %88 : vector<24x48xi1> to vector<24x48xi1>
    %90 = arith.xori %86, %89 : vector<24x48xi1>
    %91 = arith.andi %90, %84 : vector<24x48xi1>
    %92 = vector.broadcast %80 : i32 to vector<24x48xi32>
    %93 = arith.addi %82, %92 : vector<24x48xi32>
    %94 = arith.select %91, %93, %82 : vector<24x48xi1>, vector<24x48xi32>
    %c0_i32_23 = arith.constant 0 : i32
    %95 = vector.broadcast %c0_i32_23 : i32 to vector<24x48xi32>
    %96 = arith.cmpi eq, %94, %95 : vector<24x48xi32>
    %97 = arith.andi %78, %96 : vector<24x48xi1>
    %c4_i32_24 = arith.constant 4 : i32
    %98 = vector.broadcast %c4_i32_24 : i32 to vector<24x48xi32>
    %99 = arith.cmpi slt, %76, %98 : vector<24x48xi32>
    %100 = arith.ori %97, %99 : vector<24x48xi1>
    %cst = arith.constant -1.000000e+30 : f32
    %cst_25 = arith.constant 0.000000e+00 : f32
    %101 = vector.broadcast %cst : f32 to vector<24x48xf32>
    %102 = vector.broadcast %cst_25 : f32 to vector<24x48xf32>
    %103 = arith.select %100, %101, %102 : vector<24x48xi1>, vector<24x48xf32>
    %104 = tpu.iota {dimensions = array<i32: 0>} : vector<48x96xi32>
    %105 = tpu.iota {dimensions = array<i32: 1>} : vector<48x96xi32>
    %c16_i32_26 = arith.constant 16 : i32
    %106 = vector.broadcast %c16_i32_26 : i32 to vector<48x96xi32>
    %107 = arith.cmpi slt, %104, %106 : vector<48x96xi32>
    %c8_i32_27 = arith.constant 8 : i32
    %c0_i32_28 = arith.constant 0 : i32
    %108 = arith.cmpi eq, %c8_i32_27, %c0_i32_28 : i32
    %c1_i32_29 = arith.constant 1 : i32
    %109 = arith.select %108, %c1_i32_29, %c8_i32_27 : i32
    %110 = vector.broadcast %109 : i32 to vector<48x96xi32>
    %111 = arith.remsi %104, %110 : vector<48x96xi32>
    %c0_i32_30 = arith.constant 0 : i32
    %112 = vector.broadcast %c0_i32_30 : i32 to vector<48x96xi32>
    %113 = arith.cmpi ne, %111, %112 : vector<48x96xi32>
    %c0_i32_31 = arith.constant 0 : i32
    %114 = vector.broadcast %c0_i32_31 : i32 to vector<48x96xi32>
    %115 = arith.cmpi slt, %111, %114 : vector<48x96xi32>
    %c0_i32_32 = arith.constant 0 : i32
    %116 = arith.cmpi slt, %109, %c0_i32_32 : i32
    %117 = vector.broadcast %116 : i1 to vector<48x96xi1>
    %118 = vector.broadcast %117 : vector<48x96xi1> to vector<48x96xi1>
    %119 = arith.xori %115, %118 : vector<48x96xi1>
    %120 = arith.andi %119, %113 : vector<48x96xi1>
    %121 = vector.broadcast %109 : i32 to vector<48x96xi32>
    %122 = arith.addi %111, %121 : vector<48x96xi32>
    %123 = arith.select %120, %122, %111 : vector<48x96xi1>, vector<48x96xi32>
    %c0_i32_33 = arith.constant 0 : i32
    %124 = vector.broadcast %c0_i32_33 : i32 to vector<48x96xi32>
    %125 = arith.cmpi eq, %123, %124 : vector<48x96xi32>
    %126 = arith.andi %107, %125 : vector<48x96xi1>
    %c4_i32_34 = arith.constant 4 : i32
    %127 = vector.broadcast %c4_i32_34 : i32 to vector<48x96xi32>
    %128 = arith.cmpi slt, %105, %127 : vector<48x96xi32>
    %129 = arith.ori %126, %128 : vector<48x96xi1>
    %cst_35 = arith.constant -1.000000e+30 : f32
    %cst_36 = arith.constant 0.000000e+00 : f32
    %130 = vector.broadcast %cst_35 : f32 to vector<48x96xf32>
    %131 = vector.broadcast %cst_36 : f32 to vector<48x96xf32>
    %132 = arith.select %129, %130, %131 : vector<48x96xi1>, vector<48x96xf32>
    %c0 = arith.constant 0 : index
    %c0_37 = arith.constant 0 : index
    %133 = vector.load %arg0[%c0, %c0_37] : memref<32x64xf32, #tpu.memory_space<vmem>>, vector<32x64xf32>
    %c0_38 = arith.constant 0 : index
    %c0_39 = arith.constant 0 : index
    %134 = vector.load %arg11[%c0_38, %c0_39] : memref<8x64xf32, #tpu.memory_space<vmem>>, vector<1x64xf32>
    %c1 = arith.constant 1 : index
    %c0_40 = arith.constant 0 : index
    %135 = vector.load %arg11[%c1, %c0_40] : memref<8x64xf32, #tpu.memory_space<vmem>>, vector<1x64xf32>
    %136 = vector.broadcast %134 : vector<1x64xf32> to vector<32x64xf32>
    %137 = arith.mulf %133, %136 : vector<32x64xf32>
    %138 = vector.broadcast %135 : vector<1x64xf32> to vector<32x64xf32>
    %139 = arith.addf %137, %138 : vector<32x64xf32>
    %cst_41 = arith.constant 0.000000e+00 : f32
    %140 = vector.broadcast %cst_41 : f32 to vector<32x64xf32>
    %141 = arith.maximumf %139, %140 : vector<32x64xf32>
    %142 = vector.extract_strided_slice %141 {offsets = [31, 0], sizes = [1, 64], strides = [1, 1]} : vector<32x64xf32> to vector<1x64xf32>
    %143 = vector.extract_strided_slice %141 {offsets = [0, 0], sizes = [31, 64], strides = [1, 1]} : vector<32x64xf32> to vector<31x64xf32>
    %144 = tpu.concatenate %142, %143 in 0 : vector<1x64xf32>, vector<31x64xf32> -> vector<32x64xf32>
    %145 = vector.broadcast %70 : vector<32x1xf32> to vector<32x64xf32>
    %146 = arith.mulf %144, %145 : vector<32x64xf32>
    %147 = vector.extract_strided_slice %141 {offsets = [1, 0], sizes = [31, 64], strides = [1, 1]} : vector<32x64xf32> to vector<31x64xf32>
    %148 = vector.extract_strided_slice %141 {offsets = [0, 0], sizes = [1, 64], strides = [1, 1]} : vector<32x64xf32> to vector<1x64xf32>
    %149 = tpu.concatenate %147, %148 in 0 : vector<31x64xf32>, vector<1x64xf32> -> vector<32x64xf32>
    %150 = vector.broadcast %74 : vector<32x1xf32> to vector<32x64xf32>
    %151 = arith.mulf %149, %150 : vector<32x64xf32>
    %152 = tpu.concatenate %146, %141, %151 in 1 : vector<32x64xf32>, vector<32x64xf32>, vector<32x64xf32> -> vector<32x192xf32>
    %153 = arith.truncf %152 : vector<32x192xf32> to vector<32x192xbf16>
    %c0_42 = arith.constant 0 : index
    %c0_43 = arith.constant 0 : index
    %c0_44 = arith.constant 0 : index
    %154 = vector.load %arg1[%c0_42, %c0_43, %c0_44] : memref<4x192x256xbf16, #tpu.memory_space<vmem>>, vector<1x192x256xbf16>
    %155 = vector.shape_cast %154 : vector<1x192x256xbf16> to vector<192x256xbf16>
    %cst_45 = arith.constant dense<0.000000e+00> : vector<32x256xf32>
    %156 = tpu.matmul %153, %155, %cst_45 {dimension_numbers = #tpu.dot_dimension_numbers<[1], [0], [0], [1], [0, 0, 1, 1], [], []>} : vector<32x192xbf16>, vector<192x256xbf16>, vector<32x256xf32> -> vector<32x256xf32>
    %c0_46 = arith.constant 0 : index
    %c0_47 = arith.constant 0 : index
    %157 = vector.load %arg4[%c0_46, %c0_47] : memref<4x256xf32, #tpu.memory_space<vmem>>, vector<1x256xf32>
    %158 = vector.broadcast %157 : vector<1x256xf32> to vector<32x256xf32>
    %159 = arith.addf %156, %158 : vector<32x256xf32>
    %cst_48 = arith.constant 0.000000e+00 : f32
    %160 = vector.broadcast %cst_48 : f32 to vector<32x256xf32>
    %161 = arith.maximumf %159, %160 : vector<32x256xf32>
    %162 = arith.truncf %161 : vector<32x256xf32> to vector<32x256xbf16>
    %c0_49 = arith.constant 0 : index
    %c0_50 = arith.constant 0 : index
    %c0_51 = arith.constant 0 : index
    %163 = vector.load %arg18[%c0_49, %c0_50, %c0_51] : memref<4x256x64xbf16, #tpu.memory_space<vmem>>, vector<1x256x64xbf16>
    %164 = vector.shape_cast %163 : vector<1x256x64xbf16> to vector<256x64xbf16>
    %cst_52 = arith.constant dense<0.000000e+00> : vector<32x64xf32>
    %165 = tpu.matmul %162, %164, %cst_52 {dimension_numbers = #tpu.dot_dimension_numbers<[1], [0], [0], [1], [0, 0, 1, 1], [], []>} : vector<32x256xbf16>, vector<256x64xbf16>, vector<32x64xf32> -> vector<32x64xf32>
    %166 = arith.addf %165, %133 : vector<32x64xf32>
    %c2 = arith.constant 2 : index
    %c0_53 = arith.constant 0 : index
    %167 = vector.load %arg11[%c2, %c0_53] : memref<8x64xf32, #tpu.memory_space<vmem>>, vector<1x64xf32>
    %c3 = arith.constant 3 : index
    %c0_54 = arith.constant 0 : index
    %168 = vector.load %arg11[%c3, %c0_54] : memref<8x64xf32, #tpu.memory_space<vmem>>, vector<1x64xf32>
    %169 = vector.broadcast %167 : vector<1x64xf32> to vector<32x64xf32>
    %170 = arith.mulf %166, %169 : vector<32x64xf32>
    %171 = vector.broadcast %168 : vector<1x64xf32> to vector<32x64xf32>
    %172 = arith.addf %170, %171 : vector<32x64xf32>
    %cst_55 = arith.constant 0.000000e+00 : f32
    %173 = vector.broadcast %cst_55 : f32 to vector<32x64xf32>
    %174 = arith.maximumf %172, %173 : vector<32x64xf32>
    %175 = vector.extract_strided_slice %174 {offsets = [31, 0], sizes = [1, 64], strides = [1, 1]} : vector<32x64xf32> to vector<1x64xf32>
    %176 = vector.extract_strided_slice %174 {offsets = [0, 0], sizes = [31, 64], strides = [1, 1]} : vector<32x64xf32> to vector<31x64xf32>
    %177 = tpu.concatenate %175, %176 in 0 : vector<1x64xf32>, vector<31x64xf32> -> vector<32x64xf32>
    %178 = vector.broadcast %70 : vector<32x1xf32> to vector<32x64xf32>
    %179 = arith.mulf %177, %178 : vector<32x64xf32>
    %180 = vector.extract_strided_slice %174 {offsets = [1, 0], sizes = [31, 64], strides = [1, 1]} : vector<32x64xf32> to vector<31x64xf32>
    %181 = vector.extract_strided_slice %174 {offsets = [0, 0], sizes = [1, 64], strides = [1, 1]} : vector<32x64xf32> to vector<1x64xf32>
    %182 = tpu.concatenate %180, %181 in 0 : vector<31x64xf32>, vector<1x64xf32> -> vector<32x64xf32>
    %183 = vector.broadcast %74 : vector<32x1xf32> to vector<32x64xf32>
    %184 = arith.mulf %182, %183 : vector<32x64xf32>
    %185 = tpu.concatenate %179, %174, %184 in 1 : vector<32x64xf32>, vector<32x64xf32>, vector<32x64xf32> -> vector<32x192xf32>
    %186 = arith.truncf %185 : vector<32x192xf32> to vector<32x192xbf16>
    %c1_56 = arith.constant 1 : index
    %c0_57 = arith.constant 0 : index
    %c0_58 = arith.constant 0 : index
    %187 = vector.load %arg1[%c1_56, %c0_57, %c0_58] : memref<4x192x256xbf16, #tpu.memory_space<vmem>>, vector<1x192x256xbf16>
    %188 = vector.shape_cast %187 : vector<1x192x256xbf16> to vector<192x256xbf16>
    %cst_59 = arith.constant dense<0.000000e+00> : vector<32x256xf32>
    %189 = tpu.matmul %186, %188, %cst_59 {dimension_numbers = #tpu.dot_dimension_numbers<[1], [0], [0], [1], [0, 0, 1, 1], [], []>} : vector<32x192xbf16>, vector<192x256xbf16>, vector<32x256xf32> -> vector<32x256xf32>
    %c1_60 = arith.constant 1 : index
    %c0_61 = arith.constant 0 : index
    %190 = vector.load %arg4[%c1_60, %c0_61] : memref<4x256xf32, #tpu.memory_space<vmem>>, vector<1x256xf32>
    %191 = vector.broadcast %190 : vector<1x256xf32> to vector<32x256xf32>
    %192 = arith.addf %189, %191 : vector<32x256xf32>
    %cst_62 = arith.constant 0.000000e+00 : f32
    %193 = vector.broadcast %cst_62 : f32 to vector<32x256xf32>
    %194 = arith.maximumf %192, %193 : vector<32x256xf32>
    %195 = arith.truncf %194 : vector<32x256xf32> to vector<32x256xbf16>
    %c1_63 = arith.constant 1 : index
    %c0_64 = arith.constant 0 : index
    %c0_65 = arith.constant 0 : index
    %196 = vector.load %arg18[%c1_63, %c0_64, %c0_65] : memref<4x256x64xbf16, #tpu.memory_space<vmem>>, vector<1x256x64xbf16>
    %197 = vector.shape_cast %196 : vector<1x256x64xbf16> to vector<256x64xbf16>
    %cst_66 = arith.constant dense<0.000000e+00> : vector<32x64xf32>
    %198 = tpu.matmul %195, %197, %cst_66 {dimension_numbers = #tpu.dot_dimension_numbers<[1], [0], [0], [1], [0, 0, 1, 1], [], []>} : vector<32x256xbf16>, vector<256x64xbf16>, vector<32x64xf32> -> vector<32x64xf32>
    %199 = arith.addf %198, %166 : vector<32x64xf32>
    %c4 = arith.constant 4 : index
    %c0_67 = arith.constant 0 : index
    %200 = vector.load %arg11[%c4, %c0_67] : memref<8x64xf32, #tpu.memory_space<vmem>>, vector<1x64xf32>
    %c5 = arith.constant 5 : index
    %c0_68 = arith.constant 0 : index
    %201 = vector.load %arg11[%c5, %c0_68] : memref<8x64xf32, #tpu.memory_space<vmem>>, vector<1x64xf32>
    %202 = vector.broadcast %200 : vector<1x64xf32> to vector<32x64xf32>
    %203 = arith.mulf %133, %202 : vector<32x64xf32>
    %204 = vector.broadcast %201 : vector<1x64xf32> to vector<32x64xf32>
    %205 = arith.addf %203, %204 : vector<32x64xf32>
    %cst_69 = arith.constant 0.000000e+00 : f32
    %206 = vector.broadcast %cst_69 : f32 to vector<32x64xf32>
    %207 = arith.maximumf %205, %206 : vector<32x64xf32>
    %208 = vector.extract_strided_slice %207 {offsets = [31, 0], sizes = [1, 64], strides = [1, 1]} : vector<32x64xf32> to vector<1x64xf32>
    %209 = vector.extract_strided_slice %207 {offsets = [0, 0], sizes = [31, 64], strides = [1, 1]} : vector<32x64xf32> to vector<31x64xf32>
    %210 = tpu.concatenate %208, %209 in 0 : vector<1x64xf32>, vector<31x64xf32> -> vector<32x64xf32>
    %211 = vector.broadcast %70 : vector<32x1xf32> to vector<32x64xf32>
    %212 = arith.mulf %210, %211 : vector<32x64xf32>
    %213 = vector.extract_strided_slice %207 {offsets = [1, 0], sizes = [31, 64], strides = [1, 1]} : vector<32x64xf32> to vector<31x64xf32>
    %214 = vector.extract_strided_slice %207 {offsets = [0, 0], sizes = [1, 64], strides = [1, 1]} : vector<32x64xf32> to vector<1x64xf32>
    %215 = tpu.concatenate %213, %214 in 0 : vector<31x64xf32>, vector<1x64xf32> -> vector<32x64xf32>
    %216 = vector.broadcast %74 : vector<32x1xf32> to vector<32x64xf32>
    %217 = arith.mulf %215, %216 : vector<32x64xf32>
    %218 = tpu.concatenate %212, %207, %217 in 1 : vector<32x64xf32>, vector<32x64xf32>, vector<32x64xf32> -> vector<32x192xf32>
    %219 = arith.truncf %218 : vector<32x192xf32> to vector<32x192xbf16>
    %c2_70 = arith.constant 2 : index
    %c0_71 = arith.constant 0 : index
    %c0_72 = arith.constant 0 : index
    %220 = vector.load %arg1[%c2_70, %c0_71, %c0_72] : memref<4x192x256xbf16, #tpu.memory_space<vmem>>, vector<1x192x256xbf16>
    %221 = vector.shape_cast %220 : vector<1x192x256xbf16> to vector<192x256xbf16>
    %cst_73 = arith.constant dense<0.000000e+00> : vector<32x256xf32>
    %222 = tpu.matmul %219, %221, %cst_73 {dimension_numbers = #tpu.dot_dimension_numbers<[1], [0], [0], [1], [0, 0, 1, 1], [], []>} : vector<32x192xbf16>, vector<192x256xbf16>, vector<32x256xf32> -> vector<32x256xf32>
    %c2_74 = arith.constant 2 : index
    %c0_75 = arith.constant 0 : index
    %223 = vector.load %arg4[%c2_74, %c0_75] : memref<4x256xf32, #tpu.memory_space<vmem>>, vector<1x256xf32>
    %224 = vector.broadcast %223 : vector<1x256xf32> to vector<32x256xf32>
    %225 = arith.addf %222, %224 : vector<32x256xf32>
    %cst_76 = arith.constant 0.000000e+00 : f32
    %226 = vector.broadcast %cst_76 : f32 to vector<32x256xf32>
    %227 = arith.maximumf %225, %226 : vector<32x256xf32>
    %228 = arith.truncf %227 : vector<32x256xf32> to vector<32x256xbf16>
    %c2_77 = arith.constant 2 : index
    %c0_78 = arith.constant 0 : index
    %c0_79 = arith.constant 0 : index
    %229 = vector.load %arg18[%c2_77, %c0_78, %c0_79] : memref<4x256x64xbf16, #tpu.memory_space<vmem>>, vector<1x256x64xbf16>
    %230 = vector.shape_cast %229 : vector<1x256x64xbf16> to vector<256x64xbf16>
    %cst_80 = arith.constant dense<0.000000e+00> : vector<32x64xf32>
    %231 = tpu.matmul %228, %230, %cst_80 {dimension_numbers = #tpu.dot_dimension_numbers<[1], [0], [0], [1], [0, 0, 1, 1], [], []>} : vector<32x256xbf16>, vector<256x64xbf16>, vector<32x64xf32> -> vector<32x64xf32>
    %232 = arith.addf %231, %133 : vector<32x64xf32>
    %c0_81 = arith.constant 0 : index
    %c0_82 = arith.constant 0 : index
    %233 = vector.load %arg9[%c0_81, %c0_82] : memref<48x32xbf16, #tpu.memory_space<vmem>>, vector<48x32xbf16>
    %234 = arith.truncf %133 : vector<32x64xf32> to vector<32x64xbf16>
    %cst_83 = arith.constant dense<0.000000e+00> : vector<48x64xf32>
    %235 = tpu.matmul %233, %234, %cst_83 {dimension_numbers = #tpu.dot_dimension_numbers<[1], [0], [0], [1], [0, 0, 1, 1], [], []>} : vector<48x32xbf16>, vector<32x64xbf16>, vector<48x64xf32> -> vector<48x64xf32>
    %236 = arith.truncf %235 : vector<48x64xf32> to vector<48x64xbf16>
    %c0_84 = arith.constant 0 : index
    %c0_85 = arith.constant 0 : index
    %237 = vector.load %arg7[%c0_84, %c0_85] : memref<64x96xbf16, #tpu.memory_space<vmem>>, vector<64x96xbf16>
    %cst_86 = arith.constant dense<0.000000e+00> : vector<48x96xf32>
    %238 = tpu.matmul %236, %237, %cst_86 {dimension_numbers = #tpu.dot_dimension_numbers<[1], [0], [0], [1], [0, 0, 1, 1], [], []>} : vector<48x64xbf16>, vector<64x96xbf16>, vector<48x96xf32> -> vector<48x96xf32>
    %239 = arith.addf %238, %132 : vector<48x96xf32>
    %240 = vector.extract_strided_slice %239 {offsets = [0, 0], sizes = [16, 96], strides = [1, 1]} : vector<48x96xf32> to vector<16x96xf32>
    %241 = vector.extract_strided_slice %240 {offsets = [0, 0], sizes = [16, 32], strides = [1, 1]} : vector<16x96xf32> to vector<16x32xf32>
    %242 = vector.extract_strided_slice %240 {offsets = [0, 32], sizes = [16, 32], strides = [1, 1]} : vector<16x96xf32> to vector<16x32xf32>
    %243 = arith.maximumf %241, %242 : vector<16x32xf32>
    %244 = vector.extract_strided_slice %240 {offsets = [0, 64], sizes = [16, 32], strides = [1, 1]} : vector<16x96xf32> to vector<16x32xf32>
    %245 = arith.maximumf %243, %244 : vector<16x32xf32>
    %246 = vector.extract_strided_slice %239 {offsets = [16, 0], sizes = [16, 96], strides = [1, 1]} : vector<48x96xf32> to vector<16x96xf32>
    %247 = vector.extract_strided_slice %246 {offsets = [0, 0], sizes = [16, 32], strides = [1, 1]} : vector<16x96xf32> to vector<16x32xf32>
    %248 = arith.maximumf %245, %247 : vector<16x32xf32>
    %249 = vector.extract_strided_slice %246 {offsets = [0, 32], sizes = [16, 32], strides = [1, 1]} : vector<16x96xf32> to vector<16x32xf32>
    %250 = arith.maximumf %248, %249 : vector<16x32xf32>
    %251 = vector.extract_strided_slice %246 {offsets = [0, 64], sizes = [16, 32], strides = [1, 1]} : vector<16x96xf32> to vector<16x32xf32>
    %252 = arith.maximumf %250, %251 : vector<16x32xf32>
    %253 = vector.extract_strided_slice %239 {offsets = [32, 0], sizes = [16, 96], strides = [1, 1]} : vector<48x96xf32> to vector<16x96xf32>
    %254 = vector.extract_strided_slice %253 {offsets = [0, 0], sizes = [16, 32], strides = [1, 1]} : vector<16x96xf32> to vector<16x32xf32>
    %255 = arith.maximumf %252, %254 : vector<16x32xf32>
    %256 = vector.extract_strided_slice %253 {offsets = [0, 32], sizes = [16, 32], strides = [1, 1]} : vector<16x96xf32> to vector<16x32xf32>
    %257 = arith.maximumf %255, %256 : vector<16x32xf32>
    %258 = vector.extract_strided_slice %253 {offsets = [0, 64], sizes = [16, 32], strides = [1, 1]} : vector<16x96xf32> to vector<16x32xf32>
    %259 = arith.maximumf %257, %258 : vector<16x32xf32>
    %c0_87 = arith.constant 0 : index
    %c0_88 = arith.constant 0 : index
    %260 = vector.load %arg13[%c0_87, %c0_88] : memref<4x32xf32, #tpu.memory_space<vmem>>, vector<1x32xf32>
    %c1_89 = arith.constant 1 : index
    %c0_90 = arith.constant 0 : index
    %261 = vector.load %arg13[%c1_89, %c0_90] : memref<4x32xf32, #tpu.memory_space<vmem>>, vector<1x32xf32>
    %262 = vector.broadcast %260 : vector<1x32xf32> to vector<16x32xf32>
    %263 = arith.mulf %259, %262 : vector<16x32xf32>
    %264 = vector.broadcast %261 : vector<1x32xf32> to vector<16x32xf32>
    %265 = arith.addf %263, %264 : vector<16x32xf32>
    %cst_91 = arith.constant 0.000000e+00 : f32
    %266 = vector.broadcast %cst_91 : f32 to vector<16x32xf32>
    %267 = arith.maximumf %265, %266 : vector<16x32xf32>
    %268 = vector.extract_strided_slice %267 {offsets = [15, 0], sizes = [1, 32], strides = [1, 1]} : vector<16x32xf32> to vector<1x32xf32>
    %269 = vector.extract_strided_slice %267 {offsets = [0, 0], sizes = [15, 32], strides = [1, 1]} : vector<16x32xf32> to vector<15x32xf32>
    %270 = tpu.concatenate %268, %269 in 0 : vector<1x32xf32>, vector<15x32xf32> -> vector<16x32xf32>
    %271 = vector.broadcast %45 : vector<16x1xf32> to vector<16x32xf32>
    %272 = arith.mulf %270, %271 : vector<16x32xf32>
    %273 = vector.extract_strided_slice %267 {offsets = [1, 0], sizes = [15, 32], strides = [1, 1]} : vector<16x32xf32> to vector<15x32xf32>
    %274 = vector.extract_strided_slice %267 {offsets = [0, 0], sizes = [1, 32], strides = [1, 1]} : vector<16x32xf32> to vector<1x32xf32>
    %275 = tpu.concatenate %273, %274 in 0 : vector<15x32xf32>, vector<1x32xf32> -> vector<16x32xf32>
    %276 = vector.broadcast %49 : vector<16x1xf32> to vector<16x32xf32>
    %277 = arith.mulf %275, %276 : vector<16x32xf32>
    %278 = tpu.concatenate %272, %267, %277 in 1 : vector<16x32xf32>, vector<16x32xf32>, vector<16x32xf32> -> vector<16x96xf32>
    %279 = arith.truncf %278 : vector<16x96xf32> to vector<16x96xbf16>
    %c0_92 = arith.constant 0 : index
    %c0_93 = arith.constant 0 : index
    %c0_94 = arith.constant 0 : index
    %280 = vector.load %arg3[%c0_92, %c0_93, %c0_94] : memref<2x96x128xbf16, #tpu.memory_space<vmem>>, vector<1x96x128xbf16>
    %281 = vector.shape_cast %280 : vector<1x96x128xbf16> to vector<96x128xbf16>
    %cst_95 = arith.constant dense<0.000000e+00> : vector<16x128xf32>
    %282 = tpu.matmul %279, %281, %cst_95 {dimension_numbers = #tpu.dot_dimension_numbers<[1], [0], [0], [1], [0, 0, 1, 1], [], []>} : vector<16x96xbf16>, vector<96x128xbf16>, vector<16x128xf32> -> vector<16x128xf32>
    %c0_96 = arith.constant 0 : index
    %c0_97 = arith.constant 0 : index
    %283 = vector.load %arg6[%c0_96, %c0_97] : memref<2x128xf32, #tpu.memory_space<vmem>>, vector<1x128xf32>
    %284 = vector.broadcast %283 : vector<1x128xf32> to vector<16x128xf32>
    %285 = arith.addf %282, %284 : vector<16x128xf32>
    %cst_98 = arith.constant 0.000000e+00 : f32
    %286 = vector.broadcast %cst_98 : f32 to vector<16x128xf32>
    %287 = arith.maximumf %285, %286 : vector<16x128xf32>
    %288 = arith.truncf %287 : vector<16x128xf32> to vector<16x128xbf16>
    %c0_99 = arith.constant 0 : index
    %c0_100 = arith.constant 0 : index
    %c0_101 = arith.constant 0 : index
    %289 = vector.load %arg20[%c0_99, %c0_100, %c0_101] : memref<2x128x32xbf16, #tpu.memory_space<vmem>>, vector<1x128x32xbf16>
    %290 = vector.shape_cast %289 : vector<1x128x32xbf16> to vector<128x32xbf16>
    %cst_102 = arith.constant dense<0.000000e+00> : vector<16x32xf32>
    %291 = tpu.matmul %288, %290, %cst_102 {dimension_numbers = #tpu.dot_dimension_numbers<[1], [0], [0], [1], [0, 0, 1, 1], [], []>} : vector<16x128xbf16>, vector<128x32xbf16>, vector<16x32xf32> -> vector<16x32xf32>
    %292 = arith.addf %291, %259 : vector<16x32xf32>
    %c0_103 = arith.constant 0 : index
    %c0_104 = arith.constant 0 : index
    %293 = vector.load %arg10[%c0_103, %c0_104] : memref<24x16xbf16, #tpu.memory_space<vmem>>, vector<24x16xbf16>
    %294 = arith.truncf %292 : vector<16x32xf32> to vector<16x32xbf16>
    %cst_105 = arith.constant dense<0.000000e+00> : vector<24x32xf32>
    %295 = tpu.matmul %293, %294, %cst_105 {dimension_numbers = #tpu.dot_dimension_numbers<[1], [0], [0], [1], [0, 0, 1, 1], [], []>} : vector<24x16xbf16>, vector<16x32xbf16>, vector<24x32xf32> -> vector<24x32xf32>
    %296 = arith.truncf %295 : vector<24x32xf32> to vector<24x32xbf16>
    %c0_106 = arith.constant 0 : index
    %c0_107 = arith.constant 0 : index
    %297 = vector.load %arg8[%c0_106, %c0_107] : memref<32x48xbf16, #tpu.memory_space<vmem>>, vector<32x48xbf16>
    %cst_108 = arith.constant dense<0.000000e+00> : vector<24x48xf32>
    %298 = tpu.matmul %296, %297, %cst_108 {dimension_numbers = #tpu.dot_dimension_numbers<[1], [0], [0], [1], [0, 0, 1, 1], [], []>} : vector<24x32xbf16>, vector<32x48xbf16>, vector<24x48xf32> -> vector<24x48xf32>
    %299 = arith.addf %298, %103 : vector<24x48xf32>
    %300 = vector.extract_strided_slice %299 {offsets = [0, 0], sizes = [8, 48], strides = [1, 1]} : vector<24x48xf32> to vector<8x48xf32>
    %301 = vector.extract_strided_slice %300 {offsets = [0, 0], sizes = [8, 16], strides = [1, 1]} : vector<8x48xf32> to vector<8x16xf32>
    %302 = vector.extract_strided_slice %300 {offsets = [0, 16], sizes = [8, 16], strides = [1, 1]} : vector<8x48xf32> to vector<8x16xf32>
    %303 = arith.maximumf %301, %302 : vector<8x16xf32>
    %304 = vector.extract_strided_slice %300 {offsets = [0, 32], sizes = [8, 16], strides = [1, 1]} : vector<8x48xf32> to vector<8x16xf32>
    %305 = arith.maximumf %303, %304 : vector<8x16xf32>
    %306 = vector.extract_strided_slice %299 {offsets = [8, 0], sizes = [8, 48], strides = [1, 1]} : vector<24x48xf32> to vector<8x48xf32>
    %307 = vector.extract_strided_slice %306 {offsets = [0, 0], sizes = [8, 16], strides = [1, 1]} : vector<8x48xf32> to vector<8x16xf32>
    %308 = arith.maximumf %305, %307 : vector<8x16xf32>
    %309 = vector.extract_strided_slice %306 {offsets = [0, 16], sizes = [8, 16], strides = [1, 1]} : vector<8x48xf32> to vector<8x16xf32>
    %310 = arith.maximumf %308, %309 : vector<8x16xf32>
    %311 = vector.extract_strided_slice %306 {offsets = [0, 32], sizes = [8, 16], strides = [1, 1]} : vector<8x48xf32> to vector<8x16xf32>
    %312 = arith.maximumf %310, %311 : vector<8x16xf32>
    %313 = vector.extract_strided_slice %299 {offsets = [16, 0], sizes = [8, 48], strides = [1, 1]} : vector<24x48xf32> to vector<8x48xf32>
    %314 = vector.extract_strided_slice %313 {offsets = [0, 0], sizes = [8, 16], strides = [1, 1]} : vector<8x48xf32> to vector<8x16xf32>
    %315 = arith.maximumf %312, %314 : vector<8x16xf32>
    %316 = vector.extract_strided_slice %313 {offsets = [0, 16], sizes = [8, 16], strides = [1, 1]} : vector<8x48xf32> to vector<8x16xf32>
    %317 = arith.maximumf %315, %316 : vector<8x16xf32>
    %318 = vector.extract_strided_slice %313 {offsets = [0, 32], sizes = [8, 16], strides = [1, 1]} : vector<8x48xf32> to vector<8x16xf32>
    %319 = arith.maximumf %317, %318 : vector<8x16xf32>
    %c0_109 = arith.constant 0 : index
    %c0_110 = arith.constant 0 : index
    %320 = vector.load %arg12[%c0_109, %c0_110] : memref<4x16xf32, #tpu.memory_space<vmem>>, vector<1x16xf32>
    %c1_111 = arith.constant 1 : index
    %c0_112 = arith.constant 0 : index
    %321 = vector.load %arg12[%c1_111, %c0_112] : memref<4x16xf32, #tpu.memory_space<vmem>>, vector<1x16xf32>
    %322 = vector.broadcast %320 : vector<1x16xf32> to vector<8x16xf32>
    %323 = arith.mulf %319, %322 : vector<8x16xf32>
    %324 = vector.broadcast %321 : vector<1x16xf32> to vector<8x16xf32>
    %325 = arith.addf %323, %324 : vector<8x16xf32>
    %cst_113 = arith.constant 0.000000e+00 : f32
    %326 = vector.broadcast %cst_113 : f32 to vector<8x16xf32>
    %327 = arith.maximumf %325, %326 : vector<8x16xf32>
    %328 = vector.extract_strided_slice %327 {offsets = [7, 0], sizes = [1, 16], strides = [1, 1]} : vector<8x16xf32> to vector<1x16xf32>
    %329 = vector.extract_strided_slice %327 {offsets = [0, 0], sizes = [7, 16], strides = [1, 1]} : vector<8x16xf32> to vector<7x16xf32>
    %330 = tpu.concatenate %328, %329 in 0 : vector<1x16xf32>, vector<7x16xf32> -> vector<8x16xf32>
    %331 = vector.broadcast %20 : vector<8x1xf32> to vector<8x16xf32>
    %332 = arith.mulf %330, %331 : vector<8x16xf32>
    %333 = vector.extract_strided_slice %327 {offsets = [1, 0], sizes = [7, 16], strides = [1, 1]} : vector<8x16xf32> to vector<7x16xf32>
    %334 = vector.extract_strided_slice %327 {offsets = [0, 0], sizes = [1, 16], strides = [1, 1]} : vector<8x16xf32> to vector<1x16xf32>
    %335 = tpu.concatenate %333, %334 in 0 : vector<7x16xf32>, vector<1x16xf32> -> vector<8x16xf32>
    %336 = vector.broadcast %24 : vector<8x1xf32> to vector<8x16xf32>
    %337 = arith.mulf %335, %336 : vector<8x16xf32>
    %338 = tpu.concatenate %332, %327, %337 in 1 : vector<8x16xf32>, vector<8x16xf32>, vector<8x16xf32> -> vector<8x48xf32>
    %339 = arith.truncf %338 : vector<8x48xf32> to vector<8x48xbf16>
    %c0_114 = arith.constant 0 : index
    %c0_115 = arith.constant 0 : index
    %c0_116 = arith.constant 0 : index
    %340 = vector.load %arg2[%c0_114, %c0_115, %c0_116] : memref<2x48x64xbf16, #tpu.memory_space<vmem>>, vector<1x48x64xbf16>
    %341 = vector.shape_cast %340 : vector<1x48x64xbf16> to vector<48x64xbf16>
    %cst_117 = arith.constant dense<0.000000e+00> : vector<8x64xf32>
    %342 = tpu.matmul %339, %341, %cst_117 {dimension_numbers = #tpu.dot_dimension_numbers<[1], [0], [0], [1], [0, 0, 1, 1], [], []>} : vector<8x48xbf16>, vector<48x64xbf16>, vector<8x64xf32> -> vector<8x64xf32>
    %c0_118 = arith.constant 0 : index
    %c0_119 = arith.constant 0 : index
    %343 = vector.load %arg5[%c0_118, %c0_119] : memref<2x64xf32, #tpu.memory_space<vmem>>, vector<1x64xf32>
    %344 = vector.broadcast %343 : vector<1x64xf32> to vector<8x64xf32>
    %345 = arith.addf %342, %344 : vector<8x64xf32>
    %cst_120 = arith.constant 0.000000e+00 : f32
    %346 = vector.broadcast %cst_120 : f32 to vector<8x64xf32>
    %347 = arith.maximumf %345, %346 : vector<8x64xf32>
    %348 = arith.truncf %347 : vector<8x64xf32> to vector<8x64xbf16>
    %c0_121 = arith.constant 0 : index
    %c0_122 = arith.constant 0 : index
    %c0_123 = arith.constant 0 : index
    %349 = vector.load %arg19[%c0_121, %c0_122, %c0_123] : memref<2x64x16xbf16, #tpu.memory_space<vmem>>, vector<1x64x16xbf16>
    %350 = vector.shape_cast %349 : vector<1x64x16xbf16> to vector<64x16xbf16>
    %cst_124 = arith.constant dense<0.000000e+00> : vector<8x16xf32>
    %351 = tpu.matmul %348, %350, %cst_124 {dimension_numbers = #tpu.dot_dimension_numbers<[1], [0], [0], [1], [0, 0, 1, 1], [], []>} : vector<8x64xbf16>, vector<64x16xbf16>, vector<8x16xf32> -> vector<8x16xf32>
    %352 = arith.addf %351, %319 : vector<8x16xf32>
    %c2_125 = arith.constant 2 : index
    %c0_126 = arith.constant 0 : index
    %353 = vector.load %arg12[%c2_125, %c0_126] : memref<4x16xf32, #tpu.memory_space<vmem>>, vector<1x16xf32>
    %c3_127 = arith.constant 3 : index
    %c0_128 = arith.constant 0 : index
    %354 = vector.load %arg12[%c3_127, %c0_128] : memref<4x16xf32, #tpu.memory_space<vmem>>, vector<1x16xf32>
    %355 = vector.broadcast %353 : vector<1x16xf32> to vector<8x16xf32>
    %356 = arith.mulf %352, %355 : vector<8x16xf32>
    %357 = vector.broadcast %354 : vector<1x16xf32> to vector<8x16xf32>
    %358 = arith.addf %356, %357 : vector<8x16xf32>
    %cst_129 = arith.constant 0.000000e+00 : f32
    %359 = vector.broadcast %cst_129 : f32 to vector<8x16xf32>
    %360 = arith.maximumf %358, %359 : vector<8x16xf32>
    %361 = vector.extract_strided_slice %360 {offsets = [7, 0], sizes = [1, 16], strides = [1, 1]} : vector<8x16xf32> to vector<1x16xf32>
    %362 = vector.extract_strided_slice %360 {offsets = [0, 0], sizes = [7, 16], strides = [1, 1]} : vector<8x16xf32> to vector<7x16xf32>
    %363 = tpu.concatenate %361, %362 in 0 : vector<1x16xf32>, vector<7x16xf32> -> vector<8x16xf32>
    %364 = vector.broadcast %20 : vector<8x1xf32> to vector<8x16xf32>
    %365 = arith.mulf %363, %364 : vector<8x16xf32>
    %366 = vector.extract_strided_slice %360 {offsets = [1, 0], sizes = [7, 16], strides = [1, 1]} : vector<8x16xf32> to vector<7x16xf32>
    %367 = vector.extract_strided_slice %360 {offsets = [0, 0], sizes = [1, 16], strides = [1, 1]} : vector<8x16xf32> to vector<1x16xf32>
    %368 = tpu.concatenate %366, %367 in 0 : vector<7x16xf32>, vector<1x16xf32> -> vector<8x16xf32>
    %369 = vector.broadcast %24 : vector<8x1xf32> to vector<8x16xf32>
    %370 = arith.mulf %368, %369 : vector<8x16xf32>
    %371 = tpu.concatenate %365, %360, %370 in 1 : vector<8x16xf32>, vector<8x16xf32>, vector<8x16xf32> -> vector<8x48xf32>
    %372 = arith.truncf %371 : vector<8x48xf32> to vector<8x48xbf16>
    %c1_130 = arith.constant 1 : index
    %c0_131 = arith.constant 0 : index
    %c0_132 = arith.constant 0 : index
    %373 = vector.load %arg2[%c1_130, %c0_131, %c0_132] : memref<2x48x64xbf16, #tpu.memory_space<vmem>>, vector<1x48x64xbf16>
    %374 = vector.shape_cast %373 : vector<1x48x64xbf16> to vector<48x64xbf16>
    %cst_133 = arith.constant dense<0.000000e+00> : vector<8x64xf32>
    %375 = tpu.matmul %372, %374, %cst_133 {dimension_numbers = #tpu.dot_dimension_numbers<[1], [0], [0], [1], [0, 0, 1, 1], [], []>} : vector<8x48xbf16>, vector<48x64xbf16>, vector<8x64xf32> -> vector<8x64xf32>
    %c1_134 = arith.constant 1 : index
    %c0_135 = arith.constant 0 : index
    %376 = vector.load %arg5[%c1_134, %c0_135] : memref<2x64xf32, #tpu.memory_space<vmem>>, vector<1x64xf32>
    %377 = vector.broadcast %376 : vector<1x64xf32> to vector<8x64xf32>
    %378 = arith.addf %375, %377 : vector<8x64xf32>
    %cst_136 = arith.constant 0.000000e+00 : f32
    %379 = vector.broadcast %cst_136 : f32 to vector<8x64xf32>
    %380 = arith.maximumf %378, %379 : vector<8x64xf32>
    %381 = arith.truncf %380 : vector<8x64xf32> to vector<8x64xbf16>
    %c1_137 = arith.constant 1 : index
    %c0_138 = arith.constant 0 : index
    %c0_139 = arith.constant 0 : index
    %382 = vector.load %arg19[%c1_137, %c0_138, %c0_139] : memref<2x64x16xbf16, #tpu.memory_space<vmem>>, vector<1x64x16xbf16>
    %383 = vector.shape_cast %382 : vector<1x64x16xbf16> to vector<64x16xbf16>
    %cst_140 = arith.constant dense<0.000000e+00> : vector<8x16xf32>
    %384 = tpu.matmul %381, %383, %cst_140 {dimension_numbers = #tpu.dot_dimension_numbers<[1], [0], [0], [1], [0, 0, 1, 1], [], []>} : vector<8x64xbf16>, vector<64x16xbf16>, vector<8x16xf32> -> vector<8x16xf32>
    %385 = arith.addf %384, %352 : vector<8x16xf32>
    %c0_141 = arith.constant 0 : index
    %c0_142 = arith.constant 0 : index
    %386 = vector.load %arg16[%c0_141, %c0_142] : memref<16x8xbf16, #tpu.memory_space<vmem>>, vector<16x8xbf16>
    %387 = arith.truncf %385 : vector<8x16xf32> to vector<8x16xbf16>
    %cst_143 = arith.constant dense<0.000000e+00> : vector<16x16xf32>
    %388 = tpu.matmul %386, %387, %cst_143 {dimension_numbers = #tpu.dot_dimension_numbers<[1], [0], [0], [1], [0, 0, 1, 1], [], []>} : vector<16x8xbf16>, vector<8x16xbf16>, vector<16x16xf32> -> vector<16x16xf32>
    %389 = arith.truncf %388 : vector<16x16xf32> to vector<16x16xbf16>
    %c0_144 = arith.constant 0 : index
    %c0_145 = arith.constant 0 : index
    %390 = vector.load %arg14[%c0_144, %c0_145] : memref<16x32xbf16, #tpu.memory_space<vmem>>, vector<16x32xbf16>
    %cst_146 = arith.constant dense<0.000000e+00> : vector<16x32xf32>
    %391 = tpu.matmul %389, %390, %cst_146 {dimension_numbers = #tpu.dot_dimension_numbers<[1], [0], [0], [1], [0, 0, 1, 1], [], []>} : vector<16x16xbf16>, vector<16x32xbf16>, vector<16x32xf32> -> vector<16x32xf32>
    %c2_147 = arith.constant 2 : index
    %c0_148 = arith.constant 0 : index
    %392 = vector.load %arg13[%c2_147, %c0_148] : memref<4x32xf32, #tpu.memory_space<vmem>>, vector<1x32xf32>
    %c3_149 = arith.constant 3 : index
    %c0_150 = arith.constant 0 : index
    %393 = vector.load %arg13[%c3_149, %c0_150] : memref<4x32xf32, #tpu.memory_space<vmem>>, vector<1x32xf32>
    %394 = vector.broadcast %392 : vector<1x32xf32> to vector<16x32xf32>
    %395 = arith.mulf %391, %394 : vector<16x32xf32>
    %396 = vector.broadcast %393 : vector<1x32xf32> to vector<16x32xf32>
    %397 = arith.addf %395, %396 : vector<16x32xf32>
    %cst_151 = arith.constant 0.000000e+00 : f32
    %398 = vector.broadcast %cst_151 : f32 to vector<16x32xf32>
    %399 = arith.maximumf %397, %398 : vector<16x32xf32>
    %400 = vector.extract_strided_slice %399 {offsets = [15, 0], sizes = [1, 32], strides = [1, 1]} : vector<16x32xf32> to vector<1x32xf32>
    %401 = vector.extract_strided_slice %399 {offsets = [0, 0], sizes = [15, 32], strides = [1, 1]} : vector<16x32xf32> to vector<15x32xf32>
    %402 = tpu.concatenate %400, %401 in 0 : vector<1x32xf32>, vector<15x32xf32> -> vector<16x32xf32>
    %403 = vector.broadcast %45 : vector<16x1xf32> to vector<16x32xf32>
    %404 = arith.mulf %402, %403 : vector<16x32xf32>
    %405 = vector.extract_strided_slice %399 {offsets = [1, 0], sizes = [15, 32], strides = [1, 1]} : vector<16x32xf32> to vector<15x32xf32>
    %406 = vector.extract_strided_slice %399 {offsets = [0, 0], sizes = [1, 32], strides = [1, 1]} : vector<16x32xf32> to vector<1x32xf32>
    %407 = tpu.concatenate %405, %406 in 0 : vector<15x32xf32>, vector<1x32xf32> -> vector<16x32xf32>
    %408 = vector.broadcast %49 : vector<16x1xf32> to vector<16x32xf32>
    %409 = arith.mulf %407, %408 : vector<16x32xf32>
    %410 = tpu.concatenate %404, %399, %409 in 1 : vector<16x32xf32>, vector<16x32xf32>, vector<16x32xf32> -> vector<16x96xf32>
    %411 = arith.truncf %410 : vector<16x96xf32> to vector<16x96xbf16>
    %c1_152 = arith.constant 1 : index
    %c0_153 = arith.constant 0 : index
    %c0_154 = arith.constant 0 : index
    %412 = vector.load %arg3[%c1_152, %c0_153, %c0_154] : memref<2x96x128xbf16, #tpu.memory_space<vmem>>, vector<1x96x128xbf16>
    %413 = vector.shape_cast %412 : vector<1x96x128xbf16> to vector<96x128xbf16>
    %cst_155 = arith.constant dense<0.000000e+00> : vector<16x128xf32>
    %414 = tpu.matmul %411, %413, %cst_155 {dimension_numbers = #tpu.dot_dimension_numbers<[1], [0], [0], [1], [0, 0, 1, 1], [], []>} : vector<16x96xbf16>, vector<96x128xbf16>, vector<16x128xf32> -> vector<16x128xf32>
    %c1_156 = arith.constant 1 : index
    %c0_157 = arith.constant 0 : index
    %415 = vector.load %arg6[%c1_156, %c0_157] : memref<2x128xf32, #tpu.memory_space<vmem>>, vector<1x128xf32>
    %416 = vector.broadcast %415 : vector<1x128xf32> to vector<16x128xf32>
    %417 = arith.addf %414, %416 : vector<16x128xf32>
    %cst_158 = arith.constant 0.000000e+00 : f32
    %418 = vector.broadcast %cst_158 : f32 to vector<16x128xf32>
    %419 = arith.maximumf %417, %418 : vector<16x128xf32>
    %420 = arith.truncf %419 : vector<16x128xf32> to vector<16x128xbf16>
    %c1_159 = arith.constant 1 : index
    %c0_160 = arith.constant 0 : index
    %c0_161 = arith.constant 0 : index
    %421 = vector.load %arg20[%c1_159, %c0_160, %c0_161] : memref<2x128x32xbf16, #tpu.memory_space<vmem>>, vector<1x128x32xbf16>
    %422 = vector.shape_cast %421 : vector<1x128x32xbf16> to vector<128x32xbf16>
    %cst_162 = arith.constant dense<0.000000e+00> : vector<16x32xf32>
    %423 = tpu.matmul %420, %422, %cst_162 {dimension_numbers = #tpu.dot_dimension_numbers<[1], [0], [0], [1], [0, 0, 1, 1], [], []>} : vector<16x128xbf16>, vector<128x32xbf16>, vector<16x32xf32> -> vector<16x32xf32>
    %424 = arith.addf %423, %391 : vector<16x32xf32>
    %c0_163 = arith.constant 0 : index
    %c0_164 = arith.constant 0 : index
    %425 = vector.load %arg17[%c0_163, %c0_164] : memref<32x16xbf16, #tpu.memory_space<vmem>>, vector<32x16xbf16>
    %426 = arith.truncf %424 : vector<16x32xf32> to vector<16x32xbf16>
    %cst_165 = arith.constant dense<0.000000e+00> : vector<32x32xf32>
    %427 = tpu.matmul %425, %426, %cst_165 {dimension_numbers = #tpu.dot_dimension_numbers<[1], [0], [0], [1], [0, 0, 1, 1], [], []>} : vector<32x16xbf16>, vector<16x32xbf16>, vector<32x32xf32> -> vector<32x32xf32>
    %428 = arith.truncf %427 : vector<32x32xf32> to vector<32x32xbf16>
    %c0_166 = arith.constant 0 : index
    %c0_167 = arith.constant 0 : index
    %429 = vector.load %arg15[%c0_166, %c0_167] : memref<32x64xbf16, #tpu.memory_space<vmem>>, vector<32x64xbf16>
    %cst_168 = arith.constant dense<0.000000e+00> : vector<32x64xf32>
    %430 = tpu.matmul %428, %429, %cst_168 {dimension_numbers = #tpu.dot_dimension_numbers<[1], [0], [0], [1], [0, 0, 1, 1], [], []>} : vector<32x32xbf16>, vector<32x64xbf16>, vector<32x64xf32> -> vector<32x64xf32>
    %c6 = arith.constant 6 : index
    %c0_169 = arith.constant 0 : index
    %431 = vector.load %arg11[%c6, %c0_169] : memref<8x64xf32, #tpu.memory_space<vmem>>, vector<1x64xf32>
    %c7 = arith.constant 7 : index
    %c0_170 = arith.constant 0 : index
    %432 = vector.load %arg11[%c7, %c0_170] : memref<8x64xf32, #tpu.memory_space<vmem>>, vector<1x64xf32>
    %433 = vector.broadcast %431 : vector<1x64xf32> to vector<32x64xf32>
    %434 = arith.mulf %430, %433 : vector<32x64xf32>
    %435 = vector.broadcast %432 : vector<1x64xf32> to vector<32x64xf32>
    %436 = arith.addf %434, %435 : vector<32x64xf32>
    %cst_171 = arith.constant 0.000000e+00 : f32
    %437 = vector.broadcast %cst_171 : f32 to vector<32x64xf32>
    %438 = arith.maximumf %436, %437 : vector<32x64xf32>
    %439 = vector.extract_strided_slice %438 {offsets = [31, 0], sizes = [1, 64], strides = [1, 1]} : vector<32x64xf32> to vector<1x64xf32>
    %440 = vector.extract_strided_slice %438 {offsets = [0, 0], sizes = [31, 64], strides = [1, 1]} : vector<32x64xf32> to vector<31x64xf32>
    %441 = tpu.concatenate %439, %440 in 0 : vector<1x64xf32>, vector<31x64xf32> -> vector<32x64xf32>
    %442 = vector.broadcast %70 : vector<32x1xf32> to vector<32x64xf32>
    %443 = arith.mulf %441, %442 : vector<32x64xf32>
    %444 = vector.extract_strided_slice %438 {offsets = [1, 0], sizes = [31, 64], strides = [1, 1]} : vector<32x64xf32> to vector<31x64xf32>
    %445 = vector.extract_strided_slice %438 {offsets = [0, 0], sizes = [1, 64], strides = [1, 1]} : vector<32x64xf32> to vector<1x64xf32>
    %446 = tpu.concatenate %444, %445 in 0 : vector<31x64xf32>, vector<1x64xf32> -> vector<32x64xf32>
    %447 = vector.broadcast %74 : vector<32x1xf32> to vector<32x64xf32>
    %448 = arith.mulf %446, %447 : vector<32x64xf32>
    %449 = tpu.concatenate %443, %438, %448 in 1 : vector<32x64xf32>, vector<32x64xf32>, vector<32x64xf32> -> vector<32x192xf32>
    %450 = arith.truncf %449 : vector<32x192xf32> to vector<32x192xbf16>
    %c3_172 = arith.constant 3 : index
    %c0_173 = arith.constant 0 : index
    %c0_174 = arith.constant 0 : index
    %451 = vector.load %arg1[%c3_172, %c0_173, %c0_174] : memref<4x192x256xbf16, #tpu.memory_space<vmem>>, vector<1x192x256xbf16>
    %452 = vector.shape_cast %451 : vector<1x192x256xbf16> to vector<192x256xbf16>
    %cst_175 = arith.constant dense<0.000000e+00> : vector<32x256xf32>
    %453 = tpu.matmul %450, %452, %cst_175 {dimension_numbers = #tpu.dot_dimension_numbers<[1], [0], [0], [1], [0, 0, 1, 1], [], []>} : vector<32x192xbf16>, vector<192x256xbf16>, vector<32x256xf32> -> vector<32x256xf32>
    %c3_176 = arith.constant 3 : index
    %c0_177 = arith.constant 0 : index
    %454 = vector.load %arg4[%c3_176, %c0_177] : memref<4x256xf32, #tpu.memory_space<vmem>>, vector<1x256xf32>
    %455 = vector.broadcast %454 : vector<1x256xf32> to vector<32x256xf32>
    %456 = arith.addf %453, %455 : vector<32x256xf32>
    %cst_178 = arith.constant 0.000000e+00 : f32
    %457 = vector.broadcast %cst_178 : f32 to vector<32x256xf32>
    %458 = arith.maximumf %456, %457 : vector<32x256xf32>
    %459 = arith.truncf %458 : vector<32x256xf32> to vector<32x256xbf16>
    %c3_179 = arith.constant 3 : index
    %c0_180 = arith.constant 0 : index
    %c0_181 = arith.constant 0 : index
    %460 = vector.load %arg18[%c3_179, %c0_180, %c0_181] : memref<4x256x64xbf16, #tpu.memory_space<vmem>>, vector<1x256x64xbf16>
    %461 = vector.shape_cast %460 : vector<1x256x64xbf16> to vector<256x64xbf16>
    %cst_182 = arith.constant dense<0.000000e+00> : vector<32x64xf32>
    %462 = tpu.matmul %459, %461, %cst_182 {dimension_numbers = #tpu.dot_dimension_numbers<[1], [0], [0], [1], [0, 0, 1, 1], [], []>} : vector<32x256xbf16>, vector<256x64xbf16>, vector<32x64xf32> -> vector<32x64xf32>
    %463 = arith.addf %462, %430 : vector<32x64xf32>
    %cst_183 = arith.constant 0.000000e+00 : f32
    %464 = vector.broadcast %cst_183 : f32 to vector<32x64xf32>
    %465 = arith.subf %464, %463 : vector<32x64xf32>
    %466 = math.exp %465 : vector<32x64xf32>
    %cst_184 = arith.constant 1.000000e+00 : f32
    %467 = vector.broadcast %cst_184 : f32 to vector<32x64xf32>
    %468 = arith.addf %467, %466 : vector<32x64xf32>
    %469 = tpu.reciprocal %468 {approx = true} : vector<32x64xf32> -> vector<32x64xf32>
    %cst_185 = arith.constant 1.000000e+00 : f32
    %470 = vector.broadcast %cst_185 : f32 to vector<32x64xf32>
    %471 = arith.addf %470, %469 : vector<32x64xf32>
    %472 = arith.mulf %199, %471 : vector<32x64xf32>
    %473 = arith.addf %472, %232 : vector<32x64xf32>
    %c0_186 = arith.constant 0 : index
    %c0_187 = arith.constant 0 : index
    %474 = vector.load %arg21[%c0_186, %c0_187] : memref<32x64xf32, #tpu.memory_space<vmem>>, vector<32x64xf32>
    tpu.vector_store %arg21[%c0_186, %c0_187], %473 {strides = array<i32>} : memref<32x64xf32, #tpu.memory_space<vmem>>, vector<32x64xf32>,
    return
  }
}

</mosaic_0001>

<llo_original>
// kernel: _lambda_.1
$region0: #{_lambda_.1}
  #allocation0 [shape = 'u32[]', space=smem, size = 0x4, offset = 0x4, fixed_abs, tag = 'smem constant byte address 0x4 - core index']
  #allocation1 [shape = 'u32[144,128]{1,0:T(1,128)}', space=vmem, size = 0x12000, scoped, tag = 'internal scratch']
  %s0 = inlined_call_operand.vmem [shape: f32[32,64], index: 0, kind: input, shape index: {}]
  %s1 = inlined_call_operand.vmem [shape: bf16[4,192,256], index: 1, kind: input, shape index: {}]
  %s2 = inlined_call_operand.vmem [shape: bf16[2,48,64], index: 2, kind: input, shape index: {}]
  %s3 = inlined_call_operand.vmem [shape: bf16[2,96,128], index: 3, kind: input, shape index: {}]
  %s4 = inlined_call_operand.vmem [shape: f32[4,256], index: 4, kind: input, shape index: {}]
  %s5 = inlined_call_operand.vmem [shape: f32[2,64], index: 5, kind: input, shape index: {}]
  %s6 = inlined_call_operand.vmem [shape: f32[2,128], index: 6, kind: input, shape index: {}]
  %s7 = inlined_call_operand.vmem [shape: bf16[64,96], index: 7, kind: input, shape index: {}]
  %s8 = inlined_call_operand.vmem [shape: bf16[32,48], index: 8, kind: input, shape index: {}]
  %s9 = inlined_call_operand.vmem [shape: bf16[48,32], index: 9, kind: input, shape index: {}]
  %s10 = inlined_call_operand.vmem [shape: bf16[24,16], index: 10, kind: input, shape index: {}]
  %s11 = inlined_call_operand.vmem [shape: f32[8,64], index: 11, kind: input, shape index: {}]
  %s12 = inlined_call_operand.vmem [shape: f32[4,16], index: 12, kind: input, shape index: {}]
  %s13 = inlined_call_operand.vmem [shape: f32[4,32], index: 13, kind: input, shape index: {}]
  %s14 = inlined_call_operand.vmem [shape: bf16[16,32], index: 14, kind: input, shape index: {}]
  %s15 = inlined_call_operand.vmem [shape: bf16[32,64], index: 15, kind: input, shape index: {}]
  %s16 = inlined_call_operand.vmem [shape: bf16[16,8], index: 16, kind: input, shape index: {}]
  %s17 = inlined_call_operand.vmem [shape: bf16[32,16], index: 17, kind: input, shape index: {}]
  %s18 = inlined_call_operand.vmem [shape: bf16[4,256,64], index: 18, kind: input, shape index: {}]
  %s19 = inlined_call_operand.vmem [shape: bf16[2,64,16], index: 19, kind: input, shape index: {}]
  %s20 = inlined_call_operand.vmem [shape: bf16[2,128,32], index: 20, kind: input, shape index: {}]
  %s21 = inlined_call_operand.vmem [shape: f32[32,64], index: 21, kind: output, shape index: {}]
  %s22 = sld [smem:[#allocation0]]
  $region94: #{_lambda_.1} parent=0
    _
  %s24 = ssub.s32 1, %s22
  %s25 = scalar_select 0, %s24, %s22
  // Predicated region
  $region2: #{_lambda_.1} parent=0 // pred_check
    _
  $region3: #{_lambda_.1} parent=0 // pred_check_branch
    %27 = sbr.rel (0) target = $region5
  $region4: #{_lambda_.1} parent=0 // pred_region
    _
  $region5: #{_lambda_.1} parent=0 // pred_fallthru
    _
  // Predicated region
  $region6: #{_lambda_.1} parent=0 // pred_check
    _
  $region7: #{_lambda_.1} parent=0 // pred_check_branch
    %29 = sbr.rel (0) target = $region9
  $region8: #{_lambda_.1} parent=0 // pred_region
    _
  $region9: #{_lambda_.1} parent=0 // pred_fallthru
    _
  // Predicated region
  $region10: #{_lambda_.1} parent=0 // pred_check
    _
  $region11: #{_lambda_.1} parent=0 // pred_check_branch
    %31 = sbr.rel (0) target = $region13
  $region12: #{_lambda_.1} parent=0 // pred_region
    _
  $region13: #{_lambda_.1} parent=0 // pred_fallthru
    _
  // Predicated region
  $region14: #{_lambda_.1} parent=0 // pred_check
    _
  $region15: #{_lambda_.1} parent=0 // pred_check_branch
    %33 = sbr.rel (0) target = $region17
  $region16: #{_lambda_.1} parent=0 // pred_region
    _
  $region17: #{_lambda_.1} parent=0 // pred_fallthru
    _
  // Predicated region
  $region18: #{_lambda_.1} parent=0 // pred_check
    _
  $region19: #{_lambda_.1} parent=0 // pred_check_branch
    %35 = sbr.rel (0) target = $region21
  $region20: #{_lambda_.1} parent=0 // pred_region
    _
  $region21: #{_lambda_.1} parent=0 // pred_fallthru
    _
  // Predicated region
  $region22: #{_lambda_.1} parent=0 // pred_check
    _
  $region23: #{_lambda_.1} parent=0 // pred_check_branch
    %37 = sbr.rel (0) target = $region25
  $region24: #{_lambda_.1} parent=0 // pred_region
    _
  $region25: #{_lambda_.1} parent=0 // pred_fallthru
    _
  // Predicated region
  $region26: #{_lambda_.1} parent=0 // pred_check
    _
  $region27: #{_lambda_.1} parent=0 // pred_check_branch
    %39 = sbr.rel (0) target = $region29
  $region28: #{_lambda_.1} parent=0 // pred_region
    _
  $region29: #{_lambda_.1} parent=0 // pred_fallthru
    _
  // Predicated region
  $region30: #{_lambda_.1} parent=0 // pred_check
    _
  $region31: #{_lambda_.1} parent=0 // pred_check_branch
    %41 = sbr.rel (0) target = $region33
  $region32: #{_lambda_.1} parent=0 // pred_region
    _
  $region33: #{_lambda_.1} parent=0 // pred_fallthru
    _
  // Predicated region
  $region34: #{_lambda_.1} parent=0 // pred_check
    _
  $region35: #{_lambda_.1} parent=0 // pred_check_branch
    %43 = sbr.rel (0) target = $region37
  $region36: #{_lambda_.1} parent=0 // pred_region
    _
  $region37: #{_lambda_.1} parent=0 // pred_fallthru
    _
  // Predicated region
  $region38: #{_lambda_.1} parent=0 // pred_check
    _
  $region39: #{_lambda_.1} parent=0 // pred_check_branch
    %45 = sbr.rel (0) target = $region41
  $region40: #{_lambda_.1} parent=0 // pred_region
    _
  $region41: #{_lambda_.1} parent=0 // pred_fallthru
    _
  // Predicated region
  $region42: #{_lambda_.1} parent=0 // pred_check
    _
  $region43: #{_lambda_.1} parent=0 // pred_check_branch
    %47 = sbr.rel (0) target = $region45
  $region44: #{_lambda_.1} parent=0 // pred_region
    _
  $region45: #{_lambda_.1} parent=0 // pred_fallthru
    _
  // Predicated region
  $region46: #{_lambda_.1} parent=0 // pred_check
    _
  $region47: #{_lambda_.1} parent=0 // pred_check_branch
    %49 = sbr.rel (0) target = $region49
  $region48: #{_lambda_.1} parent=0 // pred_region
    _
  $region49: #{_lambda_.1} parent=0 // pred_fallthru
    _
  // Predicated region
  $region50: #{_lambda_.1} parent=0 // pred_check
    _
  $region51: #{_lambda_.1} parent=0 // pred_check_branch
    %51 = sbr.rel (0) target = $region53
  $region52: #{_lambda_.1} parent=0 // pred_region
    _
  $region53: #{_lambda_.1} parent=0 // pred_fallthru
    _
  // Predicated region
  $region54: #{_lambda_.1} parent=0 // pred_check
    _
  $region55: #{_lambda_.1} parent=0 // pred_check_branch
    %53 = sbr.rel (0) target = $region57
  $region56: #{_lambda_.1} parent=0 // pred_region
    _
  $region57: #{_lambda_.1} parent=0 // pred_fallthru
    _
  // Predicated region
  $region58: #{_lambda_.1} parent=0 // pred_check
    _
  $region59: #{_lambda_.1} parent=0 // pred_check_branch
    %55 = sbr.rel (0) target = $region61
  $region60: #{_lambda_.1} parent=0 // pred_region
    _
  $region61: #{_lambda_.1} parent=0 // pred_fallthru
    _
  // Predicated region
  $region62: #{_lambda_.1} parent=0 // pred_check
    _
  $region63: #{_lambda_.1} parent=0 // pred_check_branch
    %57 = sbr.rel (0) target = $region65
  $region64: #{_lambda_.1} parent=0 // pred_region
    _
  $region65: #{_lambda_.1} parent=0 // pred_fallthru
    _
  // Predicated region
  $region66: #{_lambda_.1} parent=0 // pred_check
    _
  $region67: #{_lambda_.1} parent=0 // pred_check_branch
    %59 = sbr.rel (0) target = $region69
  $region68: #{_lambda_.1} parent=0 // pred_region
    _
  $region69: #{_lambda_.1} parent=0 // pred_fallthru
    _
  // Predicated region
  $region70: #{_lambda_.1} parent=0 // pred_check
    _
  $region71: #{_lambda_.1} parent=0 // pred_check_branch
    %61 = sbr.rel (0) target = $region73
  $region72: #{_lambda_.1} parent=0 // pred_region
    _
  $region73: #{_lambda_.1} parent=0 // pred_fallthru
    _
  // Predicated region
  $region74: #{_lambda_.1} parent=0 // pred_check
    _
  $region75: #{_lambda_.1} parent=0 // pred_check_branch
    %63 = sbr.rel (0) target = $region77
  $region76: #{_lambda_.1} parent=0 // pred_region
    _
  $region77: #{_lambda_.1} parent=0 // pred_fallthru
    _
  // Predicated region
  $region78: #{_lambda_.1} parent=0 // pred_check
    _
  $region79: #{_lambda_.1} parent=0 // pred_check_branch
    %65 = sbr.rel (0) target = $region81
  $region80: #{_lambda_.1} parent=0 // pred_region
    _
  $region81: #{_lambda_.1} parent=0 // pred_fallthru
    _
  // Predicated region
  $region82: #{_lambda_.1} parent=0 // pred_check
    _
  $region83: #{_lambda_.1} parent=0 // pred_check_branch
    %67 = sbr.rel (0) target = $region85
  $region84: #{_lambda_.1} parent=0 // pred_region
    _
  $region85: #{_lambda_.1} parent=0 // pred_fallthru
    _
  %v69 = vlaneseq
  %v70 = vshrl.u32 %v69, 7
  %vm71 = vcmp.lt.s32.totalorder %v70, 0
  %v72 = vsub.s32 0, %v70
  %v73 = vsel %vm71, %v72, %v70
  %v74 = vshrl.u32 %v73, 2
  %v75 = vand.u32 %v73, 3
  %v76 = vsub.s32 0, %v75
  %v77 = vsel %vm71, %v76, %v75
  %vm78 = vcmp.ne.s32.totalorder %v77, 0
  %vm79 = vcmp.lt.s32.totalorder %v77, 0
  %vm80 = vmand %vm79, %vm78
  %v81 = vadd.s32 %v77, 4
  %v82 = vsel %vm80, %v81, %v77
  %vm83 = vcmp.ne.s32.totalorder %v82, 0
  %v84 = vsel %vm83, 1, 0
  %v85 = vcvt.s32.f32 %v84
  %vm86 = vcmp.ne.s32.totalorder %v82, 3
  %v87 = vsel %vm86, 1, 0
  %v88 = vcvt.s32.f32 %v87
  %v89 = vadd.s32 %v70, 8
  %vm90 = vcmp.lt.s32.totalorder %v70, 0
  %v91 = vsub.s32 0, %v70
  %v92 = vsel %vm90, %v91, %v70
  %v93 = vshrl.u32 %v92, 3
  %v94 = vand.u32 %v92, 7
  %v95 = vsub.s32 0, %v94
  %v96 = vsel %vm90, %v95, %v94
  %vm97 = vcmp.lt.s32.totalorder %v89, 0
  %v98 = vsub.s32 0, %v89
  %v99 = vsel %vm97, %v98, %v89
  %v100 = vshrl.u32 %v99, 3
  %v101 = vand.u32 %v99, 7
  %v102 = vsub.s32 0, %v101
  %v103 = vsel %vm97, %v102, %v101
  %vm104 = vcmp.ne.s32.totalorder %v96, 0
  %vm105 = vcmp.ne.s32.totalorder %v103, 0
  %vm106 = vcmp.lt.s32.totalorder %v96, 0
  %vm107 = vcmp.lt.s32.totalorder %v103, 0
  %vm108 = vmand %vm106, %vm104
  %vm109 = vmand %vm107, %vm105
  %v110 = vadd.s32 %v96, 8
  %v111 = vadd.s32 %v103, 8
  %v112 = vsel %vm108, %v110, %v96
  %v113 = vsel %vm109, %v111, %v103
  %vm114 = vcmp.ne.s32.totalorder %v112, 0
  %vm115 = vcmp.ne.s32.totalorder %v113, 0
  %v116 = vsel %vm114, 1, 0
  %v117 = vsel %vm115, 1, 0
  %v118 = vcvt.s32.f32 %v116
  %v119 = vcvt.s32.f32 %v117
  %vm120 = vcmp.ne.s32.totalorder %v112, 7
  %vm121 = vcmp.ne.s32.totalorder %v113, 7
  %v122 = vsel %vm120, 1, 0
  %v123 = vsel %vm121, 1, 0
  %v124 = vcvt.s32.f32 %v122
  %v125 = vcvt.s32.f32 %v123
  %v126 = vadd.s32 %v70, 16
  %v127 = vadd.s32 %v70, 24
  %vm128 = vcmp.lt.s32.totalorder %v70, 0
  %v129 = vsub.s32 0, %v70
  %v130 = vsel %vm128, %v129, %v70
  %v131 = vshrl.u32 %v130, 4
  %v132 = vand.u32 %v130, 15
  %v133 = vsub.s32 0, %v132
  %v134 = vsel %vm128, %v133, %v132
  %vm135 = vcmp.lt.s32.totalorder %v89, 0
  %v136 = vsub.s32 0, %v89
  %v137 = vsel %vm135, %v136, %v89
  %v138 = vshrl.u32 %v137, 4
  %v139 = vand.u32 %v137, 15
  %v140 = vsub.s32 0, %v139
  %v141 = vsel %vm135, %v140, %v139
  %vm142 = vcmp.lt.s32.totalorder %v126, 0
  %v143 = vsub.s32 0, %v126
  %v144 = vsel %vm142, %v143, %v126
  %v145 = vshrl.u32 %v144, 4
  %v146 = vand.u32 %v144, 15
  %v147 = vsub.s32 0, %v146
  %v148 = vsel %vm142, %v147, %v146
  %vm149 = vcmp.lt.s32.totalorder %v127, 0
  %v150 = vsub.s32 0, %v127
  %v151 = vsel %vm149, %v150, %v127
  %v152 = vshrl.u32 %v151, 4
  %v153 = vand.u32 %v151, 15
  %v154 = vsub.s32 0, %v153
  %v155 = vsel %vm149, %v154, %v153
  %vm156 = vcmp.ne.s32.totalorder %v134, 0
  %vm157 = vcmp.ne.s32.totalorder %v141, 0
  %vm158 = vcmp.ne.s32.totalorder %v148, 0
  %vm159 = vcmp.ne.s32.totalorder %v155, 0
  %vm160 = vcmp.lt.s32.totalorder %v134, 0
  %vm161 = vcmp.lt.s32.totalorder %v141, 0
  %vm162 = vcmp.lt.s32.totalorder %v148, 0
  %vm163 = vcmp.lt.s32.totalorder %v155, 0
  %vm164 = vmand %vm160, %vm156
  %vm165 = vmand %vm161, %vm157
  %vm166 = vmand %vm162, %vm158
  %vm167 = vmand %vm163, %vm159
  %v168 = vadd.s32 %v134, 16
  %v169 = vadd.s32 %v141, 16
  %v170 = vadd.s32 %v148, 16
  %v171 = vadd.s32 %v155, 16
  %v172 = vsel %vm164, %v168, %v134
  %v173 = vsel %vm165, %v169, %v141
  %v174 = vsel %vm166, %v170, %v148
  %v175 = vsel %vm167, %v171, %v155
  %vm176 = vcmp.ne.s32.totalorder %v172, 0
  %vm177 = vcmp.ne.s32.totalorder %v173, 0
  %vm178 = vcmp.ne.s32.totalorder %v174, 0
  %vm179 = vcmp.ne.s32.totalorder %v175, 0
  %v180 = vsel %vm176, 1, 0
  %v181 = vsel %vm177, 1, 0
  %v182 = vsel %vm178, 1, 0
  %v183 = vsel %vm179, 1, 0
  %v184 = vcvt.s32.f32 %v180
  %v185 = vcvt.s32.f32 %v181
  %v186 = vcvt.s32.f32 %v182
  %v187 = vcvt.s32.f32 %v183
  %vm188 = vcmp.ne.s32.totalorder %v172, 15
  %vm189 = vcmp.ne.s32.totalorder %v173, 15
  %vm190 = vcmp.ne.s32.totalorder %v174, 15
  %vm191 = vcmp.ne.s32.totalorder %v175, 15
  %v192 = vsel %vm188, 1, 0
  %v193 = vsel %vm189, 1, 0
  %v194 = vsel %vm190, 1, 0
  %v195 = vsel %vm191, 1, 0
  %v196 = vcvt.s32.f32 %v192
  %v197 = vcvt.s32.f32 %v193
  %v198 = vcvt.s32.f32 %v194
  %v199 = vcvt.s32.f32 %v195
  %v200 = vlaneseq
  %v201 = vand.u32 %v200, 127
  %vm202 = vcmp.lt.s32.totalorder %v70, 8
  %vm203 = vcmp.lt.s32.totalorder %v89, 8
  %vm204 = vcmp.lt.s32.totalorder %v126, 8
  %vm205 = vcmp.lt.s32.totalorder %v89, 0
  %v206 = vsub.s32 0, %v89
  %v207 = vsel %vm205, %v206, %v89
  %v208 = vshrl.u32 %v207, 2
  %v209 = vand.u32 %v207, 3
  %v210 = vsub.s32 0, %v209
  %v211 = vsel %vm205, %v210, %v209
  %vm212 = vcmp.lt.s32.totalorder %v126, 0
  %v213 = vsub.s32 0, %v126
  %v214 = vsel %vm212, %v213, %v126
  %v215 = vshrl.u32 %v214, 2
  %v216 = vand.u32 %v214, 3
  %v217 = vsub.s32 0, %v216
  %v218 = vsel %vm212, %v217, %v216
  %vm219 = vcmp.ne.s32.totalorder %v211, 0
  %vm220 = vcmp.ne.s32.totalorder %v218, 0
  %vm221 = vcmp.lt.s32.totalorder %v211, 0
  %vm222 = vcmp.lt.s32.totalorder %v218, 0
  %vm223 = vmand %vm221, %vm219
  %vm224 = vmand %vm222, %vm220
  %v225 = vadd.s32 %v211, 4
  %v226 = vadd.s32 %v218, 4
  %v227 = vsel %vm223, %v225, %v211
  %v228 = vsel %vm224, %v226, %v218
  %vm229 = vcmp.eq.s32.totalorder %v82, 0
  %vm230 = vcmp.eq.s32.totalorder %v227, 0
  %vm231 = vcmp.eq.s32.totalorder %v228, 0
  %vm232 = vmand %vm202, %vm229
  %vm233 = vmand %vm203, %vm230
  %vm234 = vmand %vm204, %vm231
  %vm235 = vcmp.lt.s32.totalorder %v201, 4
  %vm236 = vmor %vm232, %vm235
  %vm237 = vmor %vm233, %vm235
  %vm238 = vmor %vm234, %vm235
  %v239 = vsel %vm236, -1e+30, 0.0
  %v240 = vsel %vm237, -1e+30, 0.0
  %v241 = vsel %vm238, -1e+30, 0.0
  %v242 = vadd.s32 %v70, 32
  %v243 = vadd.s32 %v70, 40
  %vm244 = vcmp.lt.s32.totalorder %v70, 16
  %vm245 = vcmp.lt.s32.totalorder %v89, 16
  %vm246 = vcmp.lt.s32.totalorder %v126, 16
  %vm247 = vcmp.lt.s32.totalorder %v127, 16
  %vm248 = vcmp.lt.s32.totalorder %v242, 16
  %vm249 = vcmp.lt.s32.totalorder %v243, 16
  %vm250 = vcmp.lt.s32.totalorder %v126, 0
  %v251 = vsub.s32 0, %v126
  %v252 = vsel %vm250, %v251, %v126
  %v253 = vshrl.u32 %v252, 3
  %v254 = vand.u32 %v252, 7
  %v255 = vsub.s32 0, %v254
  %v256 = vsel %vm250, %v255, %v254
  %vm257 = vcmp.lt.s32.totalorder %v127, 0
  %v258 = vsub.s32 0, %v127
  %v259 = vsel %vm257, %v258, %v127
  %v260 = vshrl.u32 %v259, 3
  %v261 = vand.u32 %v259, 7
  %v262 = vsub.s32 0, %v261
  %v263 = vsel %vm257, %v262, %v261
  %vm264 = vcmp.lt.s32.totalorder %v242, 0
  %v265 = vsub.s32 0, %v242
  %v266 = vsel %vm264, %v265, %v242
  %v267 = vshrl.u32 %v266, 3
  %v268 = vand.u32 %v266, 7
  %v269 = vsub.s32 0, %v268
  %v270 = vsel %vm264, %v269, %v268
  %vm271 = vcmp.lt.s32.totalorder %v243, 0
  %v272 = vsub.s32 0, %v243
  %v273 = vsel %vm271, %v272, %v243
  %v274 = vshrl.u32 %v273, 3
  %v275 = vand.u32 %v273, 7
  %v276 = vsub.s32 0, %v275
  %v277 = vsel %vm271, %v276, %v275
  %vm278 = vcmp.ne.s32.totalorder %v256, 0
  %vm279 = vcmp.ne.s32.totalorder %v263, 0
  %vm280 = vcmp.ne.s32.totalorder %v270, 0
  %vm281 = vcmp.ne.s32.totalorder %v277, 0
  %vm282 = vcmp.lt.s32.totalorder %v256, 0
  %vm283 = vcmp.lt.s32.totalorder %v263, 0
  %vm284 = vcmp.lt.s32.totalorder %v270, 0
  %vm285 = vcmp.lt.s32.totalorder %v277, 0
  %vm286 = vmand %vm282, %vm278
  %vm287 = vmand %vm283, %vm279
  %vm288 = vmand %vm284, %vm280
  %vm289 = vmand %vm285, %vm281
  %v290 = vadd.s32 %v256, 8
  %v291 = vadd.s32 %v263, 8
  %v292 = vadd.s32 %v270, 8
  %v293 = vadd.s32 %v277, 8
  %v294 = vsel %vm286, %v290, %v256
  %v295 = vsel %vm287, %v291, %v263
  %v296 = vsel %vm288, %v292, %v270
  %v297 = vsel %vm289, %v293, %v277
  %vm298 = vcmp.eq.s32.totalorder %v112, 0
  %vm299 = vcmp.eq.s32.totalorder %v113, 0
  %vm300 = vcmp.eq.s32.totalorder %v294, 0
  %vm301 = vcmp.eq.s32.totalorder %v295, 0
  %vm302 = vcmp.eq.s32.totalorder %v296, 0
  %vm303 = vcmp.eq.s32.totalorder %v297, 0
  %vm304 = vmand %vm244, %vm298
  %vm305 = vmand %vm245, %vm299
  %vm306 = vmand %vm246, %vm300
  %vm307 = vmand %vm247, %vm301
  %vm308 = vmand %vm248, %vm302
  %vm309 = vmand %vm249, %vm303
  %vm310 = vmor %vm304, %vm235
  %vm311 = vmor %vm305, %vm235
  %vm312 = vmor %vm306, %vm235
  %vm313 = vmor %vm307, %vm235
  %vm314 = vmor %vm308, %vm235
  %vm315 = vmor %vm309, %vm235
  %v316 = vsel %vm310, -1e+30, 0.0
  %v317 = vsel %vm311, -1e+30, 0.0
  %v318 = vsel %vm312, -1e+30, 0.0
  %v319 = vsel %vm313, -1e+30, 0.0
  %v320 = vsel %vm314, -1e+30, 0.0
  %v321 = vsel %vm315, -1e+30, 0.0
  %v322 = vld [vmem:[%s0] sm:$0xff]
  %v323 = vld [vmem:[%s0 + $0x8] sm:$0xff]
  %v324 = vld [vmem:[%s0 + $0x10] sm:$0xff]
  %v325 = vld [vmem:[%s0 + $0x18] sm:$0xff]
  %v326 = vld [vmem:[%s11] sm:$0x1]
  %v327 = vld [vmem:[%s11 + $0x1] sm:$0x1]
  %v328 = vlaneseq
  %v329 = vshrl.u32 %v328, 7
  %v330 = vsub.s32 0, %v329
  %v331 = vrot.slane %v326, %v330
  %v332 = vmul.f32 %v322, %v331
  %v333 = vmul.f32 %v323, %v331
  %v334 = vmul.f32 %v324, %v331
  %v335 = vmul.f32 %v325, %v331
  %v336 = vlaneseq
  %v337 = vshrl.u32 %v336, 7
  %v338 = vsub.s32 0, %v337
  %v339 = vrot.slane %v327, %v338
  %v340 = vadd.f32 %v332, %v339
  %v341 = vadd.f32 %v333, %v339
  %v342 = vadd.f32 %v334, %v339
  %v343 = vadd.f32 %v335, %v339
  %v344 = vmax.f32 %v340, 0.0
  %v345 = vmax.f32 %v341, 0.0
  %v346 = vmax.f32 %v342, 0.0
  %v347 = vmax.f32 %v343, 0.0
  %v349 = vrot.slane %v347, 7
  %vm354 = vcmask 1040384
  %v355 = vrot.slane %v344, 7
  %v356 = vrot.slane %v345, 7
  %v357 = vsel %vm354, %v355, %v356
  %v358 = vrot.slane %v346, 7
  %v359 = vsel %vm354, %v356, %v358
  %v360 = vsel %vm354, %v358, %v349
  %v365 = vsel %vm354, %v349, %v355
  %v366 = vmul.f32 %v365, %v184
  %v367 = vmul.f32 %v357, %v185
  %v368 = vmul.f32 %v359, %v186
  %v369 = vmul.f32 %v360, %v187
  %vm370 = vcmask 1046528
  %v371 = vrot.slane %v344, 1
  %v372 = vrot.slane %v345, 1
  %v373 = vsel %vm370, %v371, %v372
  %v374 = vrot.slane %v346, 1
  %v375 = vsel %vm370, %v372, %v374
  %v376 = vrot.slane %v347, 1
  %v377 = vsel %vm370, %v374, %v376
  %v383 = vsel %vm370, %v376, %v371
  %v384 = vmul.f32 %v373, %v196
  %v385 = vmul.f32 %v375, %v197
  %v386 = vmul.f32 %v377, %v198
  %v387 = vmul.f32 %v383, %v199
  %388 = vrot.lane.b32.xlu0 %v344, 64
  %v389 = vpop.permute.xlu0 %388
  %390 = vrot.lane.b32.xlu0 %v345, 64
  %v391 = vpop.permute.xlu0 %390
  %392 = vrot.lane.b32.xlu0 %v346, 64
  %v393 = vpop.permute.xlu0 %392
  %394 = vrot.lane.b32.xlu0 %v347, 64
  %v395 = vpop.permute.xlu0 %394
  %vm400 = vcmask 523264
  %v401 = vsel %vm400, %v366, %v389
  %v402 = vsel %vm400, %v367, %v391
  %v403 = vsel %vm400, %v368, %v393
  %v404 = vsel %vm400, %v369, %v395
  %v405 = vpack.c.bf16 %v402, %v401
  %v406 = vpack.c.bf16 %v385, %v384
  %v407 = vpack.c.bf16 %v404, %v403
  %v408 = vpack.c.bf16 %v387, %v386
  %v409 = vld [vmem:[%s1] sm:$0xff]
  %v410 = vld [vmem:[%s1 + $0x8] sm:$0xff]
  %v411 = vld [vmem:[%s1 + $0x10] sm:$0xff]
  %v412 = vld [vmem:[%s1 + $0x18] sm:$0xff]
  %v413 = vld [vmem:[%s1 + $0x20] sm:$0xff]
  %v414 = vld [vmem:[%s1 + $0x28] sm:$0xff]
  %v415 = vld [vmem:[%s1 + $0x30] sm:$0xff]
  %v416 = vld [vmem:[%s1 + $0x38] sm:$0xff]
  %v417 = vld [vmem:[%s1 + $0x40] sm:$0xff]
  %v418 = vld [vmem:[%s1 + $0x48] sm:$0xff]
  %v419 = vld [vmem:[%s1 + $0x50] sm:$0xff]
  %v420 = vld [vmem:[%s1 + $0x58] sm:$0xff]
  %v421 = vld [vmem:[%s1 + $0x60] sm:$0xff]
  %v422 = vld [vmem:[%s1 + $0x68] sm:$0xff]
  %v423 = vld [vmem:[%s1 + $0x70] sm:$0xff]
  %v424 = vld [vmem:[%s1 + $0x78] sm:$0xff]
  %v425 = vld [vmem:[%s1 + $0x80] sm:$0xff]
  %v426 = vld [vmem:[%s1 + $0x88] sm:$0xff]
  %v427 = vld [vmem:[%s1 + $0x90] sm:$0xff]
  %v428 = vld [vmem:[%s1 + $0x98] sm:$0xff]
  %v429 = vld [vmem:[%s1 + $0xa0] sm:$0xff]
  %v430 = vld [vmem:[%s1 + $0xa8] sm:$0xff]
  %v431 = vld [vmem:[%s1 + $0xb0] sm:$0xff]
  %v432 = vld [vmem:[%s1 + $0xb8] sm:$0xff]
  %v433 = vld [vmem:[%s4] ss:$4 sm:$0x3]
  %v435 = vlaneseq
  %v436 = vshrl.u32 %v435, 7
  %v437 = vsub.s32 0, %v436
  %v438 = vrot.slane %v433, %v437
  %v439 = vlaneseq
  %v440 = vshrl.u32 %v439, 7
  %v441 = vsub.s32 1, %v440
  %v442 = vrot.slane %v433, %v441
  %v469 = vunpack.c.l.b16 %v409
  %v470 = vunpack.c.h.b16 %v409
  %v471 = vunpack.c.l.b16 %v410
  %v472 = vunpack.c.h.b16 %v410
  %v473 = vunpack.c.l.b16 %v411
  %v474 = vunpack.c.h.b16 %v411
  %v475 = vunpack.c.l.b16 %v412
  %v476 = vunpack.c.h.b16 %v412
  %v477 = vunpack.c.l.b16 %v413
  %v478 = vunpack.c.h.b16 %v413
  %v479 = vunpack.c.l.b16 %v414
  %v480 = vunpack.c.h.b16 %v414
  %v481 = vunpack.c.l.b16 %v415
  %v482 = vunpack.c.h.b16 %v415
  %v483 = vunpack.c.l.b16 %v416
  %v484 = vunpack.c.h.b16 %v416
  %v485 = vunpack.c.l.b16 %v417
  %v486 = vunpack.c.h.b16 %v417
  %v487 = vunpack.c.l.b16 %v418
  %v488 = vunpack.c.h.b16 %v418
  %v489 = vunpack.c.l.b16 %v419
  %v490 = vunpack.c.h.b16 %v419
  %v491 = vunpack.c.l.b16 %v420
  %v492 = vunpack.c.h.b16 %v420
  %v493 = vunpack.c.l.b16 %v421
  %v494 = vunpack.c.h.b16 %v421
  %v495 = vunpack.c.l.b16 %v422
  %v496 = vunpack.c.h.b16 %v422
  %v497 = vunpack.c.l.b16 %v423
  %v498 = vunpack.c.h.b16 %v423
  %v499 = vunpack.c.l.b16 %v424
  %v500 = vunpack.c.h.b16 %v424
  %v501 = vunpack.c.l.b16 %v425
  %v502 = vunpack.c.h.b16 %v425
  %v503 = vunpack.c.l.b16 %v426
  %v504 = vunpack.c.h.b16 %v426
  %v505 = vunpack.c.l.b16 %v427
  %v506 = vunpack.c.h.b16 %v427
  %v507 = vunpack.c.l.b16 %v428
  %v508 = vunpack.c.h.b16 %v428
  %v509 = vunpack.c.l.b16 %v429
  %v510 = vunpack.c.h.b16 %v429
  %v511 = vunpack.c.l.b16 %v430
  %v512 = vunpack.c.h.b16 %v430
  %v513 = vunpack.c.l.b16 %v431
  %v514 = vunpack.c.h.b16 %v431
  %v515 = vunpack.c.l.b16 %v432
  %v516 = vunpack.c.h.b16 %v432
  %v517 = vpack.c.b16 %v471, %v469
  %v518 = vpack.c.b16 %v472, %v470
  %v519 = vpack.c.b16 %v475, %v473
  %v520 = vpack.c.b16 %v476, %v474
  %v521 = vpack.c.b16 %v479, %v477
  %v522 = vpack.c.b16 %v480, %v478
  %v523 = vpack.c.b16 %v483, %v481
  %v524 = vpack.c.b16 %v484, %v482
  %v525 = vpack.c.b16 %v487, %v485
  %v526 = vpack.c.b16 %v488, %v486
  %v527 = vpack.c.b16 %v491, %v489
  %v528 = vpack.c.b16 %v492, %v490
  %v529 = vpack.c.b16 %v495, %v493
  %v530 = vpack.c.b16 %v496, %v494
  %v531 = vpack.c.b16 %v499, %v497
  %v532 = vpack.c.b16 %v500, %v498
  %v533 = vpack.c.b16 %v503, %v501
  %v534 = vpack.c.b16 %v504, %v502
  %v535 = vpack.c.b16 %v507, %v505
  %v536 = vpack.c.b16 %v508, %v506
  %v537 = vpack.c.b16 %v511, %v509
  %v538 = vpack.c.b16 %v512, %v510
  %v539 = vpack.c.b16 %v515, %v513
  %v540 = vpack.c.b16 %v516, %v514
  %v566 = vsel %vm400, %v406, 0
  %v569 = vsel %vm400, %v408, 0
  %571 = vmatprep.subr.bf16.mxu0 %v532
  %572 = vmatpush1.bf16.msra.mxu0 %v531
  %573 = vmatprep.subr.bf16.mxu0 %v530
  %574 = vmatpush1.bf16.msra.mxu0 %v529
  %575 = vmatprep.subr.bf16.mxu0 %v528
  %576 = vmatpush1.bf16.msra.mxu0 %v527
  %577 = vmatprep.subr.bf16.mxu0 %v526
  %578 = vmatpush1.bf16.msra.mxu0 %v525
  %579 = vmatprep.subr.bf16.mxu0 %v524
  %580 = vmatpush1.bf16.msra.mxu0 %v523
  %581 = vmatprep.subr.bf16.mxu0 %v522
  %582 = vmatpush1.bf16.msra.mxu0 %v521
  %583 = vmatprep.subr.bf16.mxu0 %v520
  %584 = vmatpush1.bf16.msra.mxu0 %v519
  %585 = vmatprep.subr.bf16.mxu0 %v518
  %586 = vmatpush1.bf16.msra.mxu0 %v517
  %587 = vmatprep.subr.bf16.mxu0 0
  %588 = vmatpush2.bf16.msra.mxu0 0
  %589 = vmatprep.subr.bf16.mxu0 0
  %590 = vmatpush2.bf16.msra.mxu0 0
  %591 = vmatprep.subr.bf16.mxu0 0
  %592 = vmatpush2.bf16.msra.mxu0 0
  %593 = vmatprep.subr.bf16.mxu0 0
  %594 = vmatpush2.bf16.msra.mxu0 0
  %595 = vmatprep.subr.bf16.mxu0 %v540
  %596 = vmatpush2.bf16.msra.mxu0 %v539
  %597 = vmatprep.subr.bf16.mxu0 %v538
  %598 = vmatpush2.bf16.msra.mxu0 %v537
  %599 = vmatprep.subr.bf16.mxu0 %v536
  %600 = vmatpush2.bf16.msra.mxu0 %v535
  %601 = vmatprep.subr.bf16.mxu0 %v534
  %602 = vmatpush2.bf16.msra.mxu0 %v533
  %603 = vmatprep.mubr.bf16.mxu0 %v566
  %604 = vmatmul.mubr.bf16.gmra.mxu0 %v405
  %v605 = vpop.f32.mrf.mxu0
  %v606 = vadd.f32 %v438, %v605
  %v607 = vpop.f32.mrf.mxu0
  %v608 = vadd.f32 %v442, %v607
  %v609 = vpop.f32.mrf.mxu0
  %v610 = vadd.f32 %v438, %v609
  %v611 = vpop.f32.mrf.mxu0
  %v612 = vadd.f32 %v442, %v611
  %613 = vmatprep.mubr.bf16.mxu0 %v569
  %614 = vmatmul.mubr.bf16.gmra.mxu0 %v407
  %v615 = vpop.f32.mrf.mxu0
  %v616 = vadd.f32 %v438, %v615
  %v617 = vpop.f32.mrf.mxu0
  %v618 = vadd.f32 %v442, %v617
  %v619 = vpop.f32.mrf.mxu0
  %v620 = vadd.f32 %v438, %v619
  %v621 = vpop.f32.mrf.mxu0
  %v622 = vadd.f32 %v442, %v621
  %623 = vdwg.mxu0
  %v624 = vmax.f32 %v606, 0.0
  %v625 = vmax.f32 %v608, 0.0
  %v626 = vmax.f32 %v610, 0.0
  %v627 = vmax.f32 %v612, 0.0
  %v628 = vmax.f32 %v616, 0.0
  %v629 = vmax.f32 %v618, 0.0
  %v630 = vmax.f32 %v620, 0.0
  %v631 = vmax.f32 %v622, 0.0
  %v632 = vpack.c.bf16 %v626, %v624
  %v633 = vpack.c.bf16 %v627, %v625
  %v634 = vpack.c.bf16 %v630, %v628
  %v635 = vpack.c.bf16 %v631, %v629
  %v636 = vld [vmem:[%s18] sm:$0xf]
  %v637 = vld [vmem:[%s18 + $0x4] sm:$0xf]
  %v638 = vld [vmem:[%s18 + $0x8] sm:$0xf]
  %v639 = vld [vmem:[%s18 + $0xc] sm:$0xf]
  %v640 = vld [vmem:[%s18 + $0x10] sm:$0xf]
  %v641 = vld [vmem:[%s18 + $0x14] sm:$0xf]
  %v642 = vld [vmem:[%s18 + $0x18] sm:$0xf]
  %v643 = vld [vmem:[%s18 + $0x1c] sm:$0xf]
  %v644 = vld [vmem:[%s18 + $0x20] sm:$0xf]
  %v645 = vld [vmem:[%s18 + $0x24] sm:$0xf]
  %v646 = vld [vmem:[%s18 + $0x28] sm:$0xf]
  %v647 = vld [vmem:[%s18 + $0x2c] sm:$0xf]
  %v648 = vld [vmem:[%s18 + $0x30] sm:$0xf]
  %v649 = vld [vmem:[%s18 + $0x34] sm:$0xf]
  %v650 = vld [vmem:[%s18 + $0x38] sm:$0xf]
  %v651 = vld [vmem:[%s18 + $0x3c] sm:$0xf]
  %v652 = vld [vmem:[%s18 + $0x40] sm:$0xf]
  %v653 = vld [vmem:[%s18 + $0x44] sm:$0xf]
  %v654 = vld [vmem:[%s18 + $0x48] sm:$0xf]
  %v655 = vld [vmem:[%s18 + $0x4c] sm:$0xf]
  %v656 = vld [vmem:[%s18 + $0x50] sm:$0xf]
  %v657 = vld [vmem:[%s18 + $0x54] sm:$0xf]
  %v658 = vld [vmem:[%s18 + $0x58] sm:$0xf]
  %v659 = vld [vmem:[%s18 + $0x5c] sm:$0xf]
  %v660 = vld [vmem:[%s18 + $0x60] sm:$0xf]
  %v661 = vld [vmem:[%s18 + $0x64] sm:$0xf]
  %v662 = vld [vmem:[%s18 + $0x68] sm:$0xf]
  %v663 = vld [vmem:[%s18 + $0x6c] sm:$0xf]
  %v664 = vld [vmem:[%s18 + $0x70] sm:$0xf]
  %v665 = vld [vmem:[%s18 + $0x74] sm:$0xf]
  %v666 = vld [vmem:[%s18 + $0x78] sm:$0xf]
  %v667 = vld [vmem:[%s18 + $0x7c] sm:$0xf]
  %v700 = vunpack.c.l.b16 %v636
  %v701 = vunpack.c.l.b16 %v637
  %v702 = vunpack.c.l.b16 %v638
  %v703 = vunpack.c.l.b16 %v639
  %v704 = vunpack.c.l.b16 %v640
  %v705 = vunpack.c.l.b16 %v641
  %v706 = vunpack.c.l.b16 %v642
  %v707 = vunpack.c.l.b16 %v643
  %v708 = vunpack.c.l.b16 %v644
  %v709 = vunpack.c.l.b16 %v645
  %v710 = vunpack.c.l.b16 %v646
  %v711 = vunpack.c.l.b16 %v647
  %v712 = vunpack.c.l.b16 %v648
  %v713 = vunpack.c.l.b16 %v649
  %v714 = vunpack.c.l.b16 %v650
  %v715 = vunpack.c.l.b16 %v651
  %v716 = vunpack.c.l.b16 %v652
  %v717 = vunpack.c.l.b16 %v653
  %v718 = vunpack.c.l.b16 %v654
  %v719 = vunpack.c.l.b16 %v655
  %v720 = vunpack.c.l.b16 %v656
  %v721 = vunpack.c.l.b16 %v657
  %v722 = vunpack.c.l.b16 %v658
  %v723 = vunpack.c.l.b16 %v659
  %v724 = vunpack.c.l.b16 %v660
  %v725 = vunpack.c.l.b16 %v661
  %v726 = vunpack.c.l.b16 %v662
  %v727 = vunpack.c.l.b16 %v663
  %v728 = vunpack.c.l.b16 %v664
  %v729 = vunpack.c.l.b16 %v665
  %v730 = vunpack.c.l.b16 %v666
  %v731 = vunpack.c.l.b16 %v667
  %v732 = vpack.c.b16 %v701, %v700
  %v733 = vpack.c.b16 %v703, %v702
  %v734 = vpack.c.b16 %v705, %v704
  %v735 = vpack.c.b16 %v707, %v706
  %v736 = vpack.c.b16 %v709, %v708
  %v737 = vpack.c.b16 %v711, %v710
  %v738 = vpack.c.b16 %v713, %v712
  %v739 = vpack.c.b16 %v715, %v714
  %v740 = vpack.c.b16 %v717, %v716
  %v741 = vpack.c.b16 %v719, %v718
  %v742 = vpack.c.b16 %v721, %v720
  %v743 = vpack.c.b16 %v723, %v722
  %v744 = vpack.c.b16 %v725, %v724
  %v745 = vpack.c.b16 %v727, %v726
  %v746 = vpack.c.b16 %v729, %v728
  %v747 = vpack.c.b16 %v731, %v730
  %764 = vmatprep.subr.bf16.mxu0 0
  %765 = vmatpush1.bf16.msra.mxu0 %v739
  %766 = vmatprep.subr.bf16.mxu0 0
  %767 = vmatpush1.bf16.msra.mxu0 %v738
  %768 = vmatprep.subr.bf16.mxu0 0
  %769 = vmatpush1.bf16.msra.mxu0 %v737
  %770 = vmatprep.subr.bf16.mxu0 0
  %771 = vmatpush1.bf16.msra.mxu0 %v736
  %772 = vmatprep.subr.bf16.mxu0 0
  %773 = vmatpush1.bf16.msra.mxu0 %v735
  %774 = vmatprep.subr.bf16.mxu0 0
  %775 = vmatpush1.bf16.msra.mxu0 %v734
  %776 = vmatprep.subr.bf16.mxu0 0
  %777 = vmatpush1.bf16.msra.mxu0 %v733
  %778 = vmatprep.subr.bf16.mxu0 0
  %779 = vmatpush1.bf16.msra.mxu0 %v732
  %780 = vmatprep.subr.bf16.mxu0 0
  %781 = vmatpush2.bf16.msra.mxu0 %v747
  %782 = vmatprep.subr.bf16.mxu0 0
  %783 = vmatpush2.bf16.msra.mxu0 %v746
  %784 = vmatprep.subr.bf16.mxu0 0
  %785 = vmatpush2.bf16.msra.mxu0 %v745
  %786 = vmatprep.subr.bf16.mxu0 0
  %787 = vmatpush2.bf16.msra.mxu0 %v744
  %788 = vmatprep.subr.bf16.mxu0 0
  %789 = vmatpush2.bf16.msra.mxu0 %v743
  %790 = vmatprep.subr.bf16.mxu0 0
  %791 = vmatpush2.bf16.msra.mxu0 %v742
  %792 = vmatprep.subr.bf16.mxu0 0
  %793 = vmatpush2.bf16.msra.mxu0 %v741
  %794 = vmatprep.subr.bf16.mxu0 0
  %795 = vmatpush2.bf16.msra.mxu0 %v740
  %796 = vmatprep.mubr.bf16.mxu0 %v633
  %797 = vmatmul.mubr.bf16.gmra.mxu0 %v632
  %v798 = vpop.f32.mrf.mxu0
  %v799 = vadd.f32 %v322, %v798
  %v800 = vpop.f32.mrf.mxu0
  %v801 = vpop.f32.mrf.mxu0
  %v802 = vadd.f32 %v323, %v801
  %v803 = vpop.f32.mrf.mxu0
  %804 = vmatprep.mubr.bf16.mxu0 %v635
  %805 = vmatmul.mubr.bf16.gmra.mxu0 %v634
  %v806 = vpop.f32.mrf.mxu0
  %v807 = vadd.f32 %v324, %v806
  %v808 = vpop.f32.mrf.mxu0
  %v809 = vpop.f32.mrf.mxu0
  %v810 = vadd.f32 %v325, %v809
  %v811 = vpop.f32.mrf.mxu0
  %812 = vdwg.mxu0
  %v813 = vld [vmem:[%s11 + $0x2] sm:$0x1]
  %v814 = vld [vmem:[%s11 + $0x3] sm:$0x1]
  %v815 = vlaneseq
  %v816 = vshrl.u32 %v815, 7
  %v817 = vsub.s32 0, %v816
  %v818 = vrot.slane %v813, %v817
  %v819 = vmul.f32 %v799, %v818
  %v820 = vmul.f32 %v802, %v818
  %v821 = vmul.f32 %v807, %v818
  %v822 = vmul.f32 %v810, %v818
  %v823 = vlaneseq
  %v824 = vshrl.u32 %v823, 7
  %v825 = vsub.s32 0, %v824
  %v826 = vrot.slane %v814, %v825
  %v827 = vadd.f32 %v819, %v826
  %v828 = vadd.f32 %v820, %v826
  %v829 = vadd.f32 %v821, %v826
  %v830 = vadd.f32 %v822, %v826
  %v831 = vmax.f32 %v827, 0.0
  %v832 = vmax.f32 %v828, 0.0
  %v833 = vmax.f32 %v829, 0.0
  %v834 = vmax.f32 %v830, 0.0
  %v836 = vrot.slane %v834, 7
  %v841 = vrot.slane %v831, 7
  %v842 = vrot.slane %v832, 7
  %v843 = vsel %vm354, %v841, %v842
  %v844 = vrot.slane %v833, 7
  %v845 = vsel %vm354, %v842, %v844
  %v846 = vsel %vm354, %v844, %v836
  %v851 = vsel %vm354, %v836, %v841
  %v852 = vmul.f32 %v851, %v184
  %v853 = vmul.f32 %v843, %v185
  %v854 = vmul.f32 %v845, %v186
  %v855 = vmul.f32 %v846, %v187
  %v856 = vrot.slane %v831, 1
  %v857 = vrot.slane %v832, 1
  %v858 = vsel %vm370, %v856, %v857
  %v859 = vrot.slane %v833, 1
  %v860 = vsel %vm370, %v857, %v859
  %v861 = vrot.slane %v834, 1
  %v862 = vsel %vm370, %v859, %v861
  %v868 = vsel %vm370, %v861, %v856
  %v869 = vmul.f32 %v858, %v196
  %v870 = vmul.f32 %v860, %v197
  %v871 = vmul.f32 %v862, %v198
  %v872 = vmul.f32 %v868, %v199
  %873 = vrot.lane.b32.xlu0 %v831, 64
  %v874 = vpop.permute.xlu0 %873
  %875 = vrot.lane.b32.xlu0 %v832, 64
  %v876 = vpop.permute.xlu0 %875
  %877 = vrot.lane.b32.xlu0 %v833, 64
  %v878 = vpop.permute.xlu0 %877
  %879 = vrot.lane.b32.xlu0 %v834, 64
  %v880 = vpop.permute.xlu0 %879
  %v885 = vsel %vm400, %v852, %v874
  %v886 = vsel %vm400, %v853, %v876
  %v887 = vsel %vm400, %v854, %v878
  %v888 = vsel %vm400, %v855, %v880
  %v889 = vpack.c.bf16 %v886, %v885
  %v890 = vpack.c.bf16 %v870, %v869
  %v891 = vpack.c.bf16 %v888, %v887
  %v892 = vpack.c.bf16 %v872, %v871
  %s893 = scalar_lea.vmem %s1, 192
  %v894 = vld [vmem:[%s893] sm:$0xff]
  %v895 = vld [vmem:[%s893 + $0x8] sm:$0xff]
  %v896 = vld [vmem:[%s893 + $0x10] sm:$0xff]
  %v897 = vld [vmem:[%s893 + $0x18] sm:$0xff]
  %v898 = vld [vmem:[%s893 + $0x20] sm:$0xff]
  %v899 = vld [vmem:[%s893 + $0x28] sm:$0xff]
  %v900 = vld [vmem:[%s893 + $0x30] sm:$0xff]
  %v901 = vld [vmem:[%s893 + $0x38] sm:$0xff]
  %v902 = vld [vmem:[%s893 + $0x40] sm:$0xff]
  %v903 = vld [vmem:[%s893 + $0x48] sm:$0xff]
  %v904 = vld [vmem:[%s893 + $0x50] sm:$0xff]
  %v905 = vld [vmem:[%s893 + $0x58] sm:$0xff]
  %v906 = vld [vmem:[%s893 + $0x60] sm:$0xff]
  %v907 = vld [vmem:[%s893 + $0x68] sm:$0xff]
  %v908 = vld [vmem:[%s893 + $0x70] sm:$0xff]
  %v909 = vld [vmem:[%s893 + $0x78] sm:$0xff]
  %v910 = vld [vmem:[%s893 + $0x80] sm:$0xff]
  %v911 = vld [vmem:[%s893 + $0x88] sm:$0xff]
  %v912 = vld [vmem:[%s893 + $0x90] sm:$0xff]
  %v913 = vld [vmem:[%s893 + $0x98] sm:$0xff]
  %v914 = vld [vmem:[%s893 + $0xa0] sm:$0xff]
  %v915 = vld [vmem:[%s893 + $0xa8] sm:$0xff]
  %v916 = vld [vmem:[%s893 + $0xb0] sm:$0xff]
  %v917 = vld [vmem:[%s893 + $0xb8] sm:$0xff]
  %s918 = scalar_lea.vmem %s4, 1
  %v919 = vld [vmem:[%s918] ss:$4 sm:$0x3]
  %v921 = vlaneseq
  %v922 = vshrl.u32 %v921, 7
  %v923 = vsub.s32 0, %v922
  %v924 = vrot.slane %v919, %v923
  %v925 = vlaneseq
  %v926 = vshrl.u32 %v925, 7
  %v927 = vsub.s32 1, %v926
  %v928 = vrot.slane %v919, %v927
  %v955 = vunpack.c.l.b16 %v894
  %v956 = vunpack.c.h.b16 %v894
  %v957 = vunpack.c.l.b16 %v895
  %v958 = vunpack.c.h.b16 %v895
  %v959 = vunpack.c.l.b16 %v896
  %v960 = vunpack.c.h.b16 %v896
  %v961 = vunpack.c.l.b16 %v897
  %v962 = vunpack.c.h.b16 %v897
  %v963 = vunpack.c.l.b16 %v898
  %v964 = vunpack.c.h.b16 %v898
  %v965 = vunpack.c.l.b16 %v899
  %v966 = vunpack.c.h.b16 %v899
  %v967 = vunpack.c.l.b16 %v900
  %v968 = vunpack.c.h.b16 %v900
  %v969 = vunpack.c.l.b16 %v901
  %v970 = vunpack.c.h.b16 %v901
  %v971 = vunpack.c.l.b16 %v902
  %v972 = vunpack.c.h.b16 %v902
  %v973 = vunpack.c.l.b16 %v903
  %v974 = vunpack.c.h.b16 %v903
  %v975 = vunpack.c.l.b16 %v904
  %v976 = vunpack.c.h.b16 %v904
  %v977 = vunpack.c.l.b16 %v905
  %v978 = vunpack.c.h.b16 %v905
  %v979 = vunpack.c.l.b16 %v906
  %v980 = vunpack.c.h.b16 %v906
  %v981 = vunpack.c.l.b16 %v907
  %v982 = vunpack.c.h.b16 %v907
  %v983 = vunpack.c.l.b16 %v908
  %v984 = vunpack.c.h.b16 %v908
  %v985 = vunpack.c.l.b16 %v909
  %v986 = vunpack.c.h.b16 %v909
  %v987 = vunpack.c.l.b16 %v910
  %v988 = vunpack.c.h.b16 %v910
  %v989 = vunpack.c.l.b16 %v911
  %v990 = vunpack.c.h.b16 %v911
  %v991 = vunpack.c.l.b16 %v912
  %v992 = vunpack.c.h.b16 %v912
  %v993 = vunpack.c.l.b16 %v913
  %v994 = vunpack.c.h.b16 %v913
  %v995 = vunpack.c.l.b16 %v914
  %v996 = vunpack.c.h.b16 %v914
  %v997 = vunpack.c.l.b16 %v915
  %v998 = vunpack.c.h.b16 %v915
  %v999 = vunpack.c.l.b16 %v916
  %v1000 = vunpack.c.h.b16 %v916
  %v1001 = vunpack.c.l.b16 %v917
  %v1002 = vunpack.c.h.b16 %v917
  %v1003 = vpack.c.b16 %v957, %v955
  %v1004 = vpack.c.b16 %v958, %v956
  %v1005 = vpack.c.b16 %v961, %v959
  %v1006 = vpack.c.b16 %v962, %v960
  %v1007 = vpack.c.b16 %v965, %v963
  %v1008 = vpack.c.b16 %v966, %v964
  %v1009 = vpack.c.b16 %v969, %v967
  %v1010 = vpack.c.b16 %v970, %v968
  %v1011 = vpack.c.b16 %v973, %v971
  %v1012 = vpack.c.b16 %v974, %v972
  %v1013 = vpack.c.b16 %v977, %v975
  %v1014 = vpack.c.b16 %v978, %v976
  %v1015 = vpack.c.b16 %v981, %v979
  %v1016 = vpack.c.b16 %v982, %v980
  %v1017 = vpack.c.b16 %v985, %v983
  %v1018 = vpack.c.b16 %v986, %v984
  %v1019 = vpack.c.b16 %v989, %v987
  %v1020 = vpack.c.b16 %v990, %v988
  %v1021 = vpack.c.b16 %v993, %v991
  %v1022 = vpack.c.b16 %v994, %v992
  %v1023 = vpack.c.b16 %v997, %v995
  %v1024 = vpack.c.b16 %v998, %v996
  %v1025 = vpack.c.b16 %v1001, %v999
  %v1026 = vpack.c.b16 %v1002, %v1000
  %v1052 = vsel %vm400, %v890, 0
  %v1055 = vsel %vm400, %v892, 0
  %1057 = vmatprep.subr.bf16.mxu0 %v1018
  %1058 = vmatpush1.bf16.msra.mxu0 %v1017
  %1059 = vmatprep.subr.bf16.mxu0 %v1016
  %1060 = vmatpush1.bf16.msra.mxu0 %v1015
  %1061 = vmatprep.subr.bf16.mxu0 %v1014
  %1062 = vmatpush1.bf16.msra.mxu0 %v1013
  %1063 = vmatprep.subr.bf16.mxu0 %v1012
  %1064 = vmatpush1.bf16.msra.mxu0 %v1011
  %1065 = vmatprep.subr.bf16.mxu0 %v1010
  %1066 = vmatpush1.bf16.msra.mxu0 %v1009
  %1067 = vmatprep.subr.bf16.mxu0 %v1008
  %1068 = vmatpush1.bf16.msra.mxu0 %v1007
  %1069 = vmatprep.subr.bf16.mxu0 %v1006
  %1070 = vmatpush1.bf16.msra.mxu0 %v1005
  %1071 = vmatprep.subr.bf16.mxu0 %v1004
  %1072 = vmatpush1.bf16.msra.mxu0 %v1003
  %1073 = vmatprep.subr.bf16.mxu0 0
  %1074 = vmatpush2.bf16.msra.mxu0 0
  %1075 = vmatprep.subr.bf16.mxu0 0
  %1076 = vmatpush2.bf16.msra.mxu0 0
  %1077 = vmatprep.subr.bf16.mxu0 0
  %1078 = vmatpush2.bf16.msra.mxu0 0
  %1079 = vmatprep.subr.bf16.mxu0 0
  %1080 = vmatpush2.bf16.msra.mxu0 0
  %1081 = vmatprep.subr.bf16.mxu0 %v1026
  %1082 = vmatpush2.bf16.msra.mxu0 %v1025
  %1083 = vmatprep.subr.bf16.mxu0 %v1024
  %1084 = vmatpush2.bf16.msra.mxu0 %v1023
  %1085 = vmatprep.subr.bf16.mxu0 %v1022
  %1086 = vmatpush2.bf16.msra.mxu0 %v1021
  %1087 = vmatprep.subr.bf16.mxu0 %v1020
  %1088 = vmatpush2.bf16.msra.mxu0 %v1019
  %1089 = vmatprep.mubr.bf16.mxu0 %v1052
  %1090 = vmatmul.mubr.bf16.gmra.mxu0 %v889
  %v1091 = vpop.f32.mrf.mxu0
  %v1092 = vadd.f32 %v924, %v1091
  %v1093 = vpop.f32.mrf.mxu0
  %v1094 = vadd.f32 %v928, %v1093
  %v1095 = vpop.f32.mrf.mxu0
  %v1096 = vadd.f32 %v924, %v1095
  %v1097 = vpop.f32.mrf.mxu0
  %v1098 = vadd.f32 %v928, %v1097
  %1099 = vmatprep.mubr.bf16.mxu0 %v1055
  %1100 = vmatmul.mubr.bf16.gmra.mxu0 %v891
  %v1101 = vpop.f32.mrf.mxu0
  %v1102 = vadd.f32 %v924, %v1101
  %v1103 = vpop.f32.mrf.mxu0
  %v1104 = vadd.f32 %v928, %v1103
  %v1105 = vpop.f32.mrf.mxu0
  %v1106 = vadd.f32 %v924, %v1105
  %v1107 = vpop.f32.mrf.mxu0
  %v1108 = vadd.f32 %v928, %v1107
  %1109 = vdwg.mxu0
  %v1110 = vmax.f32 %v1092, 0.0
  %v1111 = vmax.f32 %v1094, 0.0
  %v1112 = vmax.f32 %v1096, 0.0
  %v1113 = vmax.f32 %v1098, 0.0
  %v1114 = vmax.f32 %v1102, 0.0
  %v1115 = vmax.f32 %v1104, 0.0
  %v1116 = vmax.f32 %v1106, 0.0
  %v1117 = vmax.f32 %v1108, 0.0
  %v1118 = vpack.c.bf16 %v1112, %v1110
  %v1119 = vpack.c.bf16 %v1113, %v1111
  %v1120 = vpack.c.bf16 %v1116, %v1114
  %v1121 = vpack.c.bf16 %v1117, %v1115
  %s1122 = scalar_lea.vmem %s18, 128
  %v1123 = vld [vmem:[%s1122] sm:$0xf]
  %v1124 = vld [vmem:[%s1122 + $0x4] sm:$0xf]
  %v1125 = vld [vmem:[%s1122 + $0x8] sm:$0xf]
  %v1126 = vld [vmem:[%s1122 + $0xc] sm:$0xf]
  %v1127 = vld [vmem:[%s1122 + $0x10] sm:$0xf]
  %v1128 = vld [vmem:[%s1122 + $0x14] sm:$0xf]
  %v1129 = vld [vmem:[%s1122 + $0x18] sm:$0xf]
  %v1130 = vld [vmem:[%s1122 + $0x1c] sm:$0xf]
  %v1131 = vld [vmem:[%s1122 + $0x20] sm:$0xf]
  %v1132 = vld [vmem:[%s1122 + $0x24] sm:$0xf]
  %v1133 = vld [vmem:[%s1122 + $0x28] sm:$0xf]
  %v1134 = vld [vmem:[%s1122 + $0x2c] sm:$0xf]
  %v1135 = vld [vmem:[%s1122 + $0x30] sm:$0xf]
  %v1136 = vld [vmem:[%s1122 + $0x34] sm:$0xf]
  %v1137 = vld [vmem:[%s1122 + $0x38] sm:$0xf]
  %v1138 = vld [vmem:[%s1122 + $0x3c] sm:$0xf]
  %v1139 = vld [vmem:[%s1122 + $0x40] sm:$0xf]
  %v1140 = vld [vmem:[%s1122 + $0x44] sm:$0xf]
  %v1141 = vld [vmem:[%s1122 + $0x48] sm:$0xf]
  %v1142 = vld [vmem:[%s1122 + $0x4c] sm:$0xf]
  %v1143 = vld [vmem:[%s1122 + $0x50] sm:$0xf]
  %v1144 = vld [vmem:[%s1122 + $0x54] sm:$0xf]
  %v1145 = vld [vmem:[%s1122 + $0x58] sm:$0xf]
  %v1146 = vld [vmem:[%s1122 + $0x5c] sm:$0xf]
  %v1147 = vld [vmem:[%s1122 + $0x60] sm:$0xf]
  %v1148 = vld [vmem:[%s1122 + $0x64] sm:$0xf]
  %v1149 = vld [vmem:[%s1122 + $0x68] sm:$0xf]
  %v1150 = vld [vmem:[%s1122 + $0x6c] sm:$0xf]
  %v1151 = vld [vmem:[%s1122 + $0x70] sm:$0xf]
  %v1152 = vld [vmem:[%s1122 + $0x74] sm:$0xf]
  %v1153 = vld [vmem:[%s1122 + $0x78] sm:$0xf]
  %v1154 = vld [vmem:[%s1122 + $0x7c] sm:$0xf]
  %v1187 = vunpack.c.l.b16 %v1123
  %v1188 = vunpack.c.l.b16 %v1124
  %v1189 = vunpack.c.l.b16 %v1125
  %v1190 = vunpack.c.l.b16 %v1126
  %v1191 = vunpack.c.l.b16 %v1127
  %v1192 = vunpack.c.l.b16 %v1128
  %v1193 = vunpack.c.l.b16 %v1129
  %v1194 = vunpack.c.l.b16 %v1130
  %v1195 = vunpack.c.l.b16 %v1131
  %v1196 = vunpack.c.l.b16 %v1132
  %v1197 = vunpack.c.l.b16 %v1133
  %v1198 = vunpack.c.l.b16 %v1134
  %v1199 = vunpack.c.l.b16 %v1135
  %v1200 = vunpack.c.l.b16 %v1136
  %v1201 = vunpack.c.l.b16 %v1137
  %v1202 = vunpack.c.l.b16 %v1138
  %v1203 = vunpack.c.l.b16 %v1139
  %v1204 = vunpack.c.l.b16 %v1140
  %v1205 = vunpack.c.l.b16 %v1141
  %v1206 = vunpack.c.l.b16 %v1142
  %v1207 = vunpack.c.l.b16 %v1143
  %v1208 = vunpack.c.l.b16 %v1144
  %v1209 = vunpack.c.l.b16 %v1145
  %v1210 = vunpack.c.l.b16 %v1146
  %v1211 = vunpack.c.l.b16 %v1147
  %v1212 = vunpack.c.l.b16 %v1148
  %v1213 = vunpack.c.l.b16 %v1149
  %v1214 = vunpack.c.l.b16 %v1150
  %v1215 = vunpack.c.l.b16 %v1151
  %v1216 = vunpack.c.l.b16 %v1152
  %v1217 = vunpack.c.l.b16 %v1153
  %v1218 = vunpack.c.l.b16 %v1154
  %v1219 = vpack.c.b16 %v1188, %v1187
  %v1220 = vpack.c.b16 %v1190, %v1189
  %v1221 = vpack.c.b16 %v1192, %v1191
  %v1222 = vpack.c.b16 %v1194, %v1193
  %v1223 = vpack.c.b16 %v1196, %v1195
  %v1224 = vpack.c.b16 %v1198, %v1197
  %v1225 = vpack.c.b16 %v1200, %v1199
  %v1226 = vpack.c.b16 %v1202, %v1201
  %v1227 = vpack.c.b16 %v1204, %v1203
  %v1228 = vpack.c.b16 %v1206, %v1205
  %v1229 = vpack.c.b16 %v1208, %v1207
  %v1230 = vpack.c.b16 %v1210, %v1209
  %v1231 = vpack.c.b16 %v1212, %v1211
  %v1232 = vpack.c.b16 %v1214, %v1213
  %v1233 = vpack.c.b16 %v1216, %v1215
  %v1234 = vpack.c.b16 %v1218, %v1217
  %1251 = vmatprep.subr.bf16.mxu0 0
  %1252 = vmatpush1.bf16.msra.mxu0 %v1226
  %1253 = vmatprep.subr.bf16.mxu0 0
  %1254 = vmatpush1.bf16.msra.mxu0 %v1225
  %1255 = vmatprep.subr.bf16.mxu0 0
  %1256 = vmatpush1.bf16.msra.mxu0 %v1224
  %1257 = vmatprep.subr.bf16.mxu0 0
  %1258 = vmatpush1.bf16.msra.mxu0 %v1223
  %1259 = vmatprep.subr.bf16.mxu0 0
  %1260 = vmatpush1.bf16.msra.mxu0 %v1222
  %1261 = vmatprep.subr.bf16.mxu0 0
  %1262 = vmatpush1.bf16.msra.mxu0 %v1221
  %1263 = vmatprep.subr.bf16.mxu0 0
  %1264 = vmatpush1.bf16.msra.mxu0 %v1220
  %1265 = vmatprep.subr.bf16.mxu0 0
  %1266 = vmatpush1.bf16.msra.mxu0 %v1219
  %1267 = vmatprep.subr.bf16.mxu0 0
  %1268 = vmatpush2.bf16.msra.mxu0 %v1234
  %1269 = vmatprep.subr.bf16.mxu0 0
  %1270 = vmatpush2.bf16.msra.mxu0 %v1233
  %1271 = vmatprep.subr.bf16.mxu0 0
  %1272 = vmatpush2.bf16.msra.mxu0 %v1232
  %1273 = vmatprep.subr.bf16.mxu0 0
  %1274 = vmatpush2.bf16.msra.mxu0 %v1231
  %1275 = vmatprep.subr.bf16.mxu0 0
  %1276 = vmatpush2.bf16.msra.mxu0 %v1230
  %1277 = vmatprep.subr.bf16.mxu0 0
  %1278 = vmatpush2.bf16.msra.mxu0 %v1229
  %1279 = vmatprep.subr.bf16.mxu0 0
  %1280 = vmatpush2.bf16.msra.mxu0 %v1228
  %1281 = vmatprep.subr.bf16.mxu0 0
  %1282 = vmatpush2.bf16.msra.mxu0 %v1227
  %1283 = vmatprep.mubr.bf16.mxu0 %v1119
  %1284 = vmatmul.mubr.bf16.gmra.mxu0 %v1118
  %v1285 = vpop.f32.mrf.mxu0
  %v1286 = vadd.f32 %v799, %v1285
  %v1287 = vpop.f32.mrf.mxu0
  %v1288 = vpop.f32.mrf.mxu0
  %v1289 = vadd.f32 %v802, %v1288
  %v1290 = vpop.f32.mrf.mxu0
  %1291 = vmatprep.mubr.bf16.mxu0 %v1121
  %1292 = vmatmul.mubr.bf16.gmra.mxu0 %v1120
  %v1293 = vpop.f32.mrf.mxu0
  %v1294 = vadd.f32 %v807, %v1293
  %v1295 = vpop.f32.mrf.mxu0
  %v1296 = vpop.f32.mrf.mxu0
  %v1297 = vadd.f32 %v810, %v1296
  %v1298 = vpop.f32.mrf.mxu0
  %1299 = vdwg.mxu0
  %v1300 = vld [vmem:[%s11 + $0x4] sm:$0x1]
  %v1301 = vld [vmem:[%s11 + $0x5] sm:$0x1]
  %v1302 = vlaneseq
  %v1303 = vshrl.u32 %v1302, 7
  %v1304 = vsub.s32 0, %v1303
  %v1305 = vrot.slane %v1300, %v1304
  %v1306 = vmul.f32 %v322, %v1305
  %v1307 = vmul.f32 %v323, %v1305
  %v1308 = vmul.f32 %v324, %v1305
  %v1309 = vmul.f32 %v325, %v1305
  %v1310 = vlaneseq
  %v1311 = vshrl.u32 %v1310, 7
  %v1312 = vsub.s32 0, %v1311
  %v1313 = vrot.slane %v1301, %v1312
  %v1314 = vadd.f32 %v1306, %v1313
  %v1315 = vadd.f32 %v1307, %v1313
  %v1316 = vadd.f32 %v1308, %v1313
  %v1317 = vadd.f32 %v1309, %v1313
  %v1318 = vmax.f32 %v1314, 0.0
  %v1319 = vmax.f32 %v1315, 0.0
  %v1320 = vmax.f32 %v1316, 0.0
  %v1321 = vmax.f32 %v1317, 0.0
  %v1323 = vrot.slane %v1321, 7
  %v1328 = vrot.slane %v1318, 7
  %v1329 = vrot.slane %v1319, 7
  %v1330 = vsel %vm354, %v1328, %v1329
  %v1331 = vrot.slane %v1320, 7
  %v1332 = vsel %vm354, %v1329, %v1331
  %v1333 = vsel %vm354, %v1331, %v1323
  %v1338 = vsel %vm354, %v1323, %v1328
  %v1339 = vmul.f32 %v1338, %v184
  %v1340 = vmul.f32 %v1330, %v185
  %v1341 = vmul.f32 %v1332, %v186
  %v1342 = vmul.f32 %v1333, %v187
  %v1343 = vrot.slane %v1318, 1
  %v1344 = vrot.slane %v1319, 1
  %v1345 = vsel %vm370, %v1343, %v1344
  %v1346 = vrot.slane %v1320, 1
  %v1347 = vsel %vm370, %v1344, %v1346
  %v1348 = vrot.slane %v1321, 1
  %v1349 = vsel %vm370, %v1346, %v1348
  %v1355 = vsel %vm370, %v1348, %v1343
  %v1356 = vmul.f32 %v1345, %v196
  %v1357 = vmul.f32 %v1347, %v197
  %v1358 = vmul.f32 %v1349, %v198
  %v1359 = vmul.f32 %v1355, %v199
  %1360 = vrot.lane.b32.xlu0 %v1318, 64
  %v1361 = vpop.permute.xlu0 %1360
  %1362 = vrot.lane.b32.xlu0 %v1319, 64
  %v1363 = vpop.permute.xlu0 %1362
  %1364 = vrot.lane.b32.xlu0 %v1320, 64
  %v1365 = vpop.permute.xlu0 %1364
  %1366 = vrot.lane.b32.xlu0 %v1321, 64
  %v1367 = vpop.permute.xlu0 %1366
  %v1372 = vsel %vm400, %v1339, %v1361
  %v1373 = vsel %vm400, %v1340, %v1363
  %v1374 = vsel %vm400, %v1341, %v1365
  %v1375 = vsel %vm400, %v1342, %v1367
  %v1376 = vpack.c.bf16 %v1373, %v1372
  %v1377 = vpack.c.bf16 %v1357, %v1356
  %v1378 = vpack.c.bf16 %v1375, %v1374
  %v1379 = vpack.c.bf16 %v1359, %v1358
  %s1380 = scalar_lea.vmem %s1, 384
  %v1381 = vld [vmem:[%s1380] sm:$0xff]
  %v1382 = vld [vmem:[%s1380 + $0x8] sm:$0xff]
  %v1383 = vld [vmem:[%s1380 + $0x10] sm:$0xff]
  %v1384 = vld [vmem:[%s1380 + $0x18] sm:$0xff]
  %v1385 = vld [vmem:[%s1380 + $0x20] sm:$0xff]
  %v1386 = vld [vmem:[%s1380 + $0x28] sm:$0xff]
  %v1387 = vld [vmem:[%s1380 + $0x30] sm:$0xff]
  %v1388 = vld [vmem:[%s1380 + $0x38] sm:$0xff]
  %v1389 = vld [vmem:[%s1380 + $0x40] sm:$0xff]
  %v1390 = vld [vmem:[%s1380 + $0x48] sm:$0xff]
  %v1391 = vld [vmem:[%s1380 + $0x50] sm:$0xff]
  %v1392 = vld [vmem:[%s1380 + $0x58] sm:$0xff]
  %v1393 = vld [vmem:[%s1380 + $0x60] sm:$0xff]
  %v1394 = vld [vmem:[%s1380 + $0x68] sm:$0xff]
  %v1395 = vld [vmem:[%s1380 + $0x70] sm:$0xff]
  %v1396 = vld [vmem:[%s1380 + $0x78] sm:$0xff]
  %v1397 = vld [vmem:[%s1380 + $0x80] sm:$0xff]
  %v1398 = vld [vmem:[%s1380 + $0x88] sm:$0xff]
  %v1399 = vld [vmem:[%s1380 + $0x90] sm:$0xff]
  %v1400 = vld [vmem:[%s1380 + $0x98] sm:$0xff]
  %v1401 = vld [vmem:[%s1380 + $0xa0] sm:$0xff]
  %v1402 = vld [vmem:[%s1380 + $0xa8] sm:$0xff]
  %v1403 = vld [vmem:[%s1380 + $0xb0] sm:$0xff]
  %v1404 = vld [vmem:[%s1380 + $0xb8] sm:$0xff]
  %s1405 = scalar_lea.vmem %s4, 2
  %v1406 = vld [vmem:[%s1405] ss:$4 sm:$0x3]
  %v1408 = vlaneseq
  %v1409 = vshrl.u32 %v1408, 7
  %v1410 = vsub.s32 0, %v1409
  %v1411 = vrot.slane %v1406, %v1410
  %v1412 = vlaneseq
  %v1413 = vshrl.u32 %v1412, 7
  %v1414 = vsub.s32 1, %v1413
  %v1415 = vrot.slane %v1406, %v1414
  %v1442 = vunpack.c.l.b16 %v1381
  %v1443 = vunpack.c.h.b16 %v1381
  %v1444 = vunpack.c.l.b16 %v1382
  %v1445 = vunpack.c.h.b16 %v1382
  %v1446 = vunpack.c.l.b16 %v1383
  %v1447 = vunpack.c.h.b16 %v1383
  %v1448 = vunpack.c.l.b16 %v1384
  %v1449 = vunpack.c.h.b16 %v1384
  %v1450 = vunpack.c.l.b16 %v1385
  %v1451 = vunpack.c.h.b16 %v1385
  %v1452 = vunpack.c.l.b16 %v1386
  %v1453 = vunpack.c.h.b16 %v1386
  %v1454 = vunpack.c.l.b16 %v1387
  %v1455 = vunpack.c.h.b16 %v1387
  %v1456 = vunpack.c.l.b16 %v1388
  %v1457 = vunpack.c.h.b16 %v1388
  %v1458 = vunpack.c.l.b16 %v1389
  %v1459 = vunpack.c.h.b16 %v1389
  %v1460 = vunpack.c.l.b16 %v1390
  %v1461 = vunpack.c.h.b16 %v1390
  %v1462 = vunpack.c.l.b16 %v1391
  %v1463 = vunpack.c.h.b16 %v1391
  %v1464 = vunpack.c.l.b16 %v1392
  %v1465 = vunpack.c.h.b16 %v1392
  %v1466 = vunpack.c.l.b16 %v1393
  %v1467 = vunpack.c.h.b16 %v1393
  %v1468 = vunpack.c.l.b16 %v1394
  %v1469 = vunpack.c.h.b16 %v1394
  %v1470 = vunpack.c.l.b16 %v1395
  %v1471 = vunpack.c.h.b16 %v1395
  %v1472 = vunpack.c.l.b16 %v1396
  %v1473 = vunpack.c.h.b16 %v1396
  %v1474 = vunpack.c.l.b16 %v1397
  %v1475 = vunpack.c.h.b16 %v1397
  %v1476 = vunpack.c.l.b16 %v1398
  %v1477 = vunpack.c.h.b16 %v1398
  %v1478 = vunpack.c.l.b16 %v1399
  %v1479 = vunpack.c.h.b16 %v1399
  %v1480 = vunpack.c.l.b16 %v1400
  %v1481 = vunpack.c.h.b16 %v1400
  %v1482 = vunpack.c.l.b16 %v1401
  %v1483 = vunpack.c.h.b16 %v1401
  %v1484 = vunpack.c.l.b16 %v1402
  %v1485 = vunpack.c.h.b16 %v1402
  %v1486 = vunpack.c.l.b16 %v1403
  %v1487 = vunpack.c.h.b16 %v1403
  %v1488 = vunpack.c.l.b16 %v1404
  %v1489 = vunpack.c.h.b16 %v1404
  %v1490 = vpack.c.b16 %v1444, %v1442
  %v1491 = vpack.c.b16 %v1445, %v1443
  %v1492 = vpack.c.b16 %v1448, %v1446
  %v1493 = vpack.c.b16 %v1449, %v1447
  %v1494 = vpack.c.b16 %v1452, %v1450
  %v1495 = vpack.c.b16 %v1453, %v1451
  %v1496 = vpack.c.b16 %v1456, %v1454
  %v1497 = vpack.c.b16 %v1457, %v1455
  %v1498 = vpack.c.b16 %v1460, %v1458
  %v1499 = vpack.c.b16 %v1461, %v1459
  %v1500 = vpack.c.b16 %v1464, %v1462
  %v1501 = vpack.c.b16 %v1465, %v1463
  %v1502 = vpack.c.b16 %v1468, %v1466
  %v1503 = vpack.c.b16 %v1469, %v1467
  %v1504 = vpack.c.b16 %v1472, %v1470
  %v1505 = vpack.c.b16 %v1473, %v1471
  %v1506 = vpack.c.b16 %v1476, %v1474
  %v1507 = vpack.c.b16 %v1477, %v1475
  %v1508 = vpack.c.b16 %v1480, %v1478
  %v1509 = vpack.c.b16 %v1481, %v1479
  %v1510 = vpack.c.b16 %v1484, %v1482
  %v1511 = vpack.c.b16 %v1485, %v1483
  %v1512 = vpack.c.b16 %v1488, %v1486
  %v1513 = vpack.c.b16 %v1489, %v1487
  %v1539 = vsel %vm400, %v1377, 0
  %v1542 = vsel %vm400, %v1379, 0
  %1544 = vmatprep.subr.bf16.mxu0 %v1505
  %1545 = vmatpush1.bf16.msra.mxu0 %v1504
  %1546 = vmatprep.subr.bf16.mxu0 %v1503
  %1547 = vmatpush1.bf16.msra.mxu0 %v1502
  %1548 = vmatprep.subr.bf16.mxu0 %v1501
  %1549 = vmatpush1.bf16.msra.mxu0 %v1500
  %1550 = vmatprep.subr.bf16.mxu0 %v1499
  %1551 = vmatpush1.bf16.msra.mxu0 %v1498
  %1552 = vmatprep.subr.bf16.mxu0 %v1497
  %1553 = vmatpush1.bf16.msra.mxu0 %v1496
  %1554 = vmatprep.subr.bf16.mxu0 %v1495
  %1555 = vmatpush1.bf16.msra.mxu0 %v1494
  %1556 = vmatprep.subr.bf16.mxu0 %v1493
  %1557 = vmatpush1.bf16.msra.mxu0 %v1492
  %1558 = vmatprep.subr.bf16.mxu0 %v1491
  %1559 = vmatpush1.bf16.msra.mxu0 %v1490
  %1560 = vmatprep.subr.bf16.mxu0 0
  %1561 = vmatpush2.bf16.msra.mxu0 0
  %1562 = vmatprep.subr.bf16.mxu0 0
  %1563 = vmatpush2.bf16.msra.mxu0 0
  %1564 = vmatprep.subr.bf16.mxu0 0
  %1565 = vmatpush2.bf16.msra.mxu0 0
  %1566 = vmatprep.subr.bf16.mxu0 0
  %1567 = vmatpush2.bf16.msra.mxu0 0
  %1568 = vmatprep.subr.bf16.mxu0 %v1513
  %1569 = vmatpush2.bf16.msra.mxu0 %v1512
  %1570 = vmatprep.subr.bf16.mxu0 %v1511
  %1571 = vmatpush2.bf16.msra.mxu0 %v1510
  %1572 = vmatprep.subr.bf16.mxu0 %v1509
  %1573 = vmatpush2.bf16.msra.mxu0 %v1508
  %1574 = vmatprep.subr.bf16.mxu0 %v1507
  %1575 = vmatpush2.bf16.msra.mxu0 %v1506
  %1576 = vmatprep.mubr.bf16.mxu0 %v1539
  %1577 = vmatmul.mubr.bf16.gmra.mxu0 %v1376
  %v1578 = vpop.f32.mrf.mxu0
  %v1579 = vadd.f32 %v1411, %v1578
  %v1580 = vpop.f32.mrf.mxu0
  %v1581 = vadd.f32 %v1415, %v1580
  %v1582 = vpop.f32.mrf.mxu0
  %v1583 = vadd.f32 %v1411, %v1582
  %v1584 = vpop.f32.mrf.mxu0
  %v1585 = vadd.f32 %v1415, %v1584
  %1586 = vmatprep.mubr.bf16.mxu0 %v1542
  %1587 = vmatmul.mubr.bf16.gmra.mxu0 %v1378
  %v1588 = vpop.f32.mrf.mxu0
  %v1589 = vadd.f32 %v1411, %v1588
  %v1590 = vpop.f32.mrf.mxu0
  %v1591 = vadd.f32 %v1415, %v1590
  %v1592 = vpop.f32.mrf.mxu0
  %v1593 = vadd.f32 %v1411, %v1592
  %v1594 = vpop.f32.mrf.mxu0
  %v1595 = vadd.f32 %v1415, %v1594
  %1596 = vdwg.mxu0
  %v1597 = vmax.f32 %v1579, 0.0
  %v1598 = vmax.f32 %v1581, 0.0
  %v1599 = vmax.f32 %v1583, 0.0
  %v1600 = vmax.f32 %v1585, 0.0
  %v1601 = vmax.f32 %v1589, 0.0
  %v1602 = vmax.f32 %v1591, 0.0
  %v1603 = vmax.f32 %v1593, 0.0
  %v1604 = vmax.f32 %v1595, 0.0
  %v1605 = vpack.c.bf16 %v1599, %v1597
  %v1606 = vpack.c.bf16 %v1600, %v1598
  %v1607 = vpack.c.bf16 %v1603, %v1601
  %v1608 = vpack.c.bf16 %v1604, %v1602
  %s1609 = scalar_lea.vmem %s18, 256
  %v1610 = vld [vmem:[%s1609] sm:$0xf]
  %v1611 = vld [vmem:[%s1609 + $0x4] sm:$0xf]
  %v1612 = vld [vmem:[%s1609 + $0x8] sm:$0xf]
  %v1613 = vld [vmem:[%s1609 + $0xc] sm:$0xf]
  %v1614 = vld [vmem:[%s1609 + $0x10] sm:$0xf]
  %v1615 = vld [vmem:[%s1609 + $0x14] sm:$0xf]
  %v1616 = vld [vmem:[%s1609 + $0x18] sm:$0xf]
  %v1617 = vld [vmem:[%s1609 + $0x1c] sm:$0xf]
  %v1618 = vld [vmem:[%s1609 + $0x20] sm:$0xf]
  %v1619 = vld [vmem:[%s1609 + $0x24] sm:$0xf]
  %v1620 = vld [vmem:[%s1609 + $0x28] sm:$0xf]
  %v1621 = vld [vmem:[%s1609 + $0x2c] sm:$0xf]
  %v1622 = vld [vmem:[%s1609 + $0x30] sm:$0xf]
  %v1623 = vld [vmem:[%s1609 + $0x34] sm:$0xf]
  %v1624 = vld [vmem:[%s1609 + $0x38] sm:$0xf]
  %v1625 = vld [vmem:[%s1609 + $0x3c] sm:$0xf]
  %v1626 = vld [vmem:[%s1609 + $0x40] sm:$0xf]
  %v1627 = vld [vmem:[%s1609 + $0x44] sm:$0xf]
  %v1628 = vld [vmem:[%s1609 + $0x48] sm:$0xf]
  %v1629 = vld [vmem:[%s1609 + $0x4c] sm:$0xf]
  %v1630 = vld [vmem:[%s1609 + $0x50] sm:$0xf]
  %v1631 = vld [vmem:[%s1609 + $0x54] sm:$0xf]
  %v1632 = vld [vmem:[%s1609 + $0x58] sm:$0xf]
  %v1633 = vld [vmem:[%s1609 + $0x5c] sm:$0xf]
  %v1634 = vld [vmem:[%s1609 + $0x60] sm:$0xf]
  %v1635 = vld [vmem:[%s1609 + $0x64] sm:$0xf]
  %v1636 = vld [vmem:[%s1609 + $0x68] sm:$0xf]
  %v1637 = vld [vmem:[%s1609 + $0x6c] sm:$0xf]
  %v1638 = vld [vmem:[%s1609 + $0x70] sm:$0xf]
  %v1639 = vld [vmem:[%s1609 + $0x74] sm:$0xf]
  %v1640 = vld [vmem:[%s1609 + $0x78] sm:$0xf]
  %v1641 = vld [vmem:[%s1609 + $0x7c] sm:$0xf]
  %v1674 = vunpack.c.l.b16 %v1610
  %v1675 = vunpack.c.l.b16 %v1611
  %v1676 = vunpack.c.l.b16 %v1612
  %v1677 = vunpack.c.l.b16 %v1613
  %v1678 = vunpack.c.l.b16 %v1614
  %v1679 = vunpack.c.l.b16 %v1615
  %v1680 = vunpack.c.l.b16 %v1616
  %v1681 = vunpack.c.l.b16 %v1617
  %v1682 = vunpack.c.l.b16 %v1618
  %v1683 = vunpack.c.l.b16 %v1619
  %v1684 = vunpack.c.l.b16 %v1620
  %v1685 = vunpack.c.l.b16 %v1621
  %v1686 = vunpack.c.l.b16 %v1622
  %v1687 = vunpack.c.l.b16 %v1623
  %v1688 = vunpack.c.l.b16 %v1624
  %v1689 = vunpack.c.l.b16 %v1625
  %v1690 = vunpack.c.l.b16 %v1626
  %v1691 = vunpack.c.l.b16 %v1627
  %v1692 = vunpack.c.l.b16 %v1628
  %v1693 = vunpack.c.l.b16 %v1629
  %v1694 = vunpack.c.l.b16 %v1630
  %v1695 = vunpack.c.l.b16 %v1631
  %v1696 = vunpack.c.l.b16 %v1632
  %v1697 = vunpack.c.l.b16 %v1633
  %v1698 = vunpack.c.l.b16 %v1634
  %v1699 = vunpack.c.l.b16 %v1635
  %v1700 = vunpack.c.l.b16 %v1636
  %v1701 = vunpack.c.l.b16 %v1637
  %v1702 = vunpack.c.l.b16 %v1638
  %v1703 = vunpack.c.l.b16 %v1639
  %v1704 = vunpack.c.l.b16 %v1640
  %v1705 = vunpack.c.l.b16 %v1641
  %v1706 = vpack.c.b16 %v1675, %v1674
  %v1707 = vpack.c.b16 %v1677, %v1676
  %v1708 = vpack.c.b16 %v1679, %v1678
  %v1709 = vpack.c.b16 %v1681, %v1680
  %v1710 = vpack.c.b16 %v1683, %v1682
  %v1711 = vpack.c.b16 %v1685, %v1684
  %v1712 = vpack.c.b16 %v1687, %v1686
  %v1713 = vpack.c.b16 %v1689, %v1688
  %v1714 = vpack.c.b16 %v1691, %v1690
  %v1715 = vpack.c.b16 %v1693, %v1692
  %v1716 = vpack.c.b16 %v1695, %v1694
  %v1717 = vpack.c.b16 %v1697, %v1696
  %v1718 = vpack.c.b16 %v1699, %v1698
  %v1719 = vpack.c.b16 %v1701, %v1700
  %v1720 = vpack.c.b16 %v1703, %v1702
  %v1721 = vpack.c.b16 %v1705, %v1704
  %1738 = vmatprep.subr.bf16.mxu0 0
  %1739 = vmatpush1.bf16.msra.mxu0 %v1713
  %1740 = vmatprep.subr.bf16.mxu0 0
  %1741 = vmatpush1.bf16.msra.mxu0 %v1712
  %1742 = vmatprep.subr.bf16.mxu0 0
  %1743 = vmatpush1.bf16.msra.mxu0 %v1711
  %1744 = vmatprep.subr.bf16.mxu0 0
  %1745 = vmatpush1.bf16.msra.mxu0 %v1710
  %1746 = vmatprep.subr.bf16.mxu0 0
  %1747 = vmatpush1.bf16.msra.mxu0 %v1709
  %1748 = vmatprep.subr.bf16.mxu0 0
  %1749 = vmatpush1.bf16.msra.mxu0 %v1708
  %1750 = vmatprep.subr.bf16.mxu0 0
  %1751 = vmatpush1.bf16.msra.mxu0 %v1707
  %1752 = vmatprep.subr.bf16.mxu0 0
  %1753 = vmatpush1.bf16.msra.mxu0 %v1706
  %1754 = vmatprep.subr.bf16.mxu0 0
  %1755 = vmatpush2.bf16.msra.mxu0 %v1721
  %1756 = vmatprep.subr.bf16.mxu0 0
  %1757 = vmatpush2.bf16.msra.mxu0 %v1720
  %1758 = vmatprep.subr.bf16.mxu0 0
  %1759 = vmatpush2.bf16.msra.mxu0 %v1719
  %1760 = vmatprep.subr.bf16.mxu0 0
  %1761 = vmatpush2.bf16.msra.mxu0 %v1718
  %1762 = vmatprep.subr.bf16.mxu0 0
  %1763 = vmatpush2.bf16.msra.mxu0 %v1717
  %1764 = vmatprep.subr.bf16.mxu0 0
  %1765 = vmatpush2.bf16.msra.mxu0 %v1716
  %1766 = vmatprep.subr.bf16.mxu0 0
  %1767 = vmatpush2.bf16.msra.mxu0 %v1715
  %1768 = vmatprep.subr.bf16.mxu0 0
  %1769 = vmatpush2.bf16.msra.mxu0 %v1714
  %1770 = vmatprep.mubr.bf16.mxu0 %v1606
  %1771 = vmatmul.mubr.bf16.gmra.mxu0 %v1605
  %v1772 = vpop.f32.mrf.mxu0
  %v1773 = vadd.f32 %v322, %v1772
  %v1774 = vpop.f32.mrf.mxu0
  %v1775 = vpop.f32.mrf.mxu0
  %v1776 = vadd.f32 %v323, %v1775
  %v1777 = vpop.f32.mrf.mxu0
  %1778 = vmatprep.mubr.bf16.mxu0 %v1608
  %1779 = vmatmul.mubr.bf16.gmra.mxu0 %v1607
  %v1780 = vpop.f32.mrf.mxu0
  %v1781 = vadd.f32 %v324, %v1780
  %v1782 = vpop.f32.mrf.mxu0
  %v1783 = vpop.f32.mrf.mxu0
  %v1784 = vadd.f32 %v325, %v1783
  %v1785 = vpop.f32.mrf.mxu0
  %1786 = vdwg.mxu0
  %v1787 = vld [vmem:[%s9] sm:$0xf]
  %v1788 = vld [vmem:[%s9 + $0x4] sm:$0xf]
  %v1789 = vld [vmem:[%s9 + $0x8] sm:$0xf]
  %v1790 = vld [vmem:[%s9 + $0xc] sm:$0xf]
  %v1791 = vld [vmem:[%s9 + $0x10] sm:$0xf]
  %v1792 = vld [vmem:[%s9 + $0x14] sm:$0xf]
  %v1793 = vpack.c.bf16 %v323, %v322
  %v1794 = vpack.c.bf16 %v325, %v324
  %v1801 = vunpack.c.l.b16 %v1787
  %v1802 = vunpack.c.l.b16 %v1788
  %v1803 = vunpack.c.l.b16 %v1789
  %v1804 = vunpack.c.l.b16 %v1790
  %v1805 = vunpack.c.l.b16 %v1791
  %v1806 = vunpack.c.l.b16 %v1792
  %v1807 = vpack.c.b16 %v1802, %v1801
  %v1808 = vpack.c.b16 %v1804, %v1803
  %v1809 = vpack.c.b16 %v1806, %v1805
  %vm1810 = vcmask 261120
  %v1812 = vsel %vm1810, %v1807, 0
  %v1815 = vsel %vm1810, %v1808, 0
  %v1818 = vsel %vm1810, %v1809, 0
  %1820 = vmatprep.subr.bf16.mxu0 0
  %1821 = vmatpush1.bf16.msra.mxu0 0
  %1822 = vmatprep.subr.bf16.mxu0 0
  %1823 = vmatpush1.bf16.msra.mxu0 0
  %1824 = vmatprep.subr.bf16.mxu0 0
  %1825 = vmatpush1.bf16.msra.mxu0 0
  %1826 = vmatprep.subr.bf16.mxu0 0
  %1827 = vmatpush1.bf16.msra.mxu0 0
  %1828 = vmatprep.subr.bf16.mxu0 0
  %1829 = vmatpush1.bf16.msra.mxu0 0
  %1830 = vmatprep.subr.bf16.mxu0 0
  %1831 = vmatpush1.bf16.msra.mxu0 0
  %1832 = vmatprep.subr.bf16.mxu0 0
  %1833 = vmatpush1.bf16.msra.mxu0 %v1794
  %1834 = vmatprep.subr.bf16.mxu0 0
  %1835 = vmatpush1.bf16.msra.mxu0 %v1793
  %1836 = vmatprep.subr.bf16.mxu0 0
  %1837 = vmatpush2.bf16.msra.mxu0 0
  %1838 = vmatprep.subr.bf16.mxu0 0
  %1839 = vmatpush2.bf16.msra.mxu0 0
  %1840 = vmatprep.subr.bf16.mxu0 0
  %1841 = vmatpush2.bf16.msra.mxu0 0
  %1842 = vmatprep.subr.bf16.mxu0 0
  %1843 = vmatpush2.bf16.msra.mxu0 0
  %1844 = vmatprep.subr.bf16.mxu0 0
  %1845 = vmatpush2.bf16.msra.mxu0 0
  %1846 = vmatprep.subr.bf16.mxu0 0
  %1847 = vmatpush2.bf16.msra.mxu0 0
  %1848 = vmatprep.subr.bf16.mxu0 0
  %1849 = vmatpush2.bf16.msra.mxu0 0
  %1850 = vmatprep.subr.bf16.mxu0 0
  %1851 = vmatpush2.bf16.msra.mxu0 0
  %1852 = vmatprep.mubr.bf16.mxu0 0
  %1853 = vmatmul.mubr.bf16.gmra.mxu0 %v1812
  %v1854 = vpop.f32.mrf.mxu0
  %v1855 = vadd.f32 0.0, %v1854
  %v1856 = vpop.f32.mrf.mxu0
  %v1857 = vpop.f32.mrf.mxu0
  %v1858 = vadd.f32 0.0, %v1857
  %v1859 = vpop.f32.mrf.mxu0
  %1860 = vmatprep.mubr.bf16.mxu0 0
  %1861 = vmatmul.mubr.bf16.gmra.mxu0 %v1815
  %v1862 = vpop.f32.mrf.mxu0
  %v1863 = vadd.f32 0.0, %v1862
  %v1864 = vpop.f32.mrf.mxu0
  %v1865 = vpop.f32.mrf.mxu0
  %v1866 = vadd.f32 0.0, %v1865
  %v1867 = vpop.f32.mrf.mxu0
  %1868 = vmatprep.mubr.bf16.mxu0 0
  %1869 = vmatmul.mubr.bf16.gmra.mxu0 %v1818
  %v1870 = vpop.f32.mrf.mxu0
  %v1871 = vadd.f32 0.0, %v1870
  %v1872 = vpop.f32.mrf.mxu0
  %v1873 = vpop.f32.mrf.mxu0
  %v1874 = vadd.f32 0.0, %v1873
  %v1875 = vpop.f32.mrf.mxu0
  %1876 = vdwg.mxu0
  %v1877 = vpack.c.bf16 %v1858, %v1855
  %v1878 = vpack.c.bf16 %v1866, %v1863
  %v1879 = vpack.c.bf16 %v1874, %v1871
  %v1880 = vld [vmem:[%s7] sm:$0xf]
  %v1881 = vld [vmem:[%s7 + $0x4] sm:$0xf]
  %v1882 = vld [vmem:[%s7 + $0x8] sm:$0xf]
  %v1883 = vld [vmem:[%s7 + $0xc] sm:$0xf]
  %v1884 = vld [vmem:[%s7 + $0x10] sm:$0xf]
  %v1885 = vld [vmem:[%s7 + $0x14] sm:$0xf]
  %v1886 = vld [vmem:[%s7 + $0x18] sm:$0xf]
  %v1887 = vld [vmem:[%s7 + $0x1c] sm:$0xf]
  %v1896 = vunpack.c.l.b16 %v1880
  %v1897 = vunpack.c.l.b16 %v1881
  %v1898 = vunpack.c.l.b16 %v1882
  %v1899 = vunpack.c.l.b16 %v1883
  %v1900 = vunpack.c.l.b16 %v1884
  %v1901 = vunpack.c.l.b16 %v1885
  %v1902 = vunpack.c.l.b16 %v1886
  %v1903 = vunpack.c.l.b16 %v1887
  %v1904 = vpack.c.b16 %v1897, %v1896
  %v1905 = vpack.c.b16 %v1899, %v1898
  %v1906 = vpack.c.b16 %v1901, %v1900
  %v1907 = vpack.c.b16 %v1903, %v1902
  %v1913 = vsel %vm400, %v1877, 0
  %v1916 = vsel %vm400, %v1878, 0
  %v1919 = vsel %vm400, %v1879, 0
  %1921 = vmatprep.subr.bf16.mxu0 0
  %1922 = vmatpush1.bf16.msra.mxu0 0
  %1923 = vmatprep.subr.bf16.mxu0 0
  %1924 = vmatpush1.bf16.msra.mxu0 0
  %1925 = vmatprep.subr.bf16.mxu0 0
  %1926 = vmatpush1.bf16.msra.mxu0 0
  %1927 = vmatprep.subr.bf16.mxu0 0
  %1928 = vmatpush1.bf16.msra.mxu0 0
  %1929 = vmatprep.subr.bf16.mxu0 0
  %1930 = vmatpush1.bf16.msra.mxu0 %v1907
  %1931 = vmatprep.subr.bf16.mxu0 0
  %1932 = vmatpush1.bf16.msra.mxu0 %v1906
  %1933 = vmatprep.subr.bf16.mxu0 0
  %1934 = vmatpush1.bf16.msra.mxu0 %v1905
  %1935 = vmatprep.subr.bf16.mxu0 0
  %1936 = vmatpush1.bf16.msra.mxu0 %v1904
  %1937 = vmatprep.subr.bf16.mxu0 0
  %1938 = vmatpush2.bf16.msra.mxu0 0
  %1939 = vmatprep.subr.bf16.mxu0 0
  %1940 = vmatpush2.bf16.msra.mxu0 0
  %1941 = vmatprep.subr.bf16.mxu0 0
  %1942 = vmatpush2.bf16.msra.mxu0 0
  %1943 = vmatprep.subr.bf16.mxu0 0
  %1944 = vmatpush2.bf16.msra.mxu0 0
  %1945 = vmatprep.subr.bf16.mxu0 0
  %1946 = vmatpush2.bf16.msra.mxu0 0
  %1947 = vmatprep.subr.bf16.mxu0 0
  %1948 = vmatpush2.bf16.msra.mxu0 0
  %1949 = vmatprep.subr.bf16.mxu0 0
  %1950 = vmatpush2.bf16.msra.mxu0 0
  %1951 = vmatprep.subr.bf16.mxu0 0
  %1952 = vmatpush2.bf16.msra.mxu0 0
  %1953 = vmatprep.mubr.bf16.mxu0 0
  %1954 = vmatmul.mubr.bf16.gmra.mxu0 %v1913
  %v1955 = vpop.f32.mrf.mxu0
  %v1956 = vadd.f32 %v316, %v1955
  %v1957 = vpop.f32.mrf.mxu0
  %v1958 = vpop.f32.mrf.mxu0
  %v1959 = vadd.f32 %v317, %v1958
  %v1960 = vpop.f32.mrf.mxu0
  %1961 = vmatprep.mubr.bf16.mxu0 0
  %1962 = vmatmul.mubr.bf16.gmra.mxu0 %v1916
  %v1963 = vpop.f32.mrf.mxu0
  %v1964 = vadd.f32 %v318, %v1963
  %v1965 = vpop.f32.mrf.mxu0
  %v1966 = vpop.f32.mrf.mxu0
  %v1967 = vadd.f32 %v319, %v1966
  %v1968 = vpop.f32.mrf.mxu0
  %1969 = vmatprep.mubr.bf16.mxu0 0
  %1970 = vmatmul.mubr.bf16.gmra.mxu0 %v1919
  %v1971 = vpop.f32.mrf.mxu0
  %v1972 = vadd.f32 %v320, %v1971
  %v1973 = vpop.f32.mrf.mxu0
  %v1974 = vpop.f32.mrf.mxu0
  %v1975 = vadd.f32 %v321, %v1974
  %v1976 = vpop.f32.mrf.mxu0
  %1977 = vdwg.mxu0
  %1980 = vrot.lane.b32.xlu0 %v1956, 96
  %v1981 = vpop.permute.xlu0 %1980
  %1982 = vrot.lane.b32.xlu0 %v1959, 96
  %v1983 = vpop.permute.xlu0 %1982
  %v1986 = vmax.f32 %v1956, %v1981
  %v1987 = vmax.f32 %v1959, %v1983
  %1988 = vrot.lane.b32.xlu0 %v1956, 64
  %v1989 = vpop.permute.xlu0 %1988
  %1990 = vrot.lane.b32.xlu0 %v1959, 64
  %v1991 = vpop.permute.xlu0 %1990
  %v1994 = vmax.f32 %v1986, %v1989
  %v1995 = vmax.f32 %v1987, %v1991
  %v1996 = vmax.f32 %v1994, %v1964
  %v1997 = vmax.f32 %v1995, %v1967
  %2000 = vrot.lane.b32.xlu0 %v1964, 96
  %v2001 = vpop.permute.xlu0 %2000
  %2002 = vrot.lane.b32.xlu0 %v1967, 96
  %v2003 = vpop.permute.xlu0 %2002
  %v2006 = vmax.f32 %v1996, %v2001
  %v2007 = vmax.f32 %v1997, %v2003
  %2008 = vrot.lane.b32.xlu0 %v1964, 64
  %v2009 = vpop.permute.xlu0 %2008
  %2010 = vrot.lane.b32.xlu0 %v1967, 64
  %v2011 = vpop.permute.xlu0 %2010
  %v2014 = vmax.f32 %v2006, %v2009
  %v2015 = vmax.f32 %v2007, %v2011
  %v2016 = vmax.f32 %v2014, %v1972
  %v2017 = vmax.f32 %v2015, %v1975
  %2020 = vrot.lane.b32.xlu0 %v1972, 96
  %v2021 = vpop.permute.xlu0 %2020
  %2022 = vrot.lane.b32.xlu0 %v1975, 96
  %v2023 = vpop.permute.xlu0 %2022
  %v2026 = vmax.f32 %v2016, %v2021
  %v2027 = vmax.f32 %v2017, %v2023
  %2028 = vrot.lane.b32.xlu0 %v1972, 64
  %v2029 = vpop.permute.xlu0 %2028
  %2030 = vrot.lane.b32.xlu0 %v1975, 64
  %v2031 = vpop.permute.xlu0 %2030
  %v2034 = vmax.f32 %v2026, %v2029
  %v2035 = vmax.f32 %v2027, %v2031
  %v2036 = vld [vmem:[%s13] sm:$0x1]
  %v2037 = vld [vmem:[%s13 + $0x1] sm:$0x1]
  %v2038 = vlaneseq
  %v2039 = vshrl.u32 %v2038, 7
  %v2040 = vsub.s32 0, %v2039
  %v2041 = vrot.slane %v2036, %v2040
  %v2042 = vmul.f32 %v2034, %v2041
  %v2043 = vmul.f32 %v2035, %v2041
  %v2044 = vlaneseq
  %v2045 = vshrl.u32 %v2044, 7
  %v2046 = vsub.s32 0, %v2045
  %v2047 = vrot.slane %v2037, %v2046
  %v2048 = vadd.f32 %v2042, %v2047
  %v2049 = vadd.f32 %v2043, %v2047
  %v2050 = vmax.f32 %v2048, 0.0
  %v2051 = vmax.f32 %v2049, 0.0
  %v2053 = vrot.slane %v2051, 7
  %v2056 = vrot.slane %v2050, 7
  %v2057 = vsel %vm354, %v2056, %v2053
  %v2060 = vsel %vm354, %v2053, %v2056
  %v2061 = vmul.f32 %v2060, %v118
  %v2062 = vmul.f32 %v2057, %v119
  %v2063 = vrot.slane %v2050, 1
  %v2064 = vrot.slane %v2051, 1
  %v2065 = vsel %vm370, %v2063, %v2064
  %v2069 = vsel %vm370, %v2064, %v2063
  %v2070 = vmul.f32 %v2065, %v124
  %v2071 = vmul.f32 %v2069, %v125
  %2072 = vrot.lane.b32.xlu0 %v2050, 32
  %v2073 = vpop.permute.xlu0 %2072
  %2074 = vrot.lane.b32.xlu0 %v2051, 32
  %v2075 = vpop.permute.xlu0 %2074
  %2080 = vrot.lane.b32.xlu0 %v2070, 64
  %v2081 = vpop.permute.xlu0 %2080
  %2082 = vrot.lane.b32.xlu0 %v2071, 64
  %v2083 = vpop.permute.xlu0 %2082
  %v2086 = vsel %vm1810, %v2061, %v2073
  %v2087 = vsel %vm1810, %v2062, %v2075
  %v2088 = vsel %vm400, %v2086, %v2081
  %v2089 = vsel %vm400, %v2087, %v2083
  %v2090 = vpack.c.bf16 %v2089, %v2088
  %v2091 = vld [vmem:[%s3] sm:$0xf]
  %v2092 = vld [vmem:[%s3 + $0x4] sm:$0xf]
  %v2093 = vld [vmem:[%s3 + $0x8] sm:$0xf]
  %v2094 = vld [vmem:[%s3 + $0xc] sm:$0xf]
  %v2095 = vld [vmem:[%s3 + $0x10] sm:$0xf]
  %v2096 = vld [vmem:[%s3 + $0x14] sm:$0xf]
  %v2097 = vld [vmem:[%s3 + $0x18] sm:$0xf]
  %v2098 = vld [vmem:[%s3 + $0x1c] sm:$0xf]
  %v2099 = vld [vmem:[%s3 + $0x20] sm:$0xf]
  %v2100 = vld [vmem:[%s3 + $0x24] sm:$0xf]
  %v2101 = vld [vmem:[%s3 + $0x28] sm:$0xf]
  %v2102 = vld [vmem:[%s3 + $0x2c] sm:$0xf]
  %v2103 = vld [vmem:[%s6] sm:$0x1]
  %v2104 = vlaneseq
  %v2105 = vshrl.u32 %v2104, 7
  %v2106 = vsub.s32 0, %v2105
  %v2107 = vrot.slane %v2103, %v2106
  %v2120 = vunpack.c.l.b16 %v2091
  %v2121 = vunpack.c.l.b16 %v2092
  %v2122 = vunpack.c.l.b16 %v2093
  %v2123 = vunpack.c.l.b16 %v2094
  %v2124 = vunpack.c.l.b16 %v2095
  %v2125 = vunpack.c.l.b16 %v2096
  %v2126 = vunpack.c.l.b16 %v2097
  %v2127 = vunpack.c.l.b16 %v2098
  %v2128 = vunpack.c.l.b16 %v2099
  %v2129 = vunpack.c.l.b16 %v2100
  %v2130 = vunpack.c.l.b16 %v2101
  %v2131 = vunpack.c.l.b16 %v2102
  %v2132 = vpack.c.b16 %v2121, %v2120
  %v2133 = vpack.c.b16 %v2123, %v2122
  %v2134 = vpack.c.b16 %v2125, %v2124
  %v2135 = vpack.c.b16 %v2127, %v2126
  %v2136 = vpack.c.b16 %v2129, %v2128
  %v2137 = vpack.c.b16 %v2131, %v2130
  %vm2144 = vcmask 785408
  %v2146 = vsel %vm2144, %v2090, 0
  %2148 = vmatprep.subr.bf16.mxu0 0
  %2149 = vmatpush1.bf16.msra.mxu0 0
  %2150 = vmatprep.subr.bf16.mxu0 0
  %2151 = vmatpush1.bf16.msra.mxu0 0
  %2152 = vmatprep.subr.bf16.mxu0 0
  %2153 = vmatpush1.bf16.msra.mxu0 %v2137
  %2154 = vmatprep.subr.bf16.mxu0 0
  %2155 = vmatpush1.bf16.msra.mxu0 %v2136
  %2156 = vmatprep.subr.bf16.mxu0 0
  %2157 = vmatpush1.bf16.msra.mxu0 %v2135
  %2158 = vmatprep.subr.bf16.mxu0 0
  %2159 = vmatpush1.bf16.msra.mxu0 %v2134
  %2160 = vmatprep.subr.bf16.mxu0 0
  %2161 = vmatpush1.bf16.msra.mxu0 %v2133
  %2162 = vmatprep.subr.bf16.mxu0 0
  %2163 = vmatpush1.bf16.msra.mxu0 %v2132
  %2164 = vmatprep.subr.bf16.mxu0 0
  %2165 = vmatpush2.bf16.msra.mxu0 0
  %2166 = vmatprep.subr.bf16.mxu0 0
  %2167 = vmatpush2.bf16.msra.mxu0 0
  %2168 = vmatprep.subr.bf16.mxu0 0
  %2169 = vmatpush2.bf16.msra.mxu0 0
  %2170 = vmatprep.subr.bf16.mxu0 0
  %2171 = vmatpush2.bf16.msra.mxu0 0
  %2172 = vmatprep.subr.bf16.mxu0 0
  %2173 = vmatpush2.bf16.msra.mxu0 0
  %2174 = vmatprep.subr.bf16.mxu0 0
  %2175 = vmatpush2.bf16.msra.mxu0 0
  %2176 = vmatprep.subr.bf16.mxu0 0
  %2177 = vmatpush2.bf16.msra.mxu0 0
  %2178 = vmatprep.subr.bf16.mxu0 0
  %2179 = vmatpush2.bf16.msra.mxu0 0
  %2180 = vmatprep.mubr.bf16.mxu0 0
  %2181 = vmatmul.mubr.bf16.gmra.mxu0 %v2146
  %v2182 = vpop.f32.mrf.mxu0
  %v2183 = vadd.f32 %v2107, %v2182
  %v2184 = vpop.f32.mrf.mxu0
  %v2185 = vpop.f32.mrf.mxu0
  %v2186 = vadd.f32 %v2107, %v2185
  %v2187 = vpop.f32.mrf.mxu0
  %2188 = vdwg.mxu0
  %v2189 = vmax.f32 %v2183, 0.0
  %v2190 = vmax.f32 %v2186, 0.0
  %v2191 = vpack.c.bf16 %v2190, %v2189
  %v2192 = vld [vmem:[%s20] sm:$0xf]
  %v2193 = vld [vmem:[%s20 + $0x4] sm:$0xf]
  %v2194 = vld [vmem:[%s20 + $0x8] sm:$0xf]
  %v2195 = vld [vmem:[%s20 + $0xc] sm:$0xf]
  %v2196 = vld [vmem:[%s20 + $0x10] sm:$0xf]
  %v2197 = vld [vmem:[%s20 + $0x14] sm:$0xf]
  %v2198 = vld [vmem:[%s20 + $0x18] sm:$0xf]
  %v2199 = vld [vmem:[%s20 + $0x1c] sm:$0xf]
  %v2200 = vld [vmem:[%s20 + $0x20] sm:$0xf]
  %v2201 = vld [vmem:[%s20 + $0x24] sm:$0xf]
  %v2202 = vld [vmem:[%s20 + $0x28] sm:$0xf]
  %v2203 = vld [vmem:[%s20 + $0x2c] sm:$0xf]
  %v2204 = vld [vmem:[%s20 + $0x30] sm:$0xf]
  %v2205 = vld [vmem:[%s20 + $0x34] sm:$0xf]
  %v2206 = vld [vmem:[%s20 + $0x38] sm:$0xf]
  %v2207 = vld [vmem:[%s20 + $0x3c] sm:$0xf]
  %v2224 = vunpack.c.l.b16 %v2192
  %v2225 = vunpack.c.l.b16 %v2193
  %v2226 = vunpack.c.l.b16 %v2194
  %v2227 = vunpack.c.l.b16 %v2195
  %v2228 = vunpack.c.l.b16 %v2196
  %v2229 = vunpack.c.l.b16 %v2197
  %v2230 = vunpack.c.l.b16 %v2198
  %v2231 = vunpack.c.l.b16 %v2199
  %v2232 = vunpack.c.l.b16 %v2200
  %v2233 = vunpack.c.l.b16 %v2201
  %v2234 = vunpack.c.l.b16 %v2202
  %v2235 = vunpack.c.l.b16 %v2203
  %v2236 = vunpack.c.l.b16 %v2204
  %v2237 = vunpack.c.l.b16 %v2205
  %v2238 = vunpack.c.l.b16 %v2206
  %v2239 = vunpack.c.l.b16 %v2207
  %v2240 = vpack.c.b16 %v2225, %v2224
  %v2241 = vpack.c.b16 %v2227, %v2226
  %v2242 = vpack.c.b16 %v2229, %v2228
  %v2243 = vpack.c.b16 %v2231, %v2230
  %v2244 = vpack.c.b16 %v2233, %v2232
  %v2245 = vpack.c.b16 %v2235, %v2234
  %v2246 = vpack.c.b16 %v2237, %v2236
  %v2247 = vpack.c.b16 %v2239, %v2238
  %2256 = vmatprep.subr.bf16.mxu0 0
  %2257 = vmatpush1.bf16.msra.mxu0 %v2247
  %2258 = vmatprep.subr.bf16.mxu0 0
  %2259 = vmatpush1.bf16.msra.mxu0 %v2246
  %2260 = vmatprep.subr.bf16.mxu0 0
  %2261 = vmatpush1.bf16.msra.mxu0 %v2245
  %2262 = vmatprep.subr.bf16.mxu0 0
  %2263 = vmatpush1.bf16.msra.mxu0 %v2244
  %2264 = vmatprep.subr.bf16.mxu0 0
  %2265 = vmatpush1.bf16.msra.mxu0 %v2243
  %2266 = vmatprep.subr.bf16.mxu0 0
  %2267 = vmatpush1.bf16.msra.mxu0 %v2242
  %2268 = vmatprep.subr.bf16.mxu0 0
  %2269 = vmatpush1.bf16.msra.mxu0 %v2241
  %2270 = vmatprep.subr.bf16.mxu0 0
  %2271 = vmatpush1.bf16.msra.mxu0 %v2240
  %2272 = vmatprep.subr.bf16.mxu0 0
  %2273 = vmatpush2.bf16.msra.mxu0 0
  %2274 = vmatprep.subr.bf16.mxu0 0
  %2275 = vmatpush2.bf16.msra.mxu0 0
  %2276 = vmatprep.subr.bf16.mxu0 0
  %2277 = vmatpush2.bf16.msra.mxu0 0
  %2278 = vmatprep.subr.bf16.mxu0 0
  %2279 = vmatpush2.bf16.msra.mxu0 0
  %2280 = vmatprep.subr.bf16.mxu0 0
  %2281 = vmatpush2.bf16.msra.mxu0 0
  %2282 = vmatprep.subr.bf16.mxu0 0
  %2283 = vmatpush2.bf16.msra.mxu0 0
  %2284 = vmatprep.subr.bf16.mxu0 0
  %2285 = vmatpush2.bf16.msra.mxu0 0
  %2286 = vmatprep.subr.bf16.mxu0 0
  %2287 = vmatpush2.bf16.msra.mxu0 0
  %2288 = vmatprep.mubr.bf16.mxu0 0
  %2289 = vmatmul.mubr.bf16.gmra.mxu0 %v2191
  %v2290 = vpop.f32.mrf.mxu0
  %v2291 = vadd.f32 %v2034, %v2290
  %v2292 = vpop.f32.mrf.mxu0
  %v2293 = vpop.f32.mrf.mxu0
  %v2294 = vadd.f32 %v2035, %v2293
  %v2295 = vpop.f32.mrf.mxu0
  %2296 = vdwg.mxu0
  %v2297 = vld [vmem:[%s10] sm:$0xf]
  %v2298 = vld [vmem:[%s10 + $0x4] sm:$0xf]
  %v2299 = vld [vmem:[%s10 + $0x8] sm:$0xf]
  %v2300 = vpack.c.bf16 %v2294, %v2291
  %v2304 = vunpack.c.l.b16 %v2297
  %v2305 = vunpack.c.l.b16 %v2298
  %v2306 = vunpack.c.l.b16 %v2299
  %v2307 = vpack.c.b16 %v2305, %v2304
  %v2308 = vpack.c.b16 %v2306, %v2306
  %vm2309 = vcmask 130048
  %v2311 = vsel %vm2309, %v2307, 0
  %v2314 = vsel %vm2309, %v2308, 0
  %2316 = vmatprep.subr.bf16.mxu0 0
  %2317 = vmatpush1.bf16.msra.mxu0 0
  %2318 = vmatprep.subr.bf16.mxu0 0
  %2319 = vmatpush1.bf16.msra.mxu0 0
  %2320 = vmatprep.subr.bf16.mxu0 0
  %2321 = vmatpush1.bf16.msra.mxu0 0
  %2322 = vmatprep.subr.bf16.mxu0 0
  %2323 = vmatpush1.bf16.msra.mxu0 0
  %2324 = vmatprep.subr.bf16.mxu0 0
  %2325 = vmatpush1.bf16.msra.mxu0 0
  %2326 = vmatprep.subr.bf16.mxu0 0
  %2327 = vmatpush1.bf16.msra.mxu0 0
  %2328 = vmatprep.subr.bf16.mxu0 0
  %2329 = vmatpush1.bf16.msra.mxu0 0
  %2330 = vmatprep.subr.bf16.mxu0 0
  %2331 = vmatpush1.bf16.msra.mxu0 %v2300
  %2332 = vmatprep.subr.bf16.mxu0 0
  %2333 = vmatpush2.bf16.msra.mxu0 0
  %2334 = vmatprep.subr.bf16.mxu0 0
  %2335 = vmatpush2.bf16.msra.mxu0 0
  %2336 = vmatprep.subr.bf16.mxu0 0
  %2337 = vmatpush2.bf16.msra.mxu0 0
  %2338 = vmatprep.subr.bf16.mxu0 0
  %2339 = vmatpush2.bf16.msra.mxu0 0
  %2340 = vmatprep.subr.bf16.mxu0 0
  %2341 = vmatpush2.bf16.msra.mxu0 0
  %2342 = vmatprep.subr.bf16.mxu0 0
  %2343 = vmatpush2.bf16.msra.mxu0 0
  %2344 = vmatprep.subr.bf16.mxu0 0
  %2345 = vmatpush2.bf16.msra.mxu0 0
  %2346 = vmatprep.subr.bf16.mxu0 0
  %2347 = vmatpush2.bf16.msra.mxu0 0
  %2348 = vmatprep.mubr.bf16.mxu0 0
  %2349 = vmatmul.mubr.bf16.gmra.mxu0 %v2311
  %v2350 = vpop.f32.mrf.mxu0
  %v2351 = vadd.f32 0.0, %v2350
  %v2352 = vpop.f32.mrf.mxu0
  %v2353 = vpop.f32.mrf.mxu0
  %v2354 = vadd.f32 0.0, %v2353
  %v2355 = vpop.f32.mrf.mxu0
  %2356 = vmatprep.mubr.bf16.mxu0 0
  %2357 = vmatmul.mubr.bf16.gmra.mxu0 %v2314
  %v2358 = vpop.f32.mrf.mxu0
  %v2359 = vadd.f32 0.0, %v2358
  %v2360 = vpop.f32.mrf.mxu0
  %v2361 = vpop.f32.mrf.mxu0
  %v2362 = vpop.f32.mrf.mxu0
  %2363 = vdwg.mxu0
  %v2364 = vpack.c.bf16 %v2354, %v2351
  %v2365 = vpack.c.bf16 %v2359, %v2359
  %v2366 = vld [vmem:[%s8] sm:$0xf]
  %v2367 = vld [vmem:[%s8 + $0x4] sm:$0xf]
  %v2368 = vld [vmem:[%s8 + $0x8] sm:$0xf]
  %v2369 = vld [vmem:[%s8 + $0xc] sm:$0xf]
  %v2374 = vunpack.c.l.b16 %v2366
  %v2375 = vunpack.c.l.b16 %v2367
  %v2376 = vunpack.c.l.b16 %v2368
  %v2377 = vunpack.c.l.b16 %v2369
  %v2378 = vpack.c.b16 %v2375, %v2374
  %v2379 = vpack.c.b16 %v2377, %v2376
  %v2383 = vsel %vm1810, %v2364, 0
  %v2386 = vsel %vm1810, %v2365, 0
  %2388 = vmatprep.subr.bf16.mxu0 0
  %2389 = vmatpush1.bf16.msra.mxu0 0
  %2390 = vmatprep.subr.bf16.mxu0 0
  %2391 = vmatpush1.bf16.msra.mxu0 0
  %2392 = vmatprep.subr.bf16.mxu0 0
  %2393 = vmatpush1.bf16.msra.mxu0 0
  %2394 = vmatprep.subr.bf16.mxu0 0
  %2395 = vmatpush1.bf16.msra.mxu0 0
  %2396 = vmatprep.subr.bf16.mxu0 0
  %2397 = vmatpush1.bf16.msra.mxu0 0
  %2398 = vmatprep.subr.bf16.mxu0 0
  %2399 = vmatpush1.bf16.msra.mxu0 0
  %2400 = vmatprep.subr.bf16.mxu0 0
  %2401 = vmatpush1.bf16.msra.mxu0 %v2379
  %2402 = vmatprep.subr.bf16.mxu0 0
  %2403 = vmatpush1.bf16.msra.mxu0 %v2378
  %2404 = vmatprep.subr.bf16.mxu0 0
  %2405 = vmatpush2.bf16.msra.mxu0 0
  %2406 = vmatprep.subr.bf16.mxu0 0
  %2407 = vmatpush2.bf16.msra.mxu0 0
  %2408 = vmatprep.subr.bf16.mxu0 0
  %2409 = vmatpush2.bf16.msra.mxu0 0
  %2410 = vmatprep.subr.bf16.mxu0 0
  %2411 = vmatpush2.bf16.msra.mxu0 0
  %2412 = vmatprep.subr.bf16.mxu0 0
  %2413 = vmatpush2.bf16.msra.mxu0 0
  %2414 = vmatprep.subr.bf16.mxu0 0
  %2415 = vmatpush2.bf16.msra.mxu0 0
  %2416 = vmatprep.subr.bf16.mxu0 0
  %2417 = vmatpush2.bf16.msra.mxu0 0
  %2418 = vmatprep.subr.bf16.mxu0 0
  %2419 = vmatpush2.bf16.msra.mxu0 0
  %2420 = vmatprep.mubr.bf16.mxu0 0
  %2421 = vmatmul.mubr.bf16.gmra.mxu0 %v2383
  %v2422 = vpop.f32.mrf.mxu0
  %v2423 = vadd.f32 %v239, %v2422
  %v2424 = vpop.f32.mrf.mxu0
  %v2425 = vpop.f32.mrf.mxu0
  %v2426 = vadd.f32 %v240, %v2425
  %v2427 = vpop.f32.mrf.mxu0
  %2428 = vmatprep.mubr.bf16.mxu0 0
  %2429 = vmatmul.mubr.bf16.gmra.mxu0 %v2386
  %v2430 = vpop.f32.mrf.mxu0
  %v2431 = vadd.f32 %v241, %v2430
  %v2432 = vpop.f32.mrf.mxu0
  %v2433 = vpop.f32.mrf.mxu0
  %v2434 = vpop.f32.mrf.mxu0
  %2435 = vdwg.mxu0
  %2437 = vrot.lane.b32.xlu0 %v2423, 112
  %v2438 = vpop.permute.xlu0 %2437
  %v2440 = vmax.f32 %v2423, %v2438
  %2441 = vrot.lane.b32.xlu0 %v2423, 96
  %v2442 = vpop.permute.xlu0 %2441
  %v2444 = vmax.f32 %v2440, %v2442
  %v2445 = vmax.f32 %v2444, %v2426
  %2447 = vrot.lane.b32.xlu0 %v2426, 112
  %v2448 = vpop.permute.xlu0 %2447
  %v2450 = vmax.f32 %v2445, %v2448
  %2451 = vrot.lane.b32.xlu0 %v2426, 96
  %v2452 = vpop.permute.xlu0 %2451
  %v2454 = vmax.f32 %v2450, %v2452
  %v2455 = vmax.f32 %v2454, %v2431
  %2457 = vrot.lane.b32.xlu0 %v2431, 112
  %v2458 = vpop.permute.xlu0 %2457
  %v2460 = vmax.f32 %v2455, %v2458
  %2461 = vrot.lane.b32.xlu0 %v2431, 96
  %v2462 = vpop.permute.xlu0 %2461
  %v2464 = vmax.f32 %v2460, %v2462
  %v2465 = vld [vmem:[%s12] sm:$0x1]
  %v2466 = vld [vmem:[%s12 + $0x1] sm:$0x1]
  %v2467 = vlaneseq
  %v2468 = vshrl.u32 %v2467, 7
  %v2469 = vsub.s32 0, %v2468
  %v2470 = vrot.slane %v2465, %v2469
  %v2471 = vmul.f32 %v2464, %v2470
  %v2472 = vlaneseq
  %v2473 = vshrl.u32 %v2472, 7
  %v2474 = vsub.s32 0, %v2473
  %v2475 = vrot.slane %v2466, %v2474
  %v2476 = vadd.f32 %v2471, %v2475
  %v2477 = vmax.f32 %v2476, 0.0
  %v2479 = vrot.slane %v2477, 7
  %v2481 = vsel %vm354, %v2479, %v2479
  %v2482 = vmul.f32 %v2481, %v85
  %v2483 = vrot.slane %v2477, 1
  %v2485 = vsel %vm370, %v2483, %v2483
  %v2486 = vmul.f32 %v2485, %v88
  %2487 = vrot.lane.b32.xlu0 %v2477, 16
  %v2488 = vpop.permute.xlu0 %2487
  %2491 = vrot.lane.b32.xlu0 %v2486, 32
  %v2492 = vpop.permute.xlu0 %2491
  %v2494 = vsel %vm2309, %v2482, %v2488
  %v2495 = vsel %vm1810, %v2494, %v2492
  %v2496 = vpack.c.bf16 %v2495, %v2495
  %v2497 = vld [vmem:[%s2] sm:$0xf]
  %v2498 = vld [vmem:[%s2 + $0x4] sm:$0xf]
  %v2499 = vld [vmem:[%s2 + $0x8] sm:$0xf]
  %v2500 = vld [vmem:[%s2 + $0xc] sm:$0xf]
  %v2501 = vld [vmem:[%s2 + $0x10] sm:$0xf]
  %v2502 = vld [vmem:[%s2 + $0x14] sm:$0xf]
  %v2503 = vld [vmem:[%s5] sm:$0x1]
  %v2504 = vlaneseq
  %v2505 = vshrl.u32 %v2504, 7
  %v2506 = vsub.s32 0, %v2505
  %v2507 = vrot.slane %v2503, %v2506
  %v2514 = vunpack.c.l.b16 %v2497
  %v2515 = vunpack.c.l.b16 %v2498
  %v2516 = vunpack.c.l.b16 %v2499
  %v2517 = vunpack.c.l.b16 %v2500
  %v2518 = vunpack.c.l.b16 %v2501
  %v2519 = vunpack.c.l.b16 %v2502
  %v2520 = vpack.c.b16 %v2515, %v2514
  %v2521 = vpack.c.b16 %v2517, %v2516
  %v2522 = vpack.c.b16 %v2519, %v2518
  %vm2526 = vcmask 392192
  %v2528 = vsel %vm2526, %v2496, 0
  %2530 = vmatprep.subr.bf16.mxu0 0
  %2531 = vmatpush1.bf16.msra.mxu0 0
  %2532 = vmatprep.subr.bf16.mxu0 0
  %2533 = vmatpush1.bf16.msra.mxu0 0
  %2534 = vmatprep.subr.bf16.mxu0 0
  %2535 = vmatpush1.bf16.msra.mxu0 0
  %2536 = vmatprep.subr.bf16.mxu0 0
  %2537 = vmatpush1.bf16.msra.mxu0 0
  %2538 = vmatprep.subr.bf16.mxu0 0
  %2539 = vmatpush1.bf16.msra.mxu0 0
  %2540 = vmatprep.subr.bf16.mxu0 0
  %2541 = vmatpush1.bf16.msra.mxu0 %v2522
  %2542 = vmatprep.subr.bf16.mxu0 0
  %2543 = vmatpush1.bf16.msra.mxu0 %v2521
  %2544 = vmatprep.subr.bf16.mxu0 0
  %2545 = vmatpush1.bf16.msra.mxu0 %v2520
  %2546 = vmatprep.subr.bf16.mxu0 0
  %2547 = vmatpush2.bf16.msra.mxu0 0
  %2548 = vmatprep.subr.bf16.mxu0 0
  %2549 = vmatpush2.bf16.msra.mxu0 0
  %2550 = vmatprep.subr.bf16.mxu0 0
  %2551 = vmatpush2.bf16.msra.mxu0 0
  %2552 = vmatprep.subr.bf16.mxu0 0
  %2553 = vmatpush2.bf16.msra.mxu0 0
  %2554 = vmatprep.subr.bf16.mxu0 0
  %2555 = vmatpush2.bf16.msra.mxu0 0
  %2556 = vmatprep.subr.bf16.mxu0 0
  %2557 = vmatpush2.bf16.msra.mxu0 0
  %2558 = vmatprep.subr.bf16.mxu0 0
  %2559 = vmatpush2.bf16.msra.mxu0 0
  %2560 = vmatprep.subr.bf16.mxu0 0
  %2561 = vmatpush2.bf16.msra.mxu0 0
  %2562 = vmatprep.mubr.bf16.mxu0 0
  %2563 = vmatmul.mubr.bf16.gmra.mxu0 %v2528
  %v2564 = vpop.f32.mrf.mxu0
  %v2565 = vadd.f32 %v2507, %v2564
  %v2566 = vpop.f32.mrf.mxu0
  %v2567 = vpop.f32.mrf.mxu0
  %v2568 = vpop.f32.mrf.mxu0
  %2569 = vdwg.mxu0
  %v2570 = vmax.f32 %v2565, 0.0
  %v2571 = vpack.c.bf16 %v2570, %v2570
  %v2572 = vld [vmem:[%s19] sm:$0xf]
  %v2573 = vld [vmem:[%s19 + $0x4] sm:$0xf]
  %v2574 = vld [vmem:[%s19 + $0x8] sm:$0xf]
  %v2575 = vld [vmem:[%s19 + $0xc] sm:$0xf]
  %v2576 = vld [vmem:[%s19 + $0x10] sm:$0xf]
  %v2577 = vld [vmem:[%s19 + $0x14] sm:$0xf]
  %v2578 = vld [vmem:[%s19 + $0x18] sm:$0xf]
  %v2579 = vld [vmem:[%s19 + $0x1c] sm:$0xf]
  %v2588 = vunpack.c.l.b16 %v2572
  %v2589 = vunpack.c.l.b16 %v2573
  %v2590 = vunpack.c.l.b16 %v2574
  %v2591 = vunpack.c.l.b16 %v2575
  %v2592 = vunpack.c.l.b16 %v2576
  %v2593 = vunpack.c.l.b16 %v2577
  %v2594 = vunpack.c.l.b16 %v2578
  %v2595 = vunpack.c.l.b16 %v2579
  %v2596 = vpack.c.b16 %v2589, %v2588
  %v2597 = vpack.c.b16 %v2591, %v2590
  %v2598 = vpack.c.b16 %v2593, %v2592
  %v2599 = vpack.c.b16 %v2595, %v2594
  %v2605 = vsel %vm400, %v2571, 0
  %2607 = vmatprep.subr.bf16.mxu0 0
  %2608 = vmatpush1.bf16.msra.mxu0 0
  %2609 = vmatprep.subr.bf16.mxu0 0
  %2610 = vmatpush1.bf16.msra.mxu0 0
  %2611 = vmatprep.subr.bf16.mxu0 0
  %2612 = vmatpush1.bf16.msra.mxu0 0
  %2613 = vmatprep.subr.bf16.mxu0 0
  %2614 = vmatpush1.bf16.msra.mxu0 0
  %2615 = vmatprep.subr.bf16.mxu0 0
  %2616 = vmatpush1.bf16.msra.mxu0 %v2599
  %2617 = vmatprep.subr.bf16.mxu0 0
  %2618 = vmatpush1.bf16.msra.mxu0 %v2598
  %2619 = vmatprep.subr.bf16.mxu0 0
  %2620 = vmatpush1.bf16.msra.mxu0 %v2597
  %2621 = vmatprep.subr.bf16.mxu0 0
  %2622 = vmatpush1.bf16.msra.mxu0 %v2596
  %2623 = vmatprep.subr.bf16.mxu0 0
  %2624 = vmatpush2.bf16.msra.mxu0 0
  %2625 = vmatprep.subr.bf16.mxu0 0
  %2626 = vmatpush2.bf16.msra.mxu0 0
  %2627 = vmatprep.subr.bf16.mxu0 0
  %2628 = vmatpush2.bf16.msra.mxu0 0
  %2629 = vmatprep.subr.bf16.mxu0 0
  %2630 = vmatpush2.bf16.msra.mxu0 0
  %2631 = vmatprep.subr.bf16.mxu0 0
  %2632 = vmatpush2.bf16.msra.mxu0 0
  %2633 = vmatprep.subr.bf16.mxu0 0
  %2634 = vmatpush2.bf16.msra.mxu0 0
  %2635 = vmatprep.subr.bf16.mxu0 0
  %2636 = vmatpush2.bf16.msra.mxu0 0
  %2637 = vmatprep.subr.bf16.mxu0 0
  %2638 = vmatpush2.bf16.msra.mxu0 0
  %2639 = vmatprep.mubr.bf16.mxu0 0
  %2640 = vmatmul.mubr.bf16.gmra.mxu0 %v2605
  %v2641 = vpop.f32.mrf.mxu0
  %v2642 = vadd.f32 %v2464, %v2641
  %v2643 = vpop.f32.mrf.mxu0
  %v2644 = vpop.f32.mrf.mxu0
  %v2645 = vpop.f32.mrf.mxu0
  %2646 = vdwg.mxu0
  %v2647 = vld [vmem:[%s12 + $0x2] sm:$0x1]
  %v2648 = vld [vmem:[%s12 + $0x3] sm:$0x1]
  %v2649 = vlaneseq
  %v2650 = vshrl.u32 %v2649, 7
  %v2651 = vsub.s32 0, %v2650
  %v2652 = vrot.slane %v2647, %v2651
  %v2653 = vmul.f32 %v2642, %v2652
  %v2654 = vlaneseq
  %v2655 = vshrl.u32 %v2654, 7
  %v2656 = vsub.s32 0, %v2655
  %v2657 = vrot.slane %v2648, %v2656
  %v2658 = vadd.f32 %v2653, %v2657
  %v2659 = vmax.f32 %v2658, 0.0
  %v2661 = vrot.slane %v2659, 7
  %v2663 = vsel %vm354, %v2661, %v2661
  %v2664 = vmul.f32 %v2663, %v85
  %v2665 = vrot.slane %v2659, 1
  %v2667 = vsel %vm370, %v2665, %v2665
  %v2668 = vmul.f32 %v2667, %v88
  %2669 = vrot.lane.b32.xlu0 %v2659, 16
  %v2670 = vpop.permute.xlu0 %2669
  %2673 = vrot.lane.b32.xlu0 %v2668, 32
  %v2674 = vpop.permute.xlu0 %2673
  %v2676 = vsel %vm2309, %v2664, %v2670
  %v2677 = vsel %vm1810, %v2676, %v2674
  %v2678 = vpack.c.bf16 %v2677, %v2677
  %s2679 = scalar_lea.vmem %s2, 24
  %v2680 = vld [vmem:[%s2679] sm:$0xf]
  %v2681 = vld [vmem:[%s2679 + $0x4] sm:$0xf]
  %v2682 = vld [vmem:[%s2679 + $0x8] sm:$0xf]
  %v2683 = vld [vmem:[%s2679 + $0xc] sm:$0xf]
  %v2684 = vld [vmem:[%s2679 + $0x10] sm:$0xf]
  %v2685 = vld [vmem:[%s2679 + $0x14] sm:$0xf]
  %v2686 = vld [vmem:[%s5 + $0x1] sm:$0x1]
  %v2687 = vlaneseq
  %v2688 = vshrl.u32 %v2687, 7
  %v2689 = vsub.s32 0, %v2688
  %v2690 = vrot.slane %v2686, %v2689
  %v2697 = vunpack.c.l.b16 %v2680
  %v2698 = vunpack.c.l.b16 %v2681
  %v2699 = vunpack.c.l.b16 %v2682
  %v2700 = vunpack.c.l.b16 %v2683
  %v2701 = vunpack.c.l.b16 %v2684
  %v2702 = vunpack.c.l.b16 %v2685
  %v2703 = vpack.c.b16 %v2698, %v2697
  %v2704 = vpack.c.b16 %v2700, %v2699
  %v2705 = vpack.c.b16 %v2702, %v2701
  %v2710 = vsel %vm2526, %v2678, 0
  %2712 = vmatprep.subr.bf16.mxu0 0
  %2713 = vmatpush1.bf16.msra.mxu0 0
  %2714 = vmatprep.subr.bf16.mxu0 0
  %2715 = vmatpush1.bf16.msra.mxu0 0
  %2716 = vmatprep.subr.bf16.mxu0 0
  %2717 = vmatpush1.bf16.msra.mxu0 0
  %2718 = vmatprep.subr.bf16.mxu0 0
  %2719 = vmatpush1.bf16.msra.mxu0 0
  %2720 = vmatprep.subr.bf16.mxu0 0
  %2721 = vmatpush1.bf16.msra.mxu0 0
  %2722 = vmatprep.subr.bf16.mxu0 0
  %2723 = vmatpush1.bf16.msra.mxu0 %v2705
  %2724 = vmatprep.subr.bf16.mxu0 0
  %2725 = vmatpush1.bf16.msra.mxu0 %v2704
  %2726 = vmatprep.subr.bf16.mxu0 0
  %2727 = vmatpush1.bf16.msra.mxu0 %v2703
  %2728 = vmatprep.subr.bf16.mxu0 0
  %2729 = vmatpush2.bf16.msra.mxu0 0
  %2730 = vmatprep.subr.bf16.mxu0 0
  %2731 = vmatpush2.bf16.msra.mxu0 0
  %2732 = vmatprep.subr.bf16.mxu0 0
  %2733 = vmatpush2.bf16.msra.mxu0 0
  %2734 = vmatprep.subr.bf16.mxu0 0
  %2735 = vmatpush2.bf16.msra.mxu0 0
  %2736 = vmatprep.subr.bf16.mxu0 0
  %2737 = vmatpush2.bf16.msra.mxu0 0
  %2738 = vmatprep.subr.bf16.mxu0 0
  %2739 = vmatpush2.bf16.msra.mxu0 0
  %2740 = vmatprep.subr.bf16.mxu0 0
  %2741 = vmatpush2.bf16.msra.mxu0 0
  %2742 = vmatprep.subr.bf16.mxu0 0
  %2743 = vmatpush2.bf16.msra.mxu0 0
  %2744 = vmatprep.mubr.bf16.mxu0 0
  %2745 = vmatmul.mubr.bf16.gmra.mxu0 %v2710
  %v2746 = vpop.f32.mrf.mxu0
  %v2747 = vadd.f32 %v2690, %v2746
  %v2748 = vpop.f32.mrf.mxu0
  %v2749 = vpop.f32.mrf.mxu0
  %v2750 = vpop.f32.mrf.mxu0
  %2751 = vdwg.mxu0
  %v2752 = vmax.f32 %v2747, 0.0
  %v2753 = vpack.c.bf16 %v2752, %v2752
  %s2754 = scalar_lea.vmem %s19, 32
  %v2755 = vld [vmem:[%s2754] sm:$0xf]
  %v2756 = vld [vmem:[%s2754 + $0x4] sm:$0xf]
  %v2757 = vld [vmem:[%s2754 + $0x8] sm:$0xf]
  %v2758 = vld [vmem:[%s2754 + $0xc] sm:$0xf]
  %v2759 = vld [vmem:[%s2754 + $0x10] sm:$0xf]
  %v2760 = vld [vmem:[%s2754 + $0x14] sm:$0xf]
  %v2761 = vld [vmem:[%s2754 + $0x18] sm:$0xf]
  %v2762 = vld [vmem:[%s2754 + $0x1c] sm:$0xf]
  %v2771 = vunpack.c.l.b16 %v2755
  %v2772 = vunpack.c.l.b16 %v2756
  %v2773 = vunpack.c.l.b16 %v2757
  %v2774 = vunpack.c.l.b16 %v2758
  %v2775 = vunpack.c.l.b16 %v2759
  %v2776 = vunpack.c.l.b16 %v2760
  %v2777 = vunpack.c.l.b16 %v2761
  %v2778 = vunpack.c.l.b16 %v2762
  %v2779 = vpack.c.b16 %v2772, %v2771
  %v2780 = vpack.c.b16 %v2774, %v2773
  %v2781 = vpack.c.b16 %v2776, %v2775
  %v2782 = vpack.c.b16 %v2778, %v2777
  %v2788 = vsel %vm400, %v2753, 0
  %2790 = vmatprep.subr.bf16.mxu0 0
  %2791 = vmatpush1.bf16.msra.mxu0 0
  %2792 = vmatprep.subr.bf16.mxu0 0
  %2793 = vmatpush1.bf16.msra.mxu0 0
  %2794 = vmatprep.subr.bf16.mxu0 0
  %2795 = vmatpush1.bf16.msra.mxu0 0
  %2796 = vmatprep.subr.bf16.mxu0 0
  %2797 = vmatpush1.bf16.msra.mxu0 0
  %2798 = vmatprep.subr.bf16.mxu0 0
  %2799 = vmatpush1.bf16.msra.mxu0 %v2782
  %2800 = vmatprep.subr.bf16.mxu0 0
  %2801 = vmatpush1.bf16.msra.mxu0 %v2781
  %2802 = vmatprep.subr.bf16.mxu0 0
  %2803 = vmatpush1.bf16.msra.mxu0 %v2780
  %2804 = vmatprep.subr.bf16.mxu0 0
  %2805 = vmatpush1.bf16.msra.mxu0 %v2779
  %2806 = vmatprep.subr.bf16.mxu0 0
  %2807 = vmatpush2.bf16.msra.mxu0 0
  %2808 = vmatprep.subr.bf16.mxu0 0
  %2809 = vmatpush2.bf16.msra.mxu0 0
  %2810 = vmatprep.subr.bf16.mxu0 0
  %2811 = vmatpush2.bf16.msra.mxu0 0
  %2812 = vmatprep.subr.bf16.mxu0 0
  %2813 = vmatpush2.bf16.msra.mxu0 0
  %2814 = vmatprep.subr.bf16.mxu0 0
  %2815 = vmatpush2.bf16.msra.mxu0 0
  %2816 = vmatprep.subr.bf16.mxu0 0
  %2817 = vmatpush2.bf16.msra.mxu0 0
  %2818 = vmatprep.subr.bf16.mxu0 0
  %2819 = vmatpush2.bf16.msra.mxu0 0
  %2820 = vmatprep.subr.bf16.mxu0 0
  %2821 = vmatpush2.bf16.msra.mxu0 0
  %2822 = vmatprep.mubr.bf16.mxu0 0
  %2823 = vmatmul.mubr.bf16.gmra.mxu0 %v2788
  %v2824 = vpop.f32.mrf.mxu0
  %v2825 = vadd.f32 %v2642, %v2824
  %v2826 = vpop.f32.mrf.mxu0
  %v2827 = vpop.f32.mrf.mxu0
  %v2828 = vpop.f32.mrf.mxu0
  %2829 = vdwg.mxu0
  %v2830 = vld [vmem:[%s16] sm:$0xf]
  %v2831 = vld [vmem:[%s16 + $0x4] sm:$0xf]
  %v2832 = vpack.c.bf16 %v2825, %v2825
  %v2835 = vunpack.c.l.b16 %v2830
  %v2836 = vunpack.c.l.b16 %v2831
  %v2837 = vpack.c.b16 %v2836, %v2835
  %vm2838 = vcmask 64512
  %v2840 = vsel %vm2838, %v2837, 0
  %vm2842 = vcmask 1043456
  %v2844 = vsel %vm2842, %v2832, 0
  %2846 = vmatprep.subr.bf16.mxu0 0
  %2847 = vmatpush1.bf16.msra.mxu0 0
  %2848 = vmatprep.subr.bf16.mxu0 0
  %2849 = vmatpush1.bf16.msra.mxu0 0
  %2850 = vmatprep.subr.bf16.mxu0 0
  %2851 = vmatpush1.bf16.msra.mxu0 0
  %2852 = vmatprep.subr.bf16.mxu0 0
  %2853 = vmatpush1.bf16.msra.mxu0 0
  %2854 = vmatprep.subr.bf16.mxu0 0
  %2855 = vmatpush1.bf16.msra.mxu0 0
  %2856 = vmatprep.subr.bf16.mxu0 0
  %2857 = vmatpush1.bf16.msra.mxu0 0
  %2858 = vmatprep.subr.bf16.mxu0 0
  %2859 = vmatpush1.bf16.msra.mxu0 0
  %2860 = vmatprep.subr.bf16.mxu0 0
  %2861 = vmatpush1.bf16.msra.mxu0 %v2844
  %2862 = vmatprep.subr.bf16.mxu0 0
  %2863 = vmatpush2.bf16.msra.mxu0 0
  %2864 = vmatprep.subr.bf16.mxu0 0
  %2865 = vmatpush2.bf16.msra.mxu0 0
  %2866 = vmatprep.subr.bf16.mxu0 0
  %2867 = vmatpush2.bf16.msra.mxu0 0
  %2868 = vmatprep.subr.bf16.mxu0 0
  %2869 = vmatpush2.bf16.msra.mxu0 0
  %2870 = vmatprep.subr.bf16.mxu0 0
  %2871 = vmatpush2.bf16.msra.mxu0 0
  %2872 = vmatprep.subr.bf16.mxu0 0
  %2873 = vmatpush2.bf16.msra.mxu0 0
  %2874 = vmatprep.subr.bf16.mxu0 0
  %2875 = vmatpush2.bf16.msra.mxu0 0
  %2876 = vmatprep.subr.bf16.mxu0 0
  %2877 = vmatpush2.bf16.msra.mxu0 0
  %2878 = vmatprep.mubr.bf16.mxu0 0
  %2879 = vmatmul.mubr.bf16.gmra.mxu0 %v2840
  %v2880 = vpop.f32.mrf.mxu0
  %v2881 = vadd.f32 0.0, %v2880
  %v2882 = vpop.f32.mrf.mxu0
  %v2883 = vpop.f32.mrf.mxu0
  %v2884 = vadd.f32 0.0, %v2883
  %v2885 = vpop.f32.mrf.mxu0
  %2886 = vdwg.mxu0
  %v2887 = vpack.c.bf16 %v2884, %v2881
  %v2888 = vld [vmem:[%s14] sm:$0xf]
  %v2889 = vld [vmem:[%s14 + $0x4] sm:$0xf]
  %v2892 = vunpack.c.l.b16 %v2888
  %v2893 = vunpack.c.l.b16 %v2889
  %v2894 = vpack.c.b16 %v2893, %v2892
  %v2897 = vsel %vm2309, %v2887, 0
  %2899 = vmatprep.subr.bf16.mxu0 0
  %2900 = vmatpush1.bf16.msra.mxu0 0
  %2901 = vmatprep.subr.bf16.mxu0 0
  %2902 = vmatpush1.bf16.msra.mxu0 0
  %2903 = vmatprep.subr.bf16.mxu0 0
  %2904 = vmatpush1.bf16.msra.mxu0 0
  %2905 = vmatprep.subr.bf16.mxu0 0
  %2906 = vmatpush1.bf16.msra.mxu0 0
  %2907 = vmatprep.subr.bf16.mxu0 0
  %2908 = vmatpush1.bf16.msra.mxu0 0
  %2909 = vmatprep.subr.bf16.mxu0 0
  %2910 = vmatpush1.bf16.msra.mxu0 0
  %2911 = vmatprep.subr.bf16.mxu0 0
  %2912 = vmatpush1.bf16.msra.mxu0 0
  %2913 = vmatprep.subr.bf16.mxu0 0
  %2914 = vmatpush1.bf16.msra.mxu0 %v2894
  %2915 = vmatprep.subr.bf16.mxu0 0
  %2916 = vmatpush2.bf16.msra.mxu0 0
  %2917 = vmatprep.subr.bf16.mxu0 0
  %2918 = vmatpush2.bf16.msra.mxu0 0
  %2919 = vmatprep.subr.bf16.mxu0 0
  %2920 = vmatpush2.bf16.msra.mxu0 0
  %2921 = vmatprep.subr.bf16.mxu0 0
  %2922 = vmatpush2.bf16.msra.mxu0 0
  %2923 = vmatprep.subr.bf16.mxu0 0
  %2924 = vmatpush2.bf16.msra.mxu0 0
  %2925 = vmatprep.subr.bf16.mxu0 0
  %2926 = vmatpush2.bf16.msra.mxu0 0
  %2927 = vmatprep.subr.bf16.mxu0 0
  %2928 = vmatpush2.bf16.msra.mxu0 0
  %2929 = vmatprep.subr.bf16.mxu0 0
  %2930 = vmatpush2.bf16.msra.mxu0 0
  %2931 = vmatprep.mubr.bf16.mxu0 0
  %2932 = vmatmul.mubr.bf16.gmra.mxu0 %v2897
  %v2933 = vpop.f32.mrf.mxu0
  %v2934 = vadd.f32 0.0, %v2933
  %v2935 = vpop.f32.mrf.mxu0
  %v2936 = vpop.f32.mrf.mxu0
  %v2937 = vadd.f32 0.0, %v2936
  %v2938 = vpop.f32.mrf.mxu0
  %2939 = vdwg.mxu0
  %v2940 = vld [vmem:[%s13 + $0x2] sm:$0x1]
  %v2941 = vld [vmem:[%s13 + $0x3] sm:$0x1]
  %v2942 = vlaneseq
  %v2943 = vshrl.u32 %v2942, 7
  %v2944 = vsub.s32 0, %v2943
  %v2945 = vrot.slane %v2940, %v2944
  %v2946 = vmul.f32 %v2934, %v2945
  %v2947 = vmul.f32 %v2937, %v2945
  %v2948 = vlaneseq
  %v2949 = vshrl.u32 %v2948, 7
  %v2950 = vsub.s32 0, %v2949
  %v2951 = vrot.slane %v2941, %v2950
  %v2952 = vadd.f32 %v2946, %v2951
  %v2953 = vadd.f32 %v2947, %v2951
  %v2954 = vmax.f32 %v2952, 0.0
  %v2955 = vmax.f32 %v2953, 0.0
  %v2957 = vrot.slane %v2955, 7
  %v2960 = vrot.slane %v2954, 7
  %v2961 = vsel %vm354, %v2960, %v2957
  %v2964 = vsel %vm354, %v2957, %v2960
  %v2965 = vmul.f32 %v2964, %v118
  %v2966 = vmul.f32 %v2961, %v119
  %v2967 = vrot.slane %v2954, 1
  %v2968 = vrot.slane %v2955, 1
  %v2969 = vsel %vm370, %v2967, %v2968
  %v2973 = vsel %vm370, %v2968, %v2967
  %v2974 = vmul.f32 %v2969, %v124
  %v2975 = vmul.f32 %v2973, %v125
  %2976 = vrot.lane.b32.xlu0 %v2954, 32
  %v2977 = vpop.permute.xlu0 %2976
  %2978 = vrot.lane.b32.xlu0 %v2955, 32
  %v2979 = vpop.permute.xlu0 %2978
  %2984 = vrot.lane.b32.xlu0 %v2974, 64
  %v2985 = vpop.permute.xlu0 %2984
  %2986 = vrot.lane.b32.xlu0 %v2975, 64
  %v2987 = vpop.permute.xlu0 %2986
  %v2990 = vsel %vm1810, %v2965, %v2977
  %v2991 = vsel %vm1810, %v2966, %v2979
  %v2992 = vsel %vm400, %v2990, %v2985
  %v2993 = vsel %vm400, %v2991, %v2987
  %v2994 = vpack.c.bf16 %v2993, %v2992
  %s2995 = scalar_lea.vmem %s3, 48
  %v2996 = vld [vmem:[%s2995] sm:$0xf]
  %v2997 = vld [vmem:[%s2995 + $0x4] sm:$0xf]
  %v2998 = vld [vmem:[%s2995 + $0x8] sm:$0xf]
  %v2999 = vld [vmem:[%s2995 + $0xc] sm:$0xf]
  %v3000 = vld [vmem:[%s2995 + $0x10] sm:$0xf]
  %v3001 = vld [vmem:[%s2995 + $0x14] sm:$0xf]
  %v3002 = vld [vmem:[%s2995 + $0x18] sm:$0xf]
  %v3003 = vld [vmem:[%s2995 + $0x1c] sm:$0xf]
  %v3004 = vld [vmem:[%s2995 + $0x20] sm:$0xf]
  %v3005 = vld [vmem:[%s2995 + $0x24] sm:$0xf]
  %v3006 = vld [vmem:[%s2995 + $0x28] sm:$0xf]
  %v3007 = vld [vmem:[%s2995 + $0x2c] sm:$0xf]
  %v3008 = vld [vmem:[%s6 + $0x1] sm:$0x1]
  %v3009 = vlaneseq
  %v3010 = vshrl.u32 %v3009, 7
  %v3011 = vsub.s32 0, %v3010
  %v3012 = vrot.slane %v3008, %v3011
  %v3025 = vunpack.c.l.b16 %v2996
  %v3026 = vunpack.c.l.b16 %v2997
  %v3027 = vunpack.c.l.b16 %v2998
  %v3028 = vunpack.c.l.b16 %v2999
  %v3029 = vunpack.c.l.b16 %v3000
  %v3030 = vunpack.c.l.b16 %v3001
  %v3031 = vunpack.c.l.b16 %v3002
  %v3032 = vunpack.c.l.b16 %v3003
  %v3033 = vunpack.c.l.b16 %v3004
  %v3034 = vunpack.c.l.b16 %v3005
  %v3035 = vunpack.c.l.b16 %v3006
  %v3036 = vunpack.c.l.b16 %v3007
  %v3037 = vpack.c.b16 %v3026, %v3025
  %v3038 = vpack.c.b16 %v3028, %v3027
  %v3039 = vpack.c.b16 %v3030, %v3029
  %v3040 = vpack.c.b16 %v3032, %v3031
  %v3041 = vpack.c.b16 %v3034, %v3033
  %v3042 = vpack.c.b16 %v3036, %v3035
  %v3050 = vsel %vm2144, %v2994, 0
  %3052 = vmatprep.subr.bf16.mxu0 0
  %3053 = vmatpush1.bf16.msra.mxu0 0
  %3054 = vmatprep.subr.bf16.mxu0 0
  %3055 = vmatpush1.bf16.msra.mxu0 0
  %3056 = vmatprep.subr.bf16.mxu0 0
  %3057 = vmatpush1.bf16.msra.mxu0 %v3042
  %3058 = vmatprep.subr.bf16.mxu0 0
  %3059 = vmatpush1.bf16.msra.mxu0 %v3041
  %3060 = vmatprep.subr.bf16.mxu0 0
  %3061 = vmatpush1.bf16.msra.mxu0 %v3040
  %3062 = vmatprep.subr.bf16.mxu0 0
  %3063 = vmatpush1.bf16.msra.mxu0 %v3039
  %3064 = vmatprep.subr.bf16.mxu0 0
  %3065 = vmatpush1.bf16.msra.mxu0 %v3038
  %3066 = vmatprep.subr.bf16.mxu0 0
  %3067 = vmatpush1.bf16.msra.mxu0 %v3037
  %3068 = vmatprep.subr.bf16.mxu0 0
  %3069 = vmatpush2.bf16.msra.mxu0 0
  %3070 = vmatprep.subr.bf16.mxu0 0
  %3071 = vmatpush2.bf16.msra.mxu0 0
  %3072 = vmatprep.subr.bf16.mxu0 0
  %3073 = vmatpush2.bf16.msra.mxu0 0
  %3074 = vmatprep.subr.bf16.mxu0 0
  %3075 = vmatpush2.bf16.msra.mxu0 0
  %3076 = vmatprep.subr.bf16.mxu0 0
  %3077 = vmatpush2.bf16.msra.mxu0 0
  %3078 = vmatprep.subr.bf16.mxu0 0
  %3079 = vmatpush2.bf16.msra.mxu0 0
  %3080 = vmatprep.subr.bf16.mxu0 0
  %3081 = vmatpush2.bf16.msra.mxu0 0
  %3082 = vmatprep.subr.bf16.mxu0 0
  %3083 = vmatpush2.bf16.msra.mxu0 0
  %3084 = vmatprep.mubr.bf16.mxu0 0
  %3085 = vmatmul.mubr.bf16.gmra.mxu0 %v3050
  %v3086 = vpop.f32.mrf.mxu0
  %v3087 = vadd.f32 %v3012, %v3086
  %v3088 = vpop.f32.mrf.mxu0
  %v3089 = vpop.f32.mrf.mxu0
  %v3090 = vadd.f32 %v3012, %v3089
  %v3091 = vpop.f32.mrf.mxu0
  %3092 = vdwg.mxu0
  %v3093 = vmax.f32 %v3087, 0.0
  %v3094 = vmax.f32 %v3090, 0.0
  %v3095 = vpack.c.bf16 %v3094, %v3093
  %s3096 = scalar_lea.vmem %s20, 64
  %v3097 = vld [vmem:[%s3096] sm:$0xf]
  %v3098 = vld [vmem:[%s3096 + $0x4] sm:$0xf]
  %v3099 = vld [vmem:[%s3096 + $0x8] sm:$0xf]
  %v3100 = vld [vmem:[%s3096 + $0xc] sm:$0xf]
  %v3101 = vld [vmem:[%s3096 + $0x10] sm:$0xf]
  %v3102 = vld [vmem:[%s3096 + $0x14] sm:$0xf]
  %v3103 = vld [vmem:[%s3096 + $0x18] sm:$0xf]
  %v3104 = vld [vmem:[%s3096 + $0x1c] sm:$0xf]
  %v3105 = vld [vmem:[%s3096 + $0x20] sm:$0xf]
  %v3106 = vld [vmem:[%s3096 + $0x24] sm:$0xf]
  %v3107 = vld [vmem:[%s3096 + $0x28] sm:$0xf]
  %v3108 = vld [vmem:[%s3096 + $0x2c] sm:$0xf]
  %v3109 = vld [vmem:[%s3096 + $0x30] sm:$0xf]
  %v3110 = vld [vmem:[%s3096 + $0x34] sm:$0xf]
  %v3111 = vld [vmem:[%s3096 + $0x38] sm:$0xf]
  %v3112 = vld [vmem:[%s3096 + $0x3c] sm:$0xf]
  %v3129 = vunpack.c.l.b16 %v3097
  %v3130 = vunpack.c.l.b16 %v3098
  %v3131 = vunpack.c.l.b16 %v3099
  %v3132 = vunpack.c.l.b16 %v3100
  %v3133 = vunpack.c.l.b16 %v3101
  %v3134 = vunpack.c.l.b16 %v3102
  %v3135 = vunpack.c.l.b16 %v3103
  %v3136 = vunpack.c.l.b16 %v3104
  %v3137 = vunpack.c.l.b16 %v3105
  %v3138 = vunpack.c.l.b16 %v3106
  %v3139 = vunpack.c.l.b16 %v3107
  %v3140 = vunpack.c.l.b16 %v3108
  %v3141 = vunpack.c.l.b16 %v3109
  %v3142 = vunpack.c.l.b16 %v3110
  %v3143 = vunpack.c.l.b16 %v3111
  %v3144 = vunpack.c.l.b16 %v3112
  %v3145 = vpack.c.b16 %v3130, %v3129
  %v3146 = vpack.c.b16 %v3132, %v3131
  %v3147 = vpack.c.b16 %v3134, %v3133
  %v3148 = vpack.c.b16 %v3136, %v3135
  %v3149 = vpack.c.b16 %v3138, %v3137
  %v3150 = vpack.c.b16 %v3140, %v3139
  %v3151 = vpack.c.b16 %v3142, %v3141
  %v3152 = vpack.c.b16 %v3144, %v3143
  %3161 = vmatprep.subr.bf16.mxu0 0
  %3162 = vmatpush1.bf16.msra.mxu0 %v3152
  %3163 = vmatprep.subr.bf16.mxu0 0
  %3164 = vmatpush1.bf16.msra.mxu0 %v3151
  %3165 = vmatprep.subr.bf16.mxu0 0
  %3166 = vmatpush1.bf16.msra.mxu0 %v3150
  %3167 = vmatprep.subr.bf16.mxu0 0
  %3168 = vmatpush1.bf16.msra.mxu0 %v3149
  %3169 = vmatprep.subr.bf16.mxu0 0
  %3170 = vmatpush1.bf16.msra.mxu0 %v3148
  %3171 = vmatprep.subr.bf16.mxu0 0
  %3172 = vmatpush1.bf16.msra.mxu0 %v3147
  %3173 = vmatprep.subr.bf16.mxu0 0
  %3174 = vmatpush1.bf16.msra.mxu0 %v3146
  %3175 = vmatprep.subr.bf16.mxu0 0
  %3176 = vmatpush1.bf16.msra.mxu0 %v3145
  %3177 = vmatprep.subr.bf16.mxu0 0
  %3178 = vmatpush2.bf16.msra.mxu0 0
  %3179 = vmatprep.subr.bf16.mxu0 0
  %3180 = vmatpush2.bf16.msra.mxu0 0
  %3181 = vmatprep.subr.bf16.mxu0 0
  %3182 = vmatpush2.bf16.msra.mxu0 0
  %3183 = vmatprep.subr.bf16.mxu0 0
  %3184 = vmatpush2.bf16.msra.mxu0 0
  %3185 = vmatprep.subr.bf16.mxu0 0
  %3186 = vmatpush2.bf16.msra.mxu0 0
  %3187 = vmatprep.subr.bf16.mxu0 0
  %3188 = vmatpush2.bf16.msra.mxu0 0
  %3189 = vmatprep.subr.bf16.mxu0 0
  %3190 = vmatpush2.bf16.msra.mxu0 0
  %3191 = vmatprep.subr.bf16.mxu0 0
  %3192 = vmatpush2.bf16.msra.mxu0 0
  %3193 = vmatprep.mubr.bf16.mxu0 0
  %3194 = vmatmul.mubr.bf16.gmra.mxu0 %v3095
  %v3195 = vpop.f32.mrf.mxu0
  %v3196 = vadd.f32 %v2934, %v3195
  %v3197 = vpop.f32.mrf.mxu0
  %v3198 = vpop.f32.mrf.mxu0
  %v3199 = vadd.f32 %v2937, %v3198
  %v3200 = vpop.f32.mrf.mxu0
  %3201 = vdwg.mxu0
  %v3202 = vld [vmem:[%s17] sm:$0xf]
  %v3203 = vld [vmem:[%s17 + $0x4] sm:$0xf]
  %v3204 = vld [vmem:[%s17 + $0x8] sm:$0xf]
  %v3205 = vld [vmem:[%s17 + $0xc] sm:$0xf]
  %v3206 = vpack.c.bf16 %v3199, %v3196
  %v3211 = vunpack.c.l.b16 %v3202
  %v3212 = vunpack.c.l.b16 %v3203
  %v3213 = vunpack.c.l.b16 %v3204
  %v3214 = vunpack.c.l.b16 %v3205
  %v3215 = vpack.c.b16 %v3212, %v3211
  %v3216 = vpack.c.b16 %v3214, %v3213
  %v3218 = vsel %vm2309, %v3215, 0
  %v3221 = vsel %vm2309, %v3216, 0
  %3223 = vmatprep.subr.bf16.mxu0 0
  %3224 = vmatpush1.bf16.msra.mxu0 0
  %3225 = vmatprep.subr.bf16.mxu0 0
  %3226 = vmatpush1.bf16.msra.mxu0 0
  %3227 = vmatprep.subr.bf16.mxu0 0
  %3228 = vmatpush1.bf16.msra.mxu0 0
  %3229 = vmatprep.subr.bf16.mxu0 0
  %3230 = vmatpush1.bf16.msra.mxu0 0
  %3231 = vmatprep.subr.bf16.mxu0 0
  %3232 = vmatpush1.bf16.msra.mxu0 0
  %3233 = vmatprep.subr.bf16.mxu0 0
  %3234 = vmatpush1.bf16.msra.mxu0 0
  %3235 = vmatprep.subr.bf16.mxu0 0
  %3236 = vmatpush1.bf16.msra.mxu0 0
  %3237 = vmatprep.subr.bf16.mxu0 0
  %3238 = vmatpush1.bf16.msra.mxu0 %v3206
  %3239 = vmatprep.subr.bf16.mxu0 0
  %3240 = vmatpush2.bf16.msra.mxu0 0
  %3241 = vmatprep.subr.bf16.mxu0 0
  %3242 = vmatpush2.bf16.msra.mxu0 0
  %3243 = vmatprep.subr.bf16.mxu0 0
  %3244 = vmatpush2.bf16.msra.mxu0 0
  %3245 = vmatprep.subr.bf16.mxu0 0
  %3246 = vmatpush2.bf16.msra.mxu0 0
  %3247 = vmatprep.subr.bf16.mxu0 0
  %3248 = vmatpush2.bf16.msra.mxu0 0
  %3249 = vmatprep.subr.bf16.mxu0 0
  %3250 = vmatpush2.bf16.msra.mxu0 0
  %3251 = vmatprep.subr.bf16.mxu0 0
  %3252 = vmatpush2.bf16.msra.mxu0 0
  %3253 = vmatprep.subr.bf16.mxu0 0
  %3254 = vmatpush2.bf16.msra.mxu0 0
  %3255 = vmatprep.mubr.bf16.mxu0 0
  %3256 = vmatmul.mubr.bf16.gmra.mxu0 %v3218
  %v3257 = vpop.f32.mrf.mxu0
  %v3258 = vadd.f32 0.0, %v3257
  %v3259 = vpop.f32.mrf.mxu0
  %v3260 = vpop.f32.mrf.mxu0
  %v3261 = vadd.f32 0.0, %v3260
  %v3262 = vpop.f32.mrf.mxu0
  %3263 = vmatprep.mubr.bf16.mxu0 0
  %3264 = vmatmul.mubr.bf16.gmra.mxu0 %v3221
  %v3265 = vpop.f32.mrf.mxu0
  %v3266 = vadd.f32 0.0, %v3265
  %v3267 = vpop.f32.mrf.mxu0
  %v3268 = vpop.f32.mrf.mxu0
  %v3269 = vadd.f32 0.0, %v3268
  %v3270 = vpop.f32.mrf.mxu0
  %3271 = vdwg.mxu0
  %v3272 = vpack.c.bf16 %v3261, %v3258
  %v3273 = vpack.c.bf16 %v3269, %v3266
  %v3274 = vld [vmem:[%s15] sm:$0xf]
  %v3275 = vld [vmem:[%s15 + $0x4] sm:$0xf]
  %v3276 = vld [vmem:[%s15 + $0x8] sm:$0xf]
  %v3277 = vld [vmem:[%s15 + $0xc] sm:$0xf]
  %v3282 = vunpack.c.l.b16 %v3274
  %v3283 = vunpack.c.l.b16 %v3275
  %v3284 = vunpack.c.l.b16 %v3276
  %v3285 = vunpack.c.l.b16 %v3277
  %v3286 = vpack.c.b16 %v3283, %v3282
  %v3287 = vpack.c.b16 %v3285, %v3284
  %v3291 = vsel %vm1810, %v3272, 0
  %v3294 = vsel %vm1810, %v3273, 0
  %3296 = vmatprep.subr.bf16.mxu0 0
  %3297 = vmatpush1.bf16.msra.mxu0 0
  %3298 = vmatprep.subr.bf16.mxu0 0
  %3299 = vmatpush1.bf16.msra.mxu0 0
  %3300 = vmatprep.subr.bf16.mxu0 0
  %3301 = vmatpush1.bf16.msra.mxu0 0
  %3302 = vmatprep.subr.bf16.mxu0 0
  %3303 = vmatpush1.bf16.msra.mxu0 0
  %3304 = vmatprep.subr.bf16.mxu0 0
  %3305 = vmatpush1.bf16.msra.mxu0 0
  %3306 = vmatprep.subr.bf16.mxu0 0
  %3307 = vmatpush1.bf16.msra.mxu0 0
  %3308 = vmatprep.subr.bf16.mxu0 0
  %3309 = vmatpush1.bf16.msra.mxu0 %v3287
  %3310 = vmatprep.subr.bf16.mxu0 0
  %3311 = vmatpush1.bf16.msra.mxu0 %v3286
  %3312 = vmatprep.subr.bf16.mxu0 0
  %3313 = vmatpush2.bf16.msra.mxu0 0
  %3314 = vmatprep.subr.bf16.mxu0 0
  %3315 = vmatpush2.bf16.msra.mxu0 0
  %3316 = vmatprep.subr.bf16.mxu0 0
  %3317 = vmatpush2.bf16.msra.mxu0 0
  %3318 = vmatprep.subr.bf16.mxu0 0
  %3319 = vmatpush2.bf16.msra.mxu0 0
  %3320 = vmatprep.subr.bf16.mxu0 0
  %3321 = vmatpush2.bf16.msra.mxu0 0
  %3322 = vmatprep.subr.bf16.mxu0 0
  %3323 = vmatpush2.bf16.msra.mxu0 0
  %3324 = vmatprep.subr.bf16.mxu0 0
  %3325 = vmatpush2.bf16.msra.mxu0 0
  %3326 = vmatprep.subr.bf16.mxu0 0
  %3327 = vmatpush2.bf16.msra.mxu0 0
  %3328 = vmatprep.mubr.bf16.mxu0 0
  %3329 = vmatmul.mubr.bf16.gmra.mxu0 %v3291
  %v3330 = vpop.f32.mrf.mxu0
  %v3331 = vadd.f32 0.0, %v3330
  %v3332 = vpop.f32.mrf.mxu0
  %v3333 = vpop.f32.mrf.mxu0
  %v3334 = vadd.f32 0.0, %v3333
  %v3335 = vpop.f32.mrf.mxu0
  %3336 = vmatprep.mubr.bf16.mxu0 0
  %3337 = vmatmul.mubr.bf16.gmra.mxu0 %v3294
  %v3338 = vpop.f32.mrf.mxu0
  %v3339 = vadd.f32 0.0, %v3338
  %v3340 = vpop.f32.mrf.mxu0
  %v3341 = vpop.f32.mrf.mxu0
  %v3342 = vadd.f32 0.0, %v3341
  %v3343 = vpop.f32.mrf.mxu0
  %3344 = vdwg.mxu0
  %v3345 = vld [vmem:[%s11 + $0x6] sm:$0x1]
  %v3346 = vld [vmem:[%s11 + $0x7] sm:$0x1]
  %v3347 = vlaneseq
  %v3348 = vshrl.u32 %v3347, 7
  %v3349 = vsub.s32 0, %v3348
  %v3350 = vrot.slane %v3345, %v3349
  %v3351 = vmul.f32 %v3331, %v3350
  %v3352 = vmul.f32 %v3334, %v3350
  %v3353 = vmul.f32 %v3339, %v3350
  %v3354 = vmul.f32 %v3342, %v3350
  %v3355 = vlaneseq
  %v3356 = vshrl.u32 %v3355, 7
  %v3357 = vsub.s32 0, %v3356
  %v3358 = vrot.slane %v3346, %v3357
  %v3359 = vadd.f32 %v3351, %v3358
  %v3360 = vadd.f32 %v3352, %v3358
  %v3361 = vadd.f32 %v3353, %v3358
  %v3362 = vadd.f32 %v3354, %v3358
  %v3363 = vmax.f32 %v3359, 0.0
  %v3364 = vmax.f32 %v3360, 0.0
  %v3365 = vmax.f32 %v3361, 0.0
  %v3366 = vmax.f32 %v3362, 0.0
  %v3368 = vrot.slane %v3366, 7
  %v3373 = vrot.slane %v3363, 7
  %v3374 = vrot.slane %v3364, 7
  %v3375 = vsel %vm354, %v3373, %v3374
  %v3376 = vrot.slane %v3365, 7
  %v3377 = vsel %vm354, %v3374, %v3376
  %v3378 = vsel %vm354, %v3376, %v3368
  %v3383 = vsel %vm354, %v3368, %v3373
  %v3384 = vmul.f32 %v3383, %v184
  %v3385 = vmul.f32 %v3375, %v185
  %v3386 = vmul.f32 %v3377, %v186
  %v3387 = vmul.f32 %v3378, %v187
  %v3388 = vrot.slane %v3363, 1
  %v3389 = vrot.slane %v3364, 1
  %v3390 = vsel %vm370, %v3388, %v3389
  %v3391 = vrot.slane %v3365, 1
  %v3392 = vsel %vm370, %v3389, %v3391
  %v3393 = vrot.slane %v3366, 1
  %v3394 = vsel %vm370, %v3391, %v3393
  %v3400 = vsel %vm370, %v3393, %v3388
  %v3401 = vmul.f32 %v3390, %v196
  %v3402 = vmul.f32 %v3392, %v197
  %v3403 = vmul.f32 %v3394, %v198
  %v3404 = vmul.f32 %v3400, %v199
  %3405 = vrot.lane.b32.xlu0 %v3363, 64
  %v3406 = vpop.permute.xlu0 %3405
  %3407 = vrot.lane.b32.xlu0 %v3364, 64
  %v3408 = vpop.permute.xlu0 %3407
  %3409 = vrot.lane.b32.xlu0 %v3365, 64
  %v3410 = vpop.permute.xlu0 %3409
  %3411 = vrot.lane.b32.xlu0 %v3366, 64
  %v3412 = vpop.permute.xlu0 %3411
  %v3417 = vsel %vm400, %v3384, %v3406
  %v3418 = vsel %vm400, %v3385, %v3408
  %v3419 = vsel %vm400, %v3386, %v3410
  %v3420 = vsel %vm400, %v3387, %v3412
  %v3421 = vpack.c.bf16 %v3418, %v3417
  %v3422 = vpack.c.bf16 %v3402, %v3401
  %v3423 = vpack.c.bf16 %v3420, %v3419
  %v3424 = vpack.c.bf16 %v3404, %v3403
  %s3425 = scalar_lea.vmem %s1, 576
  %v3426 = vld [vmem:[%s3425] sm:$0xff]
  %v3427 = vld [vmem:[%s3425 + $0x8] sm:$0xff]
  %v3428 = vld [vmem:[%s3425 + $0x10] sm:$0xff]
  %v3429 = vld [vmem:[%s3425 + $0x18] sm:$0xff]
  %v3430 = vld [vmem:[%s3425 + $0x20] sm:$0xff]
  %v3431 = vld [vmem:[%s3425 + $0x28] sm:$0xff]
  %v3432 = vld [vmem:[%s3425 + $0x30] sm:$0xff]
  %v3433 = vld [vmem:[%s3425 + $0x38] sm:$0xff]
  %v3434 = vld [vmem:[%s3425 + $0x40] sm:$0xff]
  %v3435 = vld [vmem:[%s3425 + $0x48] sm:$0xff]
  %v3436 = vld [vmem:[%s3425 + $0x50] sm:$0xff]
  %v3437 = vld [vmem:[%s3425 + $0x58] sm:$0xff]
  %v3438 = vld [vmem:[%s3425 + $0x60] sm:$0xff]
  %v3439 = vld [vmem:[%s3425 + $0x68] sm:$0xff]
  %v3440 = vld [vmem:[%s3425 + $0x70] sm:$0xff]
  %v3441 = vld [vmem:[%s3425 + $0x78] sm:$0xff]
  %v3442 = vld [vmem:[%s3425 + $0x80] sm:$0xff]
  %v3443 = vld [vmem:[%s3425 + $0x88] sm:$0xff]
  %v3444 = vld [vmem:[%s3425 + $0x90] sm:$0xff]
  %v3445 = vld [vmem:[%s3425 + $0x98] sm:$0xff]
  %v3446 = vld [vmem:[%s3425 + $0xa0] sm:$0xff]
  %v3447 = vld [vmem:[%s3425 + $0xa8] sm:$0xff]
  %v3448 = vld [vmem:[%s3425 + $0xb0] sm:$0xff]
  %v3449 = vld [vmem:[%s3425 + $0xb8] sm:$0xff]
  %s3450 = scalar_lea.vmem %s4, 3
  %v3451 = vld [vmem:[%s3450] ss:$4 sm:$0x3]
  %v3453 = vlaneseq
  %v3454 = vshrl.u32 %v3453, 7
  %v3455 = vsub.s32 0, %v3454
  %v3456 = vrot.slane %v3451, %v3455
  %v3457 = vlaneseq
  %v3458 = vshrl.u32 %v3457, 7
  %v3459 = vsub.s32 1, %v3458
  %v3460 = vrot.slane %v3451, %v3459
  %v3487 = vunpack.c.l.b16 %v3426
  %v3488 = vunpack.c.h.b16 %v3426
  %v3489 = vunpack.c.l.b16 %v3427
  %v3490 = vunpack.c.h.b16 %v3427
  %v3491 = vunpack.c.l.b16 %v3428
  %v3492 = vunpack.c.h.b16 %v3428
  %v3493 = vunpack.c.l.b16 %v3429
  %v3494 = vunpack.c.h.b16 %v3429
  %v3495 = vunpack.c.l.b16 %v3430
  %v3496 = vunpack.c.h.b16 %v3430
  %v3497 = vunpack.c.l.b16 %v3431
  %v3498 = vunpack.c.h.b16 %v3431
  %v3499 = vunpack.c.l.b16 %v3432
  %v3500 = vunpack.c.h.b16 %v3432
  %v3501 = vunpack.c.l.b16 %v3433
  %v3502 = vunpack.c.h.b16 %v3433
  %v3503 = vunpack.c.l.b16 %v3434
  %v3504 = vunpack.c.h.b16 %v3434
  %v3505 = vunpack.c.l.b16 %v3435
  %v3506 = vunpack.c.h.b16 %v3435
  %v3507 = vunpack.c.l.b16 %v3436
  %v3508 = vunpack.c.h.b16 %v3436
  %v3509 = vunpack.c.l.b16 %v3437
  %v3510 = vunpack.c.h.b16 %v3437
  %v3511 = vunpack.c.l.b16 %v3438
  %v3512 = vunpack.c.h.b16 %v3438
  %v3513 = vunpack.c.l.b16 %v3439
  %v3514 = vunpack.c.h.b16 %v3439
  %v3515 = vunpack.c.l.b16 %v3440
  %v3516 = vunpack.c.h.b16 %v3440
  %v3517 = vunpack.c.l.b16 %v3441
  %v3518 = vunpack.c.h.b16 %v3441
  %v3519 = vunpack.c.l.b16 %v3442
  %v3520 = vunpack.c.h.b16 %v3442
  %v3521 = vunpack.c.l.b16 %v3443
  %v3522 = vunpack.c.h.b16 %v3443
  %v3523 = vunpack.c.l.b16 %v3444
  %v3524 = vunpack.c.h.b16 %v3444
  %v3525 = vunpack.c.l.b16 %v3445
  %v3526 = vunpack.c.h.b16 %v3445
  %v3527 = vunpack.c.l.b16 %v3446
  %v3528 = vunpack.c.h.b16 %v3446
  %v3529 = vunpack.c.l.b16 %v3447
  %v3530 = vunpack.c.h.b16 %v3447
  %v3531 = vunpack.c.l.b16 %v3448
  %v3532 = vunpack.c.h.b16 %v3448
  %v3533 = vunpack.c.l.b16 %v3449
  %v3534 = vunpack.c.h.b16 %v3449
  %v3535 = vpack.c.b16 %v3489, %v3487
  %v3536 = vpack.c.b16 %v3490, %v3488
  %v3537 = vpack.c.b16 %v3493, %v3491
  %v3538 = vpack.c.b16 %v3494, %v3492
  %v3539 = vpack.c.b16 %v3497, %v3495
  %v3540 = vpack.c.b16 %v3498, %v3496
  %v3541 = vpack.c.b16 %v3501, %v3499
  %v3542 = vpack.c.b16 %v3502, %v3500
  %v3543 = vpack.c.b16 %v3505, %v3503
  %v3544 = vpack.c.b16 %v3506, %v3504
  %v3545 = vpack.c.b16 %v3509, %v3507
  %v3546 = vpack.c.b16 %v3510, %v3508
  %v3547 = vpack.c.b16 %v3513, %v3511
  %v3548 = vpack.c.b16 %v3514, %v3512
  %v3549 = vpack.c.b16 %v3517, %v3515
  %v3550 = vpack.c.b16 %v3518, %v3516
  %v3551 = vpack.c.b16 %v3521, %v3519
  %v3552 = vpack.c.b16 %v3522, %v3520
  %v3553 = vpack.c.b16 %v3525, %v3523
  %v3554 = vpack.c.b16 %v3526, %v3524
  %v3555 = vpack.c.b16 %v3529, %v3527
  %v3556 = vpack.c.b16 %v3530, %v3528
  %v3557 = vpack.c.b16 %v3533, %v3531
  %v3558 = vpack.c.b16 %v3534, %v3532
  %v3584 = vsel %vm400, %v3422, 0
  %v3587 = vsel %vm400, %v3424, 0
  %3589 = vmatprep.subr.bf16.mxu0 %v3550
  %3590 = vmatpush1.bf16.msra.mxu0 %v3549
  %3591 = vmatprep.subr.bf16.mxu0 %v3548
  %3592 = vmatpush1.bf16.msra.mxu0 %v3547
  %3593 = vmatprep.subr.bf16.mxu0 %v3546
  %3594 = vmatpush1.bf16.msra.mxu0 %v3545
  %3595 = vmatprep.subr.bf16.mxu0 %v3544
  %3596 = vmatpush1.bf16.msra.mxu0 %v3543
  %3597 = vmatprep.subr.bf16.mxu0 %v3542
  %3598 = vmatpush1.bf16.msra.mxu0 %v3541
  %3599 = vmatprep.subr.bf16.mxu0 %v3540
  %3600 = vmatpush1.bf16.msra.mxu0 %v3539
  %3601 = vmatprep.subr.bf16.mxu0 %v3538
  %3602 = vmatpush1.bf16.msra.mxu0 %v3537
  %3603 = vmatprep.subr.bf16.mxu0 %v3536
  %3604 = vmatpush1.bf16.msra.mxu0 %v3535
  %3605 = vmatprep.subr.bf16.mxu0 0
  %3606 = vmatpush2.bf16.msra.mxu0 0
  %3607 = vmatprep.subr.bf16.mxu0 0
  %3608 = vmatpush2.bf16.msra.mxu0 0
  %3609 = vmatprep.subr.bf16.mxu0 0
  %3610 = vmatpush2.bf16.msra.mxu0 0
  %3611 = vmatprep.subr.bf16.mxu0 0
  %3612 = vmatpush2.bf16.msra.mxu0 0
  %3613 = vmatprep.subr.bf16.mxu0 %v3558
  %3614 = vmatpush2.bf16.msra.mxu0 %v3557
  %3615 = vmatprep.subr.bf16.mxu0 %v3556
  %3616 = vmatpush2.bf16.msra.mxu0 %v3555
  %3617 = vmatprep.subr.bf16.mxu0 %v3554
  %3618 = vmatpush2.bf16.msra.mxu0 %v3553
  %3619 = vmatprep.subr.bf16.mxu0 %v3552
  %3620 = vmatpush2.bf16.msra.mxu0 %v3551
  %3621 = vmatprep.mubr.bf16.mxu0 %v3584
  %3622 = vmatmul.mubr.bf16.gmra.mxu0 %v3421
  %v3623 = vpop.f32.mrf.mxu0
  %v3624 = vadd.f32 %v3456, %v3623
  %v3625 = vpop.f32.mrf.mxu0
  %v3626 = vadd.f32 %v3460, %v3625
  %v3627 = vpop.f32.mrf.mxu0
  %v3628 = vadd.f32 %v3456, %v3627
  %v3629 = vpop.f32.mrf.mxu0
  %v3630 = vadd.f32 %v3460, %v3629
  %3631 = vmatprep.mubr.bf16.mxu0 %v3587
  %3632 = vmatmul.mubr.bf16.gmra.mxu0 %v3423
  %v3633 = vpop.f32.mrf.mxu0
  %v3634 = vadd.f32 %v3456, %v3633
  %v3635 = vpop.f32.mrf.mxu0
  %v3636 = vadd.f32 %v3460, %v3635
  %v3637 = vpop.f32.mrf.mxu0
  %v3638 = vadd.f32 %v3456, %v3637
  %v3639 = vpop.f32.mrf.mxu0
  %v3640 = vadd.f32 %v3460, %v3639
  %3641 = vdwg.mxu0
  %v3642 = vmax.f32 %v3624, 0.0
  %v3643 = vmax.f32 %v3626, 0.0
  %v3644 = vmax.f32 %v3628, 0.0
  %v3645 = vmax.f32 %v3630, 0.0
  %v3646 = vmax.f32 %v3634, 0.0
  %v3647 = vmax.f32 %v3636, 0.0
  %v3648 = vmax.f32 %v3638, 0.0
  %v3649 = vmax.f32 %v3640, 0.0
  %v3650 = vpack.c.bf16 %v3644, %v3642
  %v3651 = vpack.c.bf16 %v3645, %v3643
  %v3652 = vpack.c.bf16 %v3648, %v3646
  %v3653 = vpack.c.bf16 %v3649, %v3647
  %s3654 = scalar_lea.vmem %s18, 384
  %v3655 = vld [vmem:[%s3654] sm:$0xf]
  %v3656 = vld [vmem:[%s3654 + $0x4] sm:$0xf]
  %v3657 = vld [vmem:[%s3654 + $0x8] sm:$0xf]
  %v3658 = vld [vmem:[%s3654 + $0xc] sm:$0xf]
  %v3659 = vld [vmem:[%s3654 + $0x10] sm:$0xf]
  %v3660 = vld [vmem:[%s3654 + $0x14] sm:$0xf]
  %v3661 = vld [vmem:[%s3654 + $0x18] sm:$0xf]
  %v3662 = vld [vmem:[%s3654 + $0x1c] sm:$0xf]
  %v3663 = vld [vmem:[%s3654 + $0x20] sm:$0xf]
  %v3664 = vld [vmem:[%s3654 + $0x24] sm:$0xf]
  %v3665 = vld [vmem:[%s3654 + $0x28] sm:$0xf]
  %v3666 = vld [vmem:[%s3654 + $0x2c] sm:$0xf]
  %v3667 = vld [vmem:[%s3654 + $0x30] sm:$0xf]
  %v3668 = vld [vmem:[%s3654 + $0x34] sm:$0xf]
  %v3669 = vld [vmem:[%s3654 + $0x38] sm:$0xf]
  %v3670 = vld [vmem:[%s3654 + $0x3c] sm:$0xf]
  %v3671 = vld [vmem:[%s3654 + $0x40] sm:$0xf]
  %v3672 = vld [vmem:[%s3654 + $0x44] sm:$0xf]
  %v3673 = vld [vmem:[%s3654 + $0x48] sm:$0xf]
  %v3674 = vld [vmem:[%s3654 + $0x4c] sm:$0xf]
  %v3675 = vld [vmem:[%s3654 + $0x50] sm:$0xf]
  %v3676 = vld [vmem:[%s3654 + $0x54] sm:$0xf]
  %v3677 = vld [vmem:[%s3654 + $0x58] sm:$0xf]
  %v3678 = vld [vmem:[%s3654 + $0x5c] sm:$0xf]
  %v3679 = vld [vmem:[%s3654 + $0x60] sm:$0xf]
  %v3680 = vld [vmem:[%s3654 + $0x64] sm:$0xf]
  %v3681 = vld [vmem:[%s3654 + $0x68] sm:$0xf]
  %v3682 = vld [vmem:[%s3654 + $0x6c] sm:$0xf]
  %v3683 = vld [vmem:[%s3654 + $0x70] sm:$0xf]
  %v3684 = vld [vmem:[%s3654 + $0x74] sm:$0xf]
  %v3685 = vld [vmem:[%s3654 + $0x78] sm:$0xf]
  %v3686 = vld [vmem:[%s3654 + $0x7c] sm:$0xf]
  %v3719 = vunpack.c.l.b16 %v3655
  %v3720 = vunpack.c.l.b16 %v3656
  %v3721 = vunpack.c.l.b16 %v3657
  %v3722 = vunpack.c.l.b16 %v3658
  %v3723 = vunpack.c.l.b16 %v3659
  %v3724 = vunpack.c.l.b16 %v3660
  %v3725 = vunpack.c.l.b16 %v3661
  %v3726 = vunpack.c.l.b16 %v3662
  %v3727 = vunpack.c.l.b16 %v3663
  %v3728 = vunpack.c.l.b16 %v3664
  %v3729 = vunpack.c.l.b16 %v3665
  %v3730 = vunpack.c.l.b16 %v3666
  %v3731 = vunpack.c.l.b16 %v3667
  %v3732 = vunpack.c.l.b16 %v3668
  %v3733 = vunpack.c.l.b16 %v3669
  %v3734 = vunpack.c.l.b16 %v3670
  %v3735 = vunpack.c.l.b16 %v3671
  %v3736 = vunpack.c.l.b16 %v3672
  %v3737 = vunpack.c.l.b16 %v3673
  %v3738 = vunpack.c.l.b16 %v3674
  %v3739 = vunpack.c.l.b16 %v3675
  %v3740 = vunpack.c.l.b16 %v3676
  %v3741 = vunpack.c.l.b16 %v3677
  %v3742 = vunpack.c.l.b16 %v3678
  %v3743 = vunpack.c.l.b16 %v3679
  %v3744 = vunpack.c.l.b16 %v3680
  %v3745 = vunpack.c.l.b16 %v3681
  %v3746 = vunpack.c.l.b16 %v3682
  %v3747 = vunpack.c.l.b16 %v3683
  %v3748 = vunpack.c.l.b16 %v3684
  %v3749 = vunpack.c.l.b16 %v3685
  %v3750 = vunpack.c.l.b16 %v3686
  %v3751 = vpack.c.b16 %v3720, %v3719
  %v3752 = vpack.c.b16 %v3722, %v3721
  %v3753 = vpack.c.b16 %v3724, %v3723
  %v3754 = vpack.c.b16 %v3726, %v3725
  %v3755 = vpack.c.b16 %v3728, %v3727
  %v3756 = vpack.c.b16 %v3730, %v3729
  %v3757 = vpack.c.b16 %v3732, %v3731
  %v3758 = vpack.c.b16 %v3734, %v3733
  %v3759 = vpack.c.b16 %v3736, %v3735
  %v3760 = vpack.c.b16 %v3738, %v3737
  %v3761 = vpack.c.b16 %v3740, %v3739
  %v3762 = vpack.c.b16 %v3742, %v3741
  %v3763 = vpack.c.b16 %v3744, %v3743
  %v3764 = vpack.c.b16 %v3746, %v3745
  %v3765 = vpack.c.b16 %v3748, %v3747
  %v3766 = vpack.c.b16 %v3750, %v3749
  %3783 = vmatprep.subr.bf16.mxu0 0
  %3784 = vmatpush1.bf16.msra.mxu0 %v3758
  %3785 = vmatprep.subr.bf16.mxu0 0
  %3786 = vmatpush1.bf16.msra.mxu0 %v3757
  %3787 = vmatprep.subr.bf16.mxu0 0
  %3788 = vmatpush1.bf16.msra.mxu0 %v3756
  %3789 = vmatprep.subr.bf16.mxu0 0
  %3790 = vmatpush1.bf16.msra.mxu0 %v3755
  %3791 = vmatprep.subr.bf16.mxu0 0
  %3792 = vmatpush1.bf16.msra.mxu0 %v3754
  %3793 = vmatprep.subr.bf16.mxu0 0
  %3794 = vmatpush1.bf16.msra.mxu0 %v3753
  %3795 = vmatprep.subr.bf16.mxu0 0
  %3796 = vmatpush1.bf16.msra.mxu0 %v3752
  %3797 = vmatprep.subr.bf16.mxu0 0
  %3798 = vmatpush1.bf16.msra.mxu0 %v3751
  %3799 = vmatprep.subr.bf16.mxu0 0
  %3800 = vmatpush2.bf16.msra.mxu0 %v3766
  %3801 = vmatprep.subr.bf16.mxu0 0
  %3802 = vmatpush2.bf16.msra.mxu0 %v3765
  %3803 = vmatprep.subr.bf16.mxu0 0
  %3804 = vmatpush2.bf16.msra.mxu0 %v3764
  %3805 = vmatprep.subr.bf16.mxu0 0
  %3806 = vmatpush2.bf16.msra.mxu0 %v3763
  %3807 = vmatprep.subr.bf16.mxu0 0
  %3808 = vmatpush2.bf16.msra.mxu0 %v3762
  %3809 = vmatprep.subr.bf16.mxu0 0
  %3810 = vmatpush2.bf16.msra.mxu0 %v3761
  %3811 = vmatprep.subr.bf16.mxu0 0
  %3812 = vmatpush2.bf16.msra.mxu0 %v3760
  %3813 = vmatprep.subr.bf16.mxu0 0
  %3814 = vmatpush2.bf16.msra.mxu0 %v3759
  %3815 = vmatprep.mubr.bf16.mxu0 %v3651
  %3816 = vmatmul.mubr.bf16.gmra.mxu0 %v3650
  %v3817 = vpop.f32.mrf.mxu0
  %v3818 = vadd.f32 %v3331, %v3817
  %v3819 = vpop.f32.mrf.mxu0
  %v3820 = vpop.f32.mrf.mxu0
  %v3821 = vadd.f32 %v3334, %v3820
  %v3822 = vpop.f32.mrf.mxu0
  %3823 = vmatprep.mubr.bf16.mxu0 %v3653
  %3824 = vmatmul.mubr.bf16.gmra.mxu0 %v3652
  %v3825 = vpop.f32.mrf.mxu0
  %v3826 = vadd.f32 %v3339, %v3825
  %v3827 = vpop.f32.mrf.mxu0
  %v3828 = vpop.f32.mrf.mxu0
  %v3829 = vadd.f32 %v3342, %v3828
  %v3830 = vpop.f32.mrf.mxu0
  %3831 = vdwg.mxu0
  %v3832 = vsub.f32 0.0, %v3818
  %v3833 = vsub.f32 0.0, %v3821
  %v3834 = vsub.f32 0.0, %v3826
  %v3835 = vsub.f32 0.0, %v3829
  %v3836 = vmul.f32 %v3832, 1.442695
  %v3837 = vpow.pop %v3836
  %v3838 = vmul.f32 %v3833, 1.442695
  %v3839 = vpow.pop %v3838
  %v3840 = vmul.f32 %v3834, 1.442695
  %v3841 = vpow.pop %v3840
  %v3842 = vmul.f32 %v3835, 1.442695
  %v3843 = vpow.pop %v3842
  %v3844 = vadd.f32 %v3837, 1.0
  %v3845 = vadd.f32 %v3839, 1.0
  %v3846 = vadd.f32 %v3841, 1.0
  %v3847 = vadd.f32 %v3843, 1.0
  %v3848 = vrcp.pop %v3844
  %v3849 = vrcp.pop %v3845
  %v3850 = vrcp.pop %v3846
  %v3851 = vrcp.pop %v3847
  %v3852 = vadd.f32 %v3848, 1.0
  %v3853 = vadd.f32 %v3849, 1.0
  %v3854 = vadd.f32 %v3850, 1.0
  %v3855 = vadd.f32 %v3851, 1.0
  %v3856 = vmul.f32 %v1286, %v3852
  %v3857 = vmul.f32 %v1289, %v3853
  %v3858 = vmul.f32 %v1294, %v3854
  %v3859 = vmul.f32 %v1297, %v3855
  %v3860 = vadd.f32 %v3856, %v1773
  %v3861 = vadd.f32 %v3857, %v1776
  %v3862 = vadd.f32 %v3858, %v1781
  %v3863 = vadd.f32 %v3859, %v1784
  %3864 = vst.msk [vmem:[%s21] sm:$0xff] %vm400, %v3860
  %3865 = vst.msk [vmem:[%s21 + $0x8] sm:$0xff] %vm400, %v3861
  %3866 = vst.msk [vmem:[%s21 + $0x10] sm:$0xff] %vm400, %v3862
  %3867 = vst.msk [vmem:[%s21 + $0x18] sm:$0xff] %vm400, %v3863
  // Predicated region
  $region86: #{_lambda_.1} parent=0 // pred_check
    _
  $region87: #{_lambda_.1} parent=0 // pred_check_branch
    %3869 = sbr.rel (0) target = $region89
  $region88: #{_lambda_.1} parent=0 // pred_region
    _
  $region89: #{_lambda_.1} parent=0 // pred_fallthru
    _
  // Predicated region
  $region90: #{_lambda_.1} parent=0 // pred_check
    _
  $region91: #{_lambda_.1} parent=0 // pred_check_branch
    %3871 = sbr.rel (0) target = $region93
  $region92: #{_lambda_.1} parent=0 // pred_region
    _
  $region93: #{_lambda_.1} parent=0 // pred_fallthru
    _

</llo_original>
